<compile_context>
chip_gen: v7x
topology: tpu7x:2x2x1
jax: 0.10.0
libtpu: 0.0.40
codegen_flags: <defaults>
</compile_context>

<pallas_src>
import functools
import math

import jax
import jax.numpy as jnp
from jax.experimental import pallas as pl
from jax.experimental.pallas import tpu as pltpu


ACT_DTYPE = jnp.bfloat16  # HBM dtype for activations & weights; accum is f32.


# ---------------------------------------------------------------------------
# Pallas kernel: one output depth-slice per grid step, 27 taps -> f32 accum
# ---------------------------------------------------------------------------

def _conv_taps_kernel(vol_ref, w_ref, b_ref, o_ref, *, do_p1):
    """Computes one (Ho*Wo, Cout) output depth-slice.

    vol_ref: (18*(Do+1), Ho*Wo, Cin)  bf16  per-batch tap volume (VMEM resident)
             row layout: ((pd*3 + kh)*3 + kw) * (Do+1) + od'
             value      = x_padded[2*od'+pd, 2*oh+kh, 2*ow+kw, :]
    w_ref:   (27, Cin, Cout)          bf16  resident, tap index kd*9+kh*3+kw
    b_ref:   (1, Cout)                f32   resident
    o_ref:   (1, Ho*Wo, Cout)         f32
    """
    od = pl.program_id(1)
    acc = None
    for kd in range(3):
        pd, dd = kd % 2, kd // 2          # depth parity / extra offset
        for kh in range(3):
            for kw in range(3):
                t = (kd * 3 + kh) * 3 + kw          # weight tap index
                v = (pd * 3 + kh) * 3 + kw          # tap-volume index
                a = vol_ref[v * do_p1 + od + dd]    # (Ho*Wo, Cin) bf16
                contrib = jnp.dot(a, w_ref[t],
                                  preferred_element_type=jnp.float32)
                acc = contrib if acc is None else acc + contrib
    o_ref[0] = (acc + b_ref[...]).astype(o_ref.dtype)


# ---------------------------------------------------------------------------
# Wrapper: Conv3d(Cin, 2*Cin, kernel=3, stride=2, padding=1) on NDHWC
# ---------------------------------------------------------------------------

def downsample_conv3x3x3_s2(x, w, b):
    """x: (N, D, H, W, Cin) f32, w: (3,3,3,Cin,Cout) DHWIO f32, b: (Cout,).

    Returns (N, Do, Ho, Wo, Cout) f32 with Do = floor((D-1)/2)+1, etc.
    """
    N, D, H, W, Cin = x.shape
    Cout = w.shape[-1]
    Do, Ho, Wo = (D - 1) // 2 + 1, (H - 1) // 2 + 1, (W - 1) // 2 + 1

    # ---- glue: pad once (bf16) and pre-gather the 18 stride-2 tap volumes ---
    # Depth keeps a parity split (2 variants, extent Do+1 so both kd offsets
    # are plain leading-dim indices in the kernel); H and W are gathered per
    # tap (3 variants each, extent exactly Ho / Wo) so every in-kernel load is
    # a full-extent, offset-0 (Ho*Wo, Cin) slab -> no sublane shifts/reshapes.
    Dp, Hp, Wp = 2 * (Do + 1), 2 * Ho + 1, 2 * Wo + 1
    xp = jnp.pad(x.astype(ACT_DTYPE),
                 ((0, 0), (1, Dp - 1 - D), (1, Hp - 1 - H), (1, Wp - 1 - W),
                  (0, 0)))
    vols = []
    for pd in range(2):                                    # depth parity
        xd = xp[:, pd::2]                                  # (N, Do+1, Hp, Wp, C)
        for kh in range(3):
            xh = xd[:, :, kh:kh + 2 * Ho - 1:2]            # (N, Do+1, Ho, Wp, C)
            for kw in range(3):
                vols.append(xh[:, :, :, kw:kw + 2 * Wo - 1:2])  # (..., Wo, C)
    xcol = jnp.stack(vols, axis=1)                         # (N, 18, Do+1, Ho, Wo, C)
    xcol = xcol.reshape(N * 18 * (Do + 1), Ho * Wo, Cin)   # bf16

    wmat = w.reshape(27, Cin, Cout).astype(ACT_DTYPE)      # tap-major weights
    bias = b.reshape(1, Cout).astype(jnp.float32)

    # ---- VMEM accounting (double-buffered pipeline copies of every block) ---
    vol_block = 18 * (Do + 1) * Ho * Wo * Cin * 2          # bf16
    w_block = 27 * Cin * Cout * 2                          # bf16
    out_block = Ho * Wo * Cout * 4                         # f32
    b_block = Cout * 4
    need = 2 * (vol_block + w_block + out_block + b_block)
    vmem_limit = int(min(max(need + (8 << 20), 32 << 20), 64 << 20))

    cost = pl.CostEstimate(
        flops=2 * N * Do * Ho * Wo * 27 * Cin * Cout,
        transcendentals=0,
        bytes_accessed=(xcol.size * 2 + wmat.size * 2 + bias.size * 4
                        + N * Do * Ho * Wo * Cout * 4))

    do_p1 = Do + 1
    out = pl.pallas_call(
        functools.partial(_conv_taps_kernel, do_p1=do_p1),
        out_shape=jax.ShapeDtypeStruct((N * Do, Ho * Wo, Cout), jnp.float32),
        grid=(N, Do),
        in_specs=[
            # per-batch tap volume: fetched once per batch, reused across Do
            pl.BlockSpec((18 * do_p1, Ho * Wo, Cin), lambda n, od: (n, 0, 0)),
            # resident weights / bias: DMA'd once
            pl.BlockSpec((27, Cin, Cout), lambda n, od: (0, 0, 0)),
            pl.BlockSpec((1, Cout), lambda n, od: (0, 0)),
        ],
        out_specs=pl.BlockSpec((1, Ho * Wo, Cout),
                               lambda n, od: (n * Do + od, 0, 0)),
        compiler_params=pltpu.CompilerParams(
            dimension_semantics=("parallel", "parallel"),
            vmem_limit_bytes=vmem_limit),
        cost_estimate=cost,
    )(xcol, wmat, bias)

    return out.reshape(N, Do, Ho, Wo, Cout).astype(x.dtype)


def downsample_forward(x, params):
    """Forward pass of the PyTorch Downsample module (NDHWC layout)."""
    return downsample_conv3x3x3_s2(x, params['w'], params['b'])


# ---------------------------------------------------------------------------
# Deterministic parameter init (matches PyTorch Conv3d default init scheme)
# ---------------------------------------------------------------------------

def init_downsample_params(key, in_channels):
    cout = 2 * in_channels
    fan_in = 27 * in_channels
    bound = 1.0 / math.sqrt(fan_in)
    kw, kb = jax.random.split(key)
    w = jax.random.uniform(kw, (3, 3, 3, in_channels, cout), jnp.float32,
                           minval=-bound, maxval=bound)
    b = jax.random.uniform(kb, (cout,), jnp.float32,
                           minval=-bound, maxval=bound)
    return dict(w=w, b=b)


# ---------------------------------------------------------------------------
# Main
# ---------------------------------------------------------------------------

if __name__ == "__main__":
    key = jax.random.PRNGKey(0)
    kx, kp = jax.random.split(key)

    # NDHWC input; Cin=64 so Cout=128 keeps the output lane-dense.
    N, D, H, W, Cin = 2, 16, 16, 16, 64
    x = 0.5 * jax.random.normal(kx, (N, D, H, W, Cin), jnp.float32)
    params = init_downsample_params(kp, Cin)

    out = jax.jit(downsample_forward)(x, params)
    jax.block_until_ready(out)

    # Reference: XLA strided conv at highest precision (pure f32).
    ref = jax.lax.conv_general_dilated(
        x, params['w'], window_strides=(2, 2, 2),
        padding=((1, 1), (1, 1), (1, 1)),
        dimension_numbers=("NDHWC", "DHWIO", "NDHWC"),
        precision=jax.lax.Precision.HIGHEST) + params['b']

    assert out.shape == (N, 8, 8, 8, 2 * Cin), out.shape
    assert bool(jnp.all(jnp.isfinite(out)))
    # bf16 matmul inputs with f32 accumulation -> small tolerance vs f32 ref.
    max_err = float(jnp.max(jnp.abs(out - ref)))
    assert bool(jnp.allclose(out, ref, atol=3e-2, rtol=3e-2)), max_err
    print("KERNEL_OK")
</pallas_src>

<mosaic_0001>
module attributes {stable_mosaic.version = 11 : i64} {
  func.func @_conv_taps_kernel(%arg0: i32, %arg1: i32, %arg2: memref<162x64x64xbf16, #tpu.memory_space<vmem>>, %arg3: memref<27x64x128xbf16, #tpu.memory_space<vmem>>, %arg4: memref<1x128xf32, #tpu.memory_space<vmem>>, %arg5: memref<1x64x128xf32, #tpu.memory_space<vmem>>) attributes {dimension_semantics = [#tpu.dimension_semantics<parallel>, #tpu.dimension_semantics<parallel>], iteration_bounds = array<i64: 2, 8>, scalar_prefetch = 0 : i64, scratch_operands = 0 : i64, tpu.core_type = #tpu.core_type<tc>, window_params = [{transform_indices = @transform_0, window_bounds = array<i64: 162, 64, 64>}, {pipeline_mode = #tpu.pipeline_mode<synchronous>, transform_indices = @transform_1, window_bounds = array<i64: 27, 64, 128>}, {pipeline_mode = #tpu.pipeline_mode<synchronous>, transform_indices = @transform_2, window_bounds = array<i64: 1, 128>}, {transform_indices = @transform_3, window_bounds = array<i64: 1, 64, 128>}]} {
    %c0_i32 = arith.constant 0 : i32
    %0 = arith.addi %c0_i32, %arg1 : i32
    %c0_i32_0 = arith.constant 0 : i32
    %1 = arith.addi %0, %c0_i32_0 : i32
    %2 = arith.index_cast %1 : i32 to index
    %c0 = arith.constant 0 : index
    %c0_1 = arith.constant 0 : index
    %3 = vector.load %arg2[%2, %c0, %c0_1] : memref<162x64x64xbf16, #tpu.memory_space<vmem>>, vector<1x64x64xbf16>
    %4 = vector.shape_cast %3 : vector<1x64x64xbf16> to vector<64x64xbf16>
    %c0_2 = arith.constant 0 : index
    %c0_3 = arith.constant 0 : index
    %c0_4 = arith.constant 0 : index
    %5 = vector.load %arg3[%c0_2, %c0_3, %c0_4] : memref<27x64x128xbf16, #tpu.memory_space<vmem>>, vector<1x64x128xbf16>
    %6 = vector.shape_cast %5 : vector<1x64x128xbf16> to vector<64x128xbf16>
    %cst = arith.constant dense<0.000000e+00> : vector<64x128xf32>
    %7 = tpu.matmul %4, %6, %cst {dimension_numbers = #tpu.dot_dimension_numbers<[1], [0], [0], [1], [0, 0, 1, 1], [], []>} : vector<64x64xbf16>, vector<64x128xbf16>, vector<64x128xf32> -> vector<64x128xf32>
    %c9_i32 = arith.constant 9 : i32
    %8 = arith.addi %c9_i32, %arg1 : i32
    %c0_i32_5 = arith.constant 0 : i32
    %9 = arith.addi %8, %c0_i32_5 : i32
    %10 = arith.index_cast %9 : i32 to index
    %c0_6 = arith.constant 0 : index
    %c0_7 = arith.constant 0 : index
    %11 = vector.load %arg2[%10, %c0_6, %c0_7] : memref<162x64x64xbf16, #tpu.memory_space<vmem>>, vector<1x64x64xbf16>
    %12 = vector.shape_cast %11 : vector<1x64x64xbf16> to vector<64x64xbf16>
    %c1 = arith.constant 1 : index
    %c0_8 = arith.constant 0 : index
    %c0_9 = arith.constant 0 : index
    %13 = vector.load %arg3[%c1, %c0_8, %c0_9] : memref<27x64x128xbf16, #tpu.memory_space<vmem>>, vector<1x64x128xbf16>
    %14 = vector.shape_cast %13 : vector<1x64x128xbf16> to vector<64x128xbf16>
    %cst_10 = arith.constant dense<0.000000e+00> : vector<64x128xf32>
    %15 = tpu.matmul %12, %14, %cst_10 {dimension_numbers = #tpu.dot_dimension_numbers<[1], [0], [0], [1], [0, 0, 1, 1], [], []>} : vector<64x64xbf16>, vector<64x128xbf16>, vector<64x128xf32> -> vector<64x128xf32>
    %16 = arith.addf %7, %15 : vector<64x128xf32>
    %c18_i32 = arith.constant 18 : i32
    %17 = arith.addi %c18_i32, %arg1 : i32
    %c0_i32_11 = arith.constant 0 : i32
    %18 = arith.addi %17, %c0_i32_11 : i32
    %19 = arith.index_cast %18 : i32 to index
    %c0_12 = arith.constant 0 : index
    %c0_13 = arith.constant 0 : index
    %20 = vector.load %arg2[%19, %c0_12, %c0_13] : memref<162x64x64xbf16, #tpu.memory_space<vmem>>, vector<1x64x64xbf16>
    %21 = vector.shape_cast %20 : vector<1x64x64xbf16> to vector<64x64xbf16>
    %c2 = arith.constant 2 : index
    %c0_14 = arith.constant 0 : index
    %c0_15 = arith.constant 0 : index
    %22 = vector.load %arg3[%c2, %c0_14, %c0_15] : memref<27x64x128xbf16, #tpu.memory_space<vmem>>, vector<1x64x128xbf16>
    %23 = vector.shape_cast %22 : vector<1x64x128xbf16> to vector<64x128xbf16>
    %cst_16 = arith.constant dense<0.000000e+00> : vector<64x128xf32>
    %24 = tpu.matmul %21, %23, %cst_16 {dimension_numbers = #tpu.dot_dimension_numbers<[1], [0], [0], [1], [0, 0, 1, 1], [], []>} : vector<64x64xbf16>, vector<64x128xbf16>, vector<64x128xf32> -> vector<64x128xf32>
    %25 = arith.addf %16, %24 : vector<64x128xf32>
    %c27_i32 = arith.constant 27 : i32
    %26 = arith.addi %c27_i32, %arg1 : i32
    %c0_i32_17 = arith.constant 0 : i32
    %27 = arith.addi %26, %c0_i32_17 : i32
    %28 = arith.index_cast %27 : i32 to index
    %c0_18 = arith.constant 0 : index
    %c0_19 = arith.constant 0 : index
    %29 = vector.load %arg2[%28, %c0_18, %c0_19] : memref<162x64x64xbf16, #tpu.memory_space<vmem>>, vector<1x64x64xbf16>
    %30 = vector.shape_cast %29 : vector<1x64x64xbf16> to vector<64x64xbf16>
    %c3 = arith.constant 3 : index
    %c0_20 = arith.constant 0 : index
    %c0_21 = arith.constant 0 : index
    %31 = vector.load %arg3[%c3, %c0_20, %c0_21] : memref<27x64x128xbf16, #tpu.memory_space<vmem>>, vector<1x64x128xbf16>
    %32 = vector.shape_cast %31 : vector<1x64x128xbf16> to vector<64x128xbf16>
    %cst_22 = arith.constant dense<0.000000e+00> : vector<64x128xf32>
    %33 = tpu.matmul %30, %32, %cst_22 {dimension_numbers = #tpu.dot_dimension_numbers<[1], [0], [0], [1], [0, 0, 1, 1], [], []>} : vector<64x64xbf16>, vector<64x128xbf16>, vector<64x128xf32> -> vector<64x128xf32>
    %34 = arith.addf %25, %33 : vector<64x128xf32>
    %c36_i32 = arith.constant 36 : i32
    %35 = arith.addi %c36_i32, %arg1 : i32
    %c0_i32_23 = arith.constant 0 : i32
    %36 = arith.addi %35, %c0_i32_23 : i32
    %37 = arith.index_cast %36 : i32 to index
    %c0_24 = arith.constant 0 : index
    %c0_25 = arith.constant 0 : index
    %38 = vector.load %arg2[%37, %c0_24, %c0_25] : memref<162x64x64xbf16, #tpu.memory_space<vmem>>, vector<1x64x64xbf16>
    %39 = vector.shape_cast %38 : vector<1x64x64xbf16> to vector<64x64xbf16>
    %c4 = arith.constant 4 : index
    %c0_26 = arith.constant 0 : index
    %c0_27 = arith.constant 0 : index
    %40 = vector.load %arg3[%c4, %c0_26, %c0_27] : memref<27x64x128xbf16, #tpu.memory_space<vmem>>, vector<1x64x128xbf16>
    %41 = vector.shape_cast %40 : vector<1x64x128xbf16> to vector<64x128xbf16>
    %cst_28 = arith.constant dense<0.000000e+00> : vector<64x128xf32>
    %42 = tpu.matmul %39, %41, %cst_28 {dimension_numbers = #tpu.dot_dimension_numbers<[1], [0], [0], [1], [0, 0, 1, 1], [], []>} : vector<64x64xbf16>, vector<64x128xbf16>, vector<64x128xf32> -> vector<64x128xf32>
    %43 = arith.addf %34, %42 : vector<64x128xf32>
    %c45_i32 = arith.constant 45 : i32
    %44 = arith.addi %c45_i32, %arg1 : i32
    %c0_i32_29 = arith.constant 0 : i32
    %45 = arith.addi %44, %c0_i32_29 : i32
    %46 = arith.index_cast %45 : i32 to index
    %c0_30 = arith.constant 0 : index
    %c0_31 = arith.constant 0 : index
    %47 = vector.load %arg2[%46, %c0_30, %c0_31] : memref<162x64x64xbf16, #tpu.memory_space<vmem>>, vector<1x64x64xbf16>
    %48 = vector.shape_cast %47 : vector<1x64x64xbf16> to vector<64x64xbf16>
    %c5 = arith.constant 5 : index
    %c0_32 = arith.constant 0 : index
    %c0_33 = arith.constant 0 : index
    %49 = vector.load %arg3[%c5, %c0_32, %c0_33] : memref<27x64x128xbf16, #tpu.memory_space<vmem>>, vector<1x64x128xbf16>
    %50 = vector.shape_cast %49 : vector<1x64x128xbf16> to vector<64x128xbf16>
    %cst_34 = arith.constant dense<0.000000e+00> : vector<64x128xf32>
    %51 = tpu.matmul %48, %50, %cst_34 {dimension_numbers = #tpu.dot_dimension_numbers<[1], [0], [0], [1], [0, 0, 1, 1], [], []>} : vector<64x64xbf16>, vector<64x128xbf16>, vector<64x128xf32> -> vector<64x128xf32>
    %52 = arith.addf %43, %51 : vector<64x128xf32>
    %c54_i32 = arith.constant 54 : i32
    %53 = arith.addi %c54_i32, %arg1 : i32
    %c0_i32_35 = arith.constant 0 : i32
    %54 = arith.addi %53, %c0_i32_35 : i32
    %55 = arith.index_cast %54 : i32 to index
    %c0_36 = arith.constant 0 : index
    %c0_37 = arith.constant 0 : index
    %56 = vector.load %arg2[%55, %c0_36, %c0_37] : memref<162x64x64xbf16, #tpu.memory_space<vmem>>, vector<1x64x64xbf16>
    %57 = vector.shape_cast %56 : vector<1x64x64xbf16> to vector<64x64xbf16>
    %c6 = arith.constant 6 : index
    %c0_38 = arith.constant 0 : index
    %c0_39 = arith.constant 0 : index
    %58 = vector.load %arg3[%c6, %c0_38, %c0_39] : memref<27x64x128xbf16, #tpu.memory_space<vmem>>, vector<1x64x128xbf16>
    %59 = vector.shape_cast %58 : vector<1x64x128xbf16> to vector<64x128xbf16>
    %cst_40 = arith.constant dense<0.000000e+00> : vector<64x128xf32>
    %60 = tpu.matmul %57, %59, %cst_40 {dimension_numbers = #tpu.dot_dimension_numbers<[1], [0], [0], [1], [0, 0, 1, 1], [], []>} : vector<64x64xbf16>, vector<64x128xbf16>, vector<64x128xf32> -> vector<64x128xf32>
    %61 = arith.addf %52, %60 : vector<64x128xf32>
    %c63_i32 = arith.constant 63 : i32
    %62 = arith.addi %c63_i32, %arg1 : i32
    %c0_i32_41 = arith.constant 0 : i32
    %63 = arith.addi %62, %c0_i32_41 : i32
    %64 = arith.index_cast %63 : i32 to index
    %c0_42 = arith.constant 0 : index
    %c0_43 = arith.constant 0 : index
    %65 = vector.load %arg2[%64, %c0_42, %c0_43] : memref<162x64x64xbf16, #tpu.memory_space<vmem>>, vector<1x64x64xbf16>
    %66 = vector.shape_cast %65 : vector<1x64x64xbf16> to vector<64x64xbf16>
    %c7 = arith.constant 7 : index
    %c0_44 = arith.constant 0 : index
    %c0_45 = arith.constant 0 : index
    %67 = vector.load %arg3[%c7, %c0_44, %c0_45] : memref<27x64x128xbf16, #tpu.memory_space<vmem>>, vector<1x64x128xbf16>
    %68 = vector.shape_cast %67 : vector<1x64x128xbf16> to vector<64x128xbf16>
    %cst_46 = arith.constant dense<0.000000e+00> : vector<64x128xf32>
    %69 = tpu.matmul %66, %68, %cst_46 {dimension_numbers = #tpu.dot_dimension_numbers<[1], [0], [0], [1], [0, 0, 1, 1], [], []>} : vector<64x64xbf16>, vector<64x128xbf16>, vector<64x128xf32> -> vector<64x128xf32>
    %70 = arith.addf %61, %69 : vector<64x128xf32>
    %c72_i32 = arith.constant 72 : i32
    %71 = arith.addi %c72_i32, %arg1 : i32
    %c0_i32_47 = arith.constant 0 : i32
    %72 = arith.addi %71, %c0_i32_47 : i32
    %73 = arith.index_cast %72 : i32 to index
    %c0_48 = arith.constant 0 : index
    %c0_49 = arith.constant 0 : index
    %74 = vector.load %arg2[%73, %c0_48, %c0_49] : memref<162x64x64xbf16, #tpu.memory_space<vmem>>, vector<1x64x64xbf16>
    %75 = vector.shape_cast %74 : vector<1x64x64xbf16> to vector<64x64xbf16>
    %c8 = arith.constant 8 : index
    %c0_50 = arith.constant 0 : index
    %c0_51 = arith.constant 0 : index
    %76 = vector.load %arg3[%c8, %c0_50, %c0_51] : memref<27x64x128xbf16, #tpu.memory_space<vmem>>, vector<1x64x128xbf16>
    %77 = vector.shape_cast %76 : vector<1x64x128xbf16> to vector<64x128xbf16>
    %cst_52 = arith.constant dense<0.000000e+00> : vector<64x128xf32>
    %78 = tpu.matmul %75, %77, %cst_52 {dimension_numbers = #tpu.dot_dimension_numbers<[1], [0], [0], [1], [0, 0, 1, 1], [], []>} : vector<64x64xbf16>, vector<64x128xbf16>, vector<64x128xf32> -> vector<64x128xf32>
    %79 = arith.addf %70, %78 : vector<64x128xf32>
    %c81_i32 = arith.constant 81 : i32
    %80 = arith.addi %c81_i32, %arg1 : i32
    %c0_i32_53 = arith.constant 0 : i32
    %81 = arith.addi %80, %c0_i32_53 : i32
    %82 = arith.index_cast %81 : i32 to index
    %c0_54 = arith.constant 0 : index
    %c0_55 = arith.constant 0 : index
    %83 = vector.load %arg2[%82, %c0_54, %c0_55] : memref<162x64x64xbf16, #tpu.memory_space<vmem>>, vector<1x64x64xbf16>
    %84 = vector.shape_cast %83 : vector<1x64x64xbf16> to vector<64x64xbf16>
    %c9 = arith.constant 9 : index
    %c0_56 = arith.constant 0 : index
    %c0_57 = arith.constant 0 : index
    %85 = vector.load %arg3[%c9, %c0_56, %c0_57] : memref<27x64x128xbf16, #tpu.memory_space<vmem>>, vector<1x64x128xbf16>
    %86 = vector.shape_cast %85 : vector<1x64x128xbf16> to vector<64x128xbf16>
    %cst_58 = arith.constant dense<0.000000e+00> : vector<64x128xf32>
    %87 = tpu.matmul %84, %86, %cst_58 {dimension_numbers = #tpu.dot_dimension_numbers<[1], [0], [0], [1], [0, 0, 1, 1], [], []>} : vector<64x64xbf16>, vector<64x128xbf16>, vector<64x128xf32> -> vector<64x128xf32>
    %88 = arith.addf %79, %87 : vector<64x128xf32>
    %c90_i32 = arith.constant 90 : i32
    %89 = arith.addi %c90_i32, %arg1 : i32
    %c0_i32_59 = arith.constant 0 : i32
    %90 = arith.addi %89, %c0_i32_59 : i32
    %91 = arith.index_cast %90 : i32 to index
    %c0_60 = arith.constant 0 : index
    %c0_61 = arith.constant 0 : index
    %92 = vector.load %arg2[%91, %c0_60, %c0_61] : memref<162x64x64xbf16, #tpu.memory_space<vmem>>, vector<1x64x64xbf16>
    %93 = vector.shape_cast %92 : vector<1x64x64xbf16> to vector<64x64xbf16>
    %c10 = arith.constant 10 : index
    %c0_62 = arith.constant 0 : index
    %c0_63 = arith.constant 0 : index
    %94 = vector.load %arg3[%c10, %c0_62, %c0_63] : memref<27x64x128xbf16, #tpu.memory_space<vmem>>, vector<1x64x128xbf16>
    %95 = vector.shape_cast %94 : vector<1x64x128xbf16> to vector<64x128xbf16>
    %cst_64 = arith.constant dense<0.000000e+00> : vector<64x128xf32>
    %96 = tpu.matmul %93, %95, %cst_64 {dimension_numbers = #tpu.dot_dimension_numbers<[1], [0], [0], [1], [0, 0, 1, 1], [], []>} : vector<64x64xbf16>, vector<64x128xbf16>, vector<64x128xf32> -> vector<64x128xf32>
    %97 = arith.addf %88, %96 : vector<64x128xf32>
    %c99_i32 = arith.constant 99 : i32
    %98 = arith.addi %c99_i32, %arg1 : i32
    %c0_i32_65 = arith.constant 0 : i32
    %99 = arith.addi %98, %c0_i32_65 : i32
    %100 = arith.index_cast %99 : i32 to index
    %c0_66 = arith.constant 0 : index
    %c0_67 = arith.constant 0 : index
    %101 = vector.load %arg2[%100, %c0_66, %c0_67] : memref<162x64x64xbf16, #tpu.memory_space<vmem>>, vector<1x64x64xbf16>
    %102 = vector.shape_cast %101 : vector<1x64x64xbf16> to vector<64x64xbf16>
    %c11 = arith.constant 11 : index
    %c0_68 = arith.constant 0 : index
    %c0_69 = arith.constant 0 : index
    %103 = vector.load %arg3[%c11, %c0_68, %c0_69] : memref<27x64x128xbf16, #tpu.memory_space<vmem>>, vector<1x64x128xbf16>
    %104 = vector.shape_cast %103 : vector<1x64x128xbf16> to vector<64x128xbf16>
    %cst_70 = arith.constant dense<0.000000e+00> : vector<64x128xf32>
    %105 = tpu.matmul %102, %104, %cst_70 {dimension_numbers = #tpu.dot_dimension_numbers<[1], [0], [0], [1], [0, 0, 1, 1], [], []>} : vector<64x64xbf16>, vector<64x128xbf16>, vector<64x128xf32> -> vector<64x128xf32>
    %106 = arith.addf %97, %105 : vector<64x128xf32>
    %c108_i32 = arith.constant 108 : i32
    %107 = arith.addi %c108_i32, %arg1 : i32
    %c0_i32_71 = arith.constant 0 : i32
    %108 = arith.addi %107, %c0_i32_71 : i32
    %109 = arith.index_cast %108 : i32 to index
    %c0_72 = arith.constant 0 : index
    %c0_73 = arith.constant 0 : index
    %110 = vector.load %arg2[%109, %c0_72, %c0_73] : memref<162x64x64xbf16, #tpu.memory_space<vmem>>, vector<1x64x64xbf16>
    %111 = vector.shape_cast %110 : vector<1x64x64xbf16> to vector<64x64xbf16>
    %c12 = arith.constant 12 : index
    %c0_74 = arith.constant 0 : index
    %c0_75 = arith.constant 0 : index
    %112 = vector.load %arg3[%c12, %c0_74, %c0_75] : memref<27x64x128xbf16, #tpu.memory_space<vmem>>, vector<1x64x128xbf16>
    %113 = vector.shape_cast %112 : vector<1x64x128xbf16> to vector<64x128xbf16>
    %cst_76 = arith.constant dense<0.000000e+00> : vector<64x128xf32>
    %114 = tpu.matmul %111, %113, %cst_76 {dimension_numbers = #tpu.dot_dimension_numbers<[1], [0], [0], [1], [0, 0, 1, 1], [], []>} : vector<64x64xbf16>, vector<64x128xbf16>, vector<64x128xf32> -> vector<64x128xf32>
    %115 = arith.addf %106, %114 : vector<64x128xf32>
    %c117_i32 = arith.constant 117 : i32
    %116 = arith.addi %c117_i32, %arg1 : i32
    %c0_i32_77 = arith.constant 0 : i32
    %117 = arith.addi %116, %c0_i32_77 : i32
    %118 = arith.index_cast %117 : i32 to index
    %c0_78 = arith.constant 0 : index
    %c0_79 = arith.constant 0 : index
    %119 = vector.load %arg2[%118, %c0_78, %c0_79] : memref<162x64x64xbf16, #tpu.memory_space<vmem>>, vector<1x64x64xbf16>
    %120 = vector.shape_cast %119 : vector<1x64x64xbf16> to vector<64x64xbf16>
    %c13 = arith.constant 13 : index
    %c0_80 = arith.constant 0 : index
    %c0_81 = arith.constant 0 : index
    %121 = vector.load %arg3[%c13, %c0_80, %c0_81] : memref<27x64x128xbf16, #tpu.memory_space<vmem>>, vector<1x64x128xbf16>
    %122 = vector.shape_cast %121 : vector<1x64x128xbf16> to vector<64x128xbf16>
    %cst_82 = arith.constant dense<0.000000e+00> : vector<64x128xf32>
    %123 = tpu.matmul %120, %122, %cst_82 {dimension_numbers = #tpu.dot_dimension_numbers<[1], [0], [0], [1], [0, 0, 1, 1], [], []>} : vector<64x64xbf16>, vector<64x128xbf16>, vector<64x128xf32> -> vector<64x128xf32>
    %124 = arith.addf %115, %123 : vector<64x128xf32>
    %c126_i32 = arith.constant 126 : i32
    %125 = arith.addi %c126_i32, %arg1 : i32
    %c0_i32_83 = arith.constant 0 : i32
    %126 = arith.addi %125, %c0_i32_83 : i32
    %127 = arith.index_cast %126 : i32 to index
    %c0_84 = arith.constant 0 : index
    %c0_85 = arith.constant 0 : index
    %128 = vector.load %arg2[%127, %c0_84, %c0_85] : memref<162x64x64xbf16, #tpu.memory_space<vmem>>, vector<1x64x64xbf16>
    %129 = vector.shape_cast %128 : vector<1x64x64xbf16> to vector<64x64xbf16>
    %c14 = arith.constant 14 : index
    %c0_86 = arith.constant 0 : index
    %c0_87 = arith.constant 0 : index
    %130 = vector.load %arg3[%c14, %c0_86, %c0_87] : memref<27x64x128xbf16, #tpu.memory_space<vmem>>, vector<1x64x128xbf16>
    %131 = vector.shape_cast %130 : vector<1x64x128xbf16> to vector<64x128xbf16>
    %cst_88 = arith.constant dense<0.000000e+00> : vector<64x128xf32>
    %132 = tpu.matmul %129, %131, %cst_88 {dimension_numbers = #tpu.dot_dimension_numbers<[1], [0], [0], [1], [0, 0, 1, 1], [], []>} : vector<64x64xbf16>, vector<64x128xbf16>, vector<64x128xf32> -> vector<64x128xf32>
    %133 = arith.addf %124, %132 : vector<64x128xf32>
    %c135_i32 = arith.constant 135 : i32
    %134 = arith.addi %c135_i32, %arg1 : i32
    %c0_i32_89 = arith.constant 0 : i32
    %135 = arith.addi %134, %c0_i32_89 : i32
    %136 = arith.index_cast %135 : i32 to index
    %c0_90 = arith.constant 0 : index
    %c0_91 = arith.constant 0 : index
    %137 = vector.load %arg2[%136, %c0_90, %c0_91] : memref<162x64x64xbf16, #tpu.memory_space<vmem>>, vector<1x64x64xbf16>
    %138 = vector.shape_cast %137 : vector<1x64x64xbf16> to vector<64x64xbf16>
    %c15 = arith.constant 15 : index
    %c0_92 = arith.constant 0 : index
    %c0_93 = arith.constant 0 : index
    %139 = vector.load %arg3[%c15, %c0_92, %c0_93] : memref<27x64x128xbf16, #tpu.memory_space<vmem>>, vector<1x64x128xbf16>
    %140 = vector.shape_cast %139 : vector<1x64x128xbf16> to vector<64x128xbf16>
    %cst_94 = arith.constant dense<0.000000e+00> : vector<64x128xf32>
    %141 = tpu.matmul %138, %140, %cst_94 {dimension_numbers = #tpu.dot_dimension_numbers<[1], [0], [0], [1], [0, 0, 1, 1], [], []>} : vector<64x64xbf16>, vector<64x128xbf16>, vector<64x128xf32> -> vector<64x128xf32>
    %142 = arith.addf %133, %141 : vector<64x128xf32>
    %c144_i32 = arith.constant 144 : i32
    %143 = arith.addi %c144_i32, %arg1 : i32
    %c0_i32_95 = arith.constant 0 : i32
    %144 = arith.addi %143, %c0_i32_95 : i32
    %145 = arith.index_cast %144 : i32 to index
    %c0_96 = arith.constant 0 : index
    %c0_97 = arith.constant 0 : index
    %146 = vector.load %arg2[%145, %c0_96, %c0_97] : memref<162x64x64xbf16, #tpu.memory_space<vmem>>, vector<1x64x64xbf16>
    %147 = vector.shape_cast %146 : vector<1x64x64xbf16> to vector<64x64xbf16>
    %c16 = arith.constant 16 : index
    %c0_98 = arith.constant 0 : index
    %c0_99 = arith.constant 0 : index
    %148 = vector.load %arg3[%c16, %c0_98, %c0_99] : memref<27x64x128xbf16, #tpu.memory_space<vmem>>, vector<1x64x128xbf16>
    %149 = vector.shape_cast %148 : vector<1x64x128xbf16> to vector<64x128xbf16>
    %cst_100 = arith.constant dense<0.000000e+00> : vector<64x128xf32>
    %150 = tpu.matmul %147, %149, %cst_100 {dimension_numbers = #tpu.dot_dimension_numbers<[1], [0], [0], [1], [0, 0, 1, 1], [], []>} : vector<64x64xbf16>, vector<64x128xbf16>, vector<64x128xf32> -> vector<64x128xf32>
    %151 = arith.addf %142, %150 : vector<64x128xf32>
    %c153_i32 = arith.constant 153 : i32
    %152 = arith.addi %c153_i32, %arg1 : i32
    %c0_i32_101 = arith.constant 0 : i32
    %153 = arith.addi %152, %c0_i32_101 : i32
    %154 = arith.index_cast %153 : i32 to index
    %c0_102 = arith.constant 0 : index
    %c0_103 = arith.constant 0 : index
    %155 = vector.load %arg2[%154, %c0_102, %c0_103] : memref<162x64x64xbf16, #tpu.memory_space<vmem>>, vector<1x64x64xbf16>
    %156 = vector.shape_cast %155 : vector<1x64x64xbf16> to vector<64x64xbf16>
    %c17 = arith.constant 17 : index
    %c0_104 = arith.constant 0 : index
    %c0_105 = arith.constant 0 : index
    %157 = vector.load %arg3[%c17, %c0_104, %c0_105] : memref<27x64x128xbf16, #tpu.memory_space<vmem>>, vector<1x64x128xbf16>
    %158 = vector.shape_cast %157 : vector<1x64x128xbf16> to vector<64x128xbf16>
    %cst_106 = arith.constant dense<0.000000e+00> : vector<64x128xf32>
    %159 = tpu.matmul %156, %158, %cst_106 {dimension_numbers = #tpu.dot_dimension_numbers<[1], [0], [0], [1], [0, 0, 1, 1], [], []>} : vector<64x64xbf16>, vector<64x128xbf16>, vector<64x128xf32> -> vector<64x128xf32>
    %160 = arith.addf %151, %159 : vector<64x128xf32>
    %c0_i32_107 = arith.constant 0 : i32
    %161 = arith.addi %c0_i32_107, %arg1 : i32
    %c1_i32 = arith.constant 1 : i32
    %162 = arith.addi %161, %c1_i32 : i32
    %163 = arith.index_cast %162 : i32 to index
    %c0_108 = arith.constant 0 : index
    %c0_109 = arith.constant 0 : index
    %164 = vector.load %arg2[%163, %c0_108, %c0_109] : memref<162x64x64xbf16, #tpu.memory_space<vmem>>, vector<1x64x64xbf16>
    %165 = vector.shape_cast %164 : vector<1x64x64xbf16> to vector<64x64xbf16>
    %c18 = arith.constant 18 : index
    %c0_110 = arith.constant 0 : index
    %c0_111 = arith.constant 0 : index
    %166 = vector.load %arg3[%c18, %c0_110, %c0_111] : memref<27x64x128xbf16, #tpu.memory_space<vmem>>, vector<1x64x128xbf16>
    %167 = vector.shape_cast %166 : vector<1x64x128xbf16> to vector<64x128xbf16>
    %cst_112 = arith.constant dense<0.000000e+00> : vector<64x128xf32>
    %168 = tpu.matmul %165, %167, %cst_112 {dimension_numbers = #tpu.dot_dimension_numbers<[1], [0], [0], [1], [0, 0, 1, 1], [], []>} : vector<64x64xbf16>, vector<64x128xbf16>, vector<64x128xf32> -> vector<64x128xf32>
    %169 = arith.addf %160, %168 : vector<64x128xf32>
    %c9_i32_113 = arith.constant 9 : i32
    %170 = arith.addi %c9_i32_113, %arg1 : i32
    %c1_i32_114 = arith.constant 1 : i32
    %171 = arith.addi %170, %c1_i32_114 : i32
    %172 = arith.index_cast %171 : i32 to index
    %c0_115 = arith.constant 0 : index
    %c0_116 = arith.constant 0 : index
    %173 = vector.load %arg2[%172, %c0_115, %c0_116] : memref<162x64x64xbf16, #tpu.memory_space<vmem>>, vector<1x64x64xbf16>
    %174 = vector.shape_cast %173 : vector<1x64x64xbf16> to vector<64x64xbf16>
    %c19 = arith.constant 19 : index
    %c0_117 = arith.constant 0 : index
    %c0_118 = arith.constant 0 : index
    %175 = vector.load %arg3[%c19, %c0_117, %c0_118] : memref<27x64x128xbf16, #tpu.memory_space<vmem>>, vector<1x64x128xbf16>
    %176 = vector.shape_cast %175 : vector<1x64x128xbf16> to vector<64x128xbf16>
    %cst_119 = arith.constant dense<0.000000e+00> : vector<64x128xf32>
    %177 = tpu.matmul %174, %176, %cst_119 {dimension_numbers = #tpu.dot_dimension_numbers<[1], [0], [0], [1], [0, 0, 1, 1], [], []>} : vector<64x64xbf16>, vector<64x128xbf16>, vector<64x128xf32> -> vector<64x128xf32>
    %178 = arith.addf %169, %177 : vector<64x128xf32>
    %c18_i32_120 = arith.constant 18 : i32
    %179 = arith.addi %c18_i32_120, %arg1 : i32
    %c1_i32_121 = arith.constant 1 : i32
    %180 = arith.addi %179, %c1_i32_121 : i32
    %181 = arith.index_cast %180 : i32 to index
    %c0_122 = arith.constant 0 : index
    %c0_123 = arith.constant 0 : index
    %182 = vector.load %arg2[%181, %c0_122, %c0_123] : memref<162x64x64xbf16, #tpu.memory_space<vmem>>, vector<1x64x64xbf16>
    %183 = vector.shape_cast %182 : vector<1x64x64xbf16> to vector<64x64xbf16>
    %c20 = arith.constant 20 : index
    %c0_124 = arith.constant 0 : index
    %c0_125 = arith.constant 0 : index
    %184 = vector.load %arg3[%c20, %c0_124, %c0_125] : memref<27x64x128xbf16, #tpu.memory_space<vmem>>, vector<1x64x128xbf16>
    %185 = vector.shape_cast %184 : vector<1x64x128xbf16> to vector<64x128xbf16>
    %cst_126 = arith.constant dense<0.000000e+00> : vector<64x128xf32>
    %186 = tpu.matmul %183, %185, %cst_126 {dimension_numbers = #tpu.dot_dimension_numbers<[1], [0], [0], [1], [0, 0, 1, 1], [], []>} : vector<64x64xbf16>, vector<64x128xbf16>, vector<64x128xf32> -> vector<64x128xf32>
    %187 = arith.addf %178, %186 : vector<64x128xf32>
    %c27_i32_127 = arith.constant 27 : i32
    %188 = arith.addi %c27_i32_127, %arg1 : i32
    %c1_i32_128 = arith.constant 1 : i32
    %189 = arith.addi %188, %c1_i32_128 : i32
    %190 = arith.index_cast %189 : i32 to index
    %c0_129 = arith.constant 0 : index
    %c0_130 = arith.constant 0 : index
    %191 = vector.load %arg2[%190, %c0_129, %c0_130] : memref<162x64x64xbf16, #tpu.memory_space<vmem>>, vector<1x64x64xbf16>
    %192 = vector.shape_cast %191 : vector<1x64x64xbf16> to vector<64x64xbf16>
    %c21 = arith.constant 21 : index
    %c0_131 = arith.constant 0 : index
    %c0_132 = arith.constant 0 : index
    %193 = vector.load %arg3[%c21, %c0_131, %c0_132] : memref<27x64x128xbf16, #tpu.memory_space<vmem>>, vector<1x64x128xbf16>
    %194 = vector.shape_cast %193 : vector<1x64x128xbf16> to vector<64x128xbf16>
    %cst_133 = arith.constant dense<0.000000e+00> : vector<64x128xf32>
    %195 = tpu.matmul %192, %194, %cst_133 {dimension_numbers = #tpu.dot_dimension_numbers<[1], [0], [0], [1], [0, 0, 1, 1], [], []>} : vector<64x64xbf16>, vector<64x128xbf16>, vector<64x128xf32> -> vector<64x128xf32>
    %196 = arith.addf %187, %195 : vector<64x128xf32>
    %c36_i32_134 = arith.constant 36 : i32
    %197 = arith.addi %c36_i32_134, %arg1 : i32
    %c1_i32_135 = arith.constant 1 : i32
    %198 = arith.addi %197, %c1_i32_135 : i32
    %199 = arith.index_cast %198 : i32 to index
    %c0_136 = arith.constant 0 : index
    %c0_137 = arith.constant 0 : index
    %200 = vector.load %arg2[%199, %c0_136, %c0_137] : memref<162x64x64xbf16, #tpu.memory_space<vmem>>, vector<1x64x64xbf16>
    %201 = vector.shape_cast %200 : vector<1x64x64xbf16> to vector<64x64xbf16>
    %c22 = arith.constant 22 : index
    %c0_138 = arith.constant 0 : index
    %c0_139 = arith.constant 0 : index
    %202 = vector.load %arg3[%c22, %c0_138, %c0_139] : memref<27x64x128xbf16, #tpu.memory_space<vmem>>, vector<1x64x128xbf16>
    %203 = vector.shape_cast %202 : vector<1x64x128xbf16> to vector<64x128xbf16>
    %cst_140 = arith.constant dense<0.000000e+00> : vector<64x128xf32>
    %204 = tpu.matmul %201, %203, %cst_140 {dimension_numbers = #tpu.dot_dimension_numbers<[1], [0], [0], [1], [0, 0, 1, 1], [], []>} : vector<64x64xbf16>, vector<64x128xbf16>, vector<64x128xf32> -> vector<64x128xf32>
    %205 = arith.addf %196, %204 : vector<64x128xf32>
    %c45_i32_141 = arith.constant 45 : i32
    %206 = arith.addi %c45_i32_141, %arg1 : i32
    %c1_i32_142 = arith.constant 1 : i32
    %207 = arith.addi %206, %c1_i32_142 : i32
    %208 = arith.index_cast %207 : i32 to index
    %c0_143 = arith.constant 0 : index
    %c0_144 = arith.constant 0 : index
    %209 = vector.load %arg2[%208, %c0_143, %c0_144] : memref<162x64x64xbf16, #tpu.memory_space<vmem>>, vector<1x64x64xbf16>
    %210 = vector.shape_cast %209 : vector<1x64x64xbf16> to vector<64x64xbf16>
    %c23 = arith.constant 23 : index
    %c0_145 = arith.constant 0 : index
    %c0_146 = arith.constant 0 : index
    %211 = vector.load %arg3[%c23, %c0_145, %c0_146] : memref<27x64x128xbf16, #tpu.memory_space<vmem>>, vector<1x64x128xbf16>
    %212 = vector.shape_cast %211 : vector<1x64x128xbf16> to vector<64x128xbf16>
    %cst_147 = arith.constant dense<0.000000e+00> : vector<64x128xf32>
    %213 = tpu.matmul %210, %212, %cst_147 {dimension_numbers = #tpu.dot_dimension_numbers<[1], [0], [0], [1], [0, 0, 1, 1], [], []>} : vector<64x64xbf16>, vector<64x128xbf16>, vector<64x128xf32> -> vector<64x128xf32>
    %214 = arith.addf %205, %213 : vector<64x128xf32>
    %c54_i32_148 = arith.constant 54 : i32
    %215 = arith.addi %c54_i32_148, %arg1 : i32
    %c1_i32_149 = arith.constant 1 : i32
    %216 = arith.addi %215, %c1_i32_149 : i32
    %217 = arith.index_cast %216 : i32 to index
    %c0_150 = arith.constant 0 : index
    %c0_151 = arith.constant 0 : index
    %218 = vector.load %arg2[%217, %c0_150, %c0_151] : memref<162x64x64xbf16, #tpu.memory_space<vmem>>, vector<1x64x64xbf16>
    %219 = vector.shape_cast %218 : vector<1x64x64xbf16> to vector<64x64xbf16>
    %c24 = arith.constant 24 : index
    %c0_152 = arith.constant 0 : index
    %c0_153 = arith.constant 0 : index
    %220 = vector.load %arg3[%c24, %c0_152, %c0_153] : memref<27x64x128xbf16, #tpu.memory_space<vmem>>, vector<1x64x128xbf16>
    %221 = vector.shape_cast %220 : vector<1x64x128xbf16> to vector<64x128xbf16>
    %cst_154 = arith.constant dense<0.000000e+00> : vector<64x128xf32>
    %222 = tpu.matmul %219, %221, %cst_154 {dimension_numbers = #tpu.dot_dimension_numbers<[1], [0], [0], [1], [0, 0, 1, 1], [], []>} : vector<64x64xbf16>, vector<64x128xbf16>, vector<64x128xf32> -> vector<64x128xf32>
    %223 = arith.addf %214, %222 : vector<64x128xf32>
    %c63_i32_155 = arith.constant 63 : i32
    %224 = arith.addi %c63_i32_155, %arg1 : i32
    %c1_i32_156 = arith.constant 1 : i32
    %225 = arith.addi %224, %c1_i32_156 : i32
    %226 = arith.index_cast %225 : i32 to index
    %c0_157 = arith.constant 0 : index
    %c0_158 = arith.constant 0 : index
    %227 = vector.load %arg2[%226, %c0_157, %c0_158] : memref<162x64x64xbf16, #tpu.memory_space<vmem>>, vector<1x64x64xbf16>
    %228 = vector.shape_cast %227 : vector<1x64x64xbf16> to vector<64x64xbf16>
    %c25 = arith.constant 25 : index
    %c0_159 = arith.constant 0 : index
    %c0_160 = arith.constant 0 : index
    %229 = vector.load %arg3[%c25, %c0_159, %c0_160] : memref<27x64x128xbf16, #tpu.memory_space<vmem>>, vector<1x64x128xbf16>
    %230 = vector.shape_cast %229 : vector<1x64x128xbf16> to vector<64x128xbf16>
    %cst_161 = arith.constant dense<0.000000e+00> : vector<64x128xf32>
    %231 = tpu.matmul %228, %230, %cst_161 {dimension_numbers = #tpu.dot_dimension_numbers<[1], [0], [0], [1], [0, 0, 1, 1], [], []>} : vector<64x64xbf16>, vector<64x128xbf16>, vector<64x128xf32> -> vector<64x128xf32>
    %232 = arith.addf %223, %231 : vector<64x128xf32>
    %c72_i32_162 = arith.constant 72 : i32
    %233 = arith.addi %c72_i32_162, %arg1 : i32
    %c1_i32_163 = arith.constant 1 : i32
    %234 = arith.addi %233, %c1_i32_163 : i32
    %235 = arith.index_cast %234 : i32 to index
    %c0_164 = arith.constant 0 : index
    %c0_165 = arith.constant 0 : index
    %236 = vector.load %arg2[%235, %c0_164, %c0_165] : memref<162x64x64xbf16, #tpu.memory_space<vmem>>, vector<1x64x64xbf16>
    %237 = vector.shape_cast %236 : vector<1x64x64xbf16> to vector<64x64xbf16>
    %c26 = arith.constant 26 : index
    %c0_166 = arith.constant 0 : index
    %c0_167 = arith.constant 0 : index
    %238 = vector.load %arg3[%c26, %c0_166, %c0_167] : memref<27x64x128xbf16, #tpu.memory_space<vmem>>, vector<1x64x128xbf16>
    %239 = vector.shape_cast %238 : vector<1x64x128xbf16> to vector<64x128xbf16>
    %cst_168 = arith.constant dense<0.000000e+00> : vector<64x128xf32>
    %240 = tpu.matmul %237, %239, %cst_168 {dimension_numbers = #tpu.dot_dimension_numbers<[1], [0], [0], [1], [0, 0, 1, 1], [], []>} : vector<64x64xbf16>, vector<64x128xbf16>, vector<64x128xf32> -> vector<64x128xf32>
    %241 = arith.addf %232, %240 : vector<64x128xf32>
    %c0_169 = arith.constant 0 : index
    %c0_170 = arith.constant 0 : index
    %242 = vector.load %arg4[%c0_169, %c0_170] : memref<1x128xf32, #tpu.memory_space<vmem>>, vector<1x128xf32>
    %243 = vector.broadcast %242 : vector<1x128xf32> to vector<64x128xf32>
    %244 = arith.addf %241, %243 : vector<64x128xf32>
    %c0_171 = arith.constant 0 : index
    %c0_172 = arith.constant 0 : index
    %c0_173 = arith.constant 0 : index
    %245 = vector.load %arg5[%c0_171, %c0_172, %c0_173] : memref<1x64x128xf32, #tpu.memory_space<vmem>>, vector<1x64x128xf32>
    %246 = vector.shape_cast %245 : vector<1x64x128xf32> to vector<64x128xf32>
    %247 = vector.shape_cast %244 : vector<64x128xf32> to vector<1x64x128xf32>
    tpu.vector_store %arg5[%c0_171, %c0_172, %c0_173], %247 {strides = array<i32>} : memref<1x64x128xf32, #tpu.memory_space<vmem>>, vector<1x64x128xf32>,
    return
  }
  func.func @transform_0(%arg0: i32, %arg1: i32) -> (i32, i32, i32) {
    %c0_i32 = arith.constant 0 : i32
    %c0_i32_0 = arith.constant 0 : i32
    %c0_i32_1 = arith.constant 0 : i32
    return %arg0, %c0_i32, %c0_i32_0 : i32, i32, i32
  }
  func.func @transform_1(%arg0: i32, %arg1: i32) -> (i32, i32, i32) {
    %c0_i32 = arith.constant 0 : i32
    %c0_i32_0 = arith.constant 0 : i32
    %c0_i32_1 = arith.constant 0 : i32
    %c0_i32_2 = arith.constant 0 : i32
    return %c0_i32, %c0_i32_0, %c0_i32_1 : i32, i32, i32
  }
  func.func @transform_2(%arg0: i32, %arg1: i32) -> (i32, i32) {
    %c0_i32 = arith.constant 0 : i32
    %c0_i32_0 = arith.constant 0 : i32
    %c0_i32_1 = arith.constant 0 : i32
    return %c0_i32, %c0_i32_0 : i32, i32
  }
  func.func @transform_3(%arg0: i32, %arg1: i32) -> (i32, i32, i32) {
    %c8_i32 = arith.constant 8 : i32
    %0 = arith.muli %arg0, %c8_i32 : i32
    %1 = arith.addi %0, %arg1 : i32
    %c0_i32 = arith.constant 0 : i32
    %c0_i32_0 = arith.constant 0 : i32
    %c0_i32_1 = arith.constant 0 : i32
    return %1, %c0_i32, %c0_i32_0 : i32, i32, i32
  }
}

</mosaic_0001>

<llo_original>
// kernel: downsample_forward.1
$region0: #{downsample_forward.1}
  #allocation0 [shape = 'u32[]', space=smem, size = 0x4, offset = 0x4, fixed_abs, tag = 'smem constant byte address 0x4 - core index']
  #allocation1 [shape = 'u32[144,128]{1,0:T(1,128)}', space=vmem, size = 0x12000, scoped, tag = 'internal scratch']
  %s0 = inlined_call_operand.vmem [shape: bf16[324,64,64], index: 0, kind: input, shape index: {}]
  %s1 = inlined_call_operand.vmem [shape: bf16[27,64,128], index: 1, kind: input, shape index: {}]
  %s2 = inlined_call_operand.vmem [shape: f32[1,128], index: 2, kind: input, shape index: {}]
  %s3 = inlined_call_operand.hbm [shape: f32[16,64,128], index: 3, kind: output, shape index: {}]
  %s4 = sld [smem:[#allocation0]]
  $region45: #{downsample_forward.1} parent=0
    _
  %s6 = ssub.s32 1, %s4
  %s7 = scalar_select 0, %s6, %s4
  $region1: #{downsample_forward.1} parent=0
    #allocation2 [shape = 'u8[65536]{0}', space=vmem, size = 0x10000, scoped, tag = 'output window, operand 0']
    #allocation3 [shape = 's32[2]{0}', space=sflag, size = 0x8, scoped, tag = 'scoped memory for downsample_forward.1']
    %8 = vsyncpa [#allocation3], 0
    %s9 = scalar_lea.sflag [#allocation3], 1
    %10 = vsyncpa %s9, 0
    loop: start=0, step=1, limit=18
    $region2: #{downsample_forward.1} parent=1 // loop_pre_header
      _
    $region3: #{downsample_forward.1} parent=1 // loop_header
      %s12 = sphi 0, %s16
      %p13 = scmp.ge.s32.totalorder %s12, 18
      %s19 = sphi 0, %s31
      %s20 = sphi 0, %s27
      %s21 = sphi 0, %s19
      %s22 = sphi 0, %s20
      %s23 = sphi 0, %s21
      %s24 = sphi 0, %s22
      %s34 = sphi 0, %s36
      %s37 = sphi 0, %s34
      %s38 = sphi 0, %s37
      %s54 = sphi 0, %s38
      %s58 = sphi 0, %s58
      %s60 = sphi 0, %s58
      %s61 = sphi 0, %s60
      %s75 = sphi 0, %s61
      %s79 = sphi 0, %s79
      %s81 = sphi 0, %s79
      %s82 = sphi 0, %s81
      %s96 = sphi 0, %s82
      %s106 = sphi 0, %s108
      %s109 = sphi 0, %s106
      %s110 = sphi 0, %s109
      %s126 = sphi 0, %s110
    $region4: #{downsample_forward.1} parent=1 // loop_header_branch
      %15 = sbr.rel (%p13) target = $region8
    $region5: #{downsample_forward.1} parent=1 // loop_body
      %s17 = ssub.s32 %s12, 1
      %s18 = ssub.s32 %s12, 2
      %s25 = sadd.s32 1, %s20
      %p26 = scmp.ge.s32.totalorder %s25, 8
      %s27 = scalar_select %p26, 0, %s25
      %s28 = sadd.s32 1, %s19
      %s29 = scalar_select %p26, %s28, %s19
      %p30 = scmp.ge.s32.totalorder %s29, 2
      %s31 = scalar_select %p30, 0, %s29
      %s32 = ssub.s32 %s19, %s31
      %p33 = scmp.eq.s32.totalorder %s32, 0
      %s35 = sadd.s32 %s34, 1
      %s36 = scalar_select %p33, %s34, %s35
      %p39 = pneg %p33
      %p40 = scmp.eq.s32.totalorder %s12, 15
      %p41 = por %p39, %p40
      %p42 = scmp.ne.s32.totalorder %s34, %s37
      %p43 = scmp.eq.s32.totalorder %s12, 0
      %p44 = por %p42, %p43
      %p45 = scmp.ne.s32.totalorder %s34, %s37
      %p46 = scmp.eq.s32.totalorder %s17, 15
      %p47 = por %p45, %p46
      %p48 = scmp.ne.s32.totalorder %s37, %s38
      %p49 = scmp.eq.s32.totalorder %s17, 0
      %p50 = por %p48, %p49
      %p51 = scmp.ne.s32.totalorder %s37, %s38
      %p52 = scmp.eq.s32.totalorder %s18, 15
      %p53 = por %p51, %p52
      %p55 = scmp.ne.s32.totalorder %s38, %s54
      %p56 = scmp.eq.s32.totalorder %s18, 0
      %p57 = por %p55, %p56
      %s59 = sadd.s32 %s58, 1
      %p62 = scmp.eq.s32.totalorder %s12, 15
      %p63 = scmp.ne.s32.totalorder %s58, %s60
      %p64 = scmp.eq.s32.totalorder %s12, 0
      %p65 = por %p63, %p64
      %p66 = scmp.ne.s32.totalorder %s58, %s60
      %p67 = scmp.eq.s32.totalorder %s17, 15
      %p68 = por %p66, %p67
      %p69 = scmp.ne.s32.totalorder %s60, %s61
      %p70 = scmp.eq.s32.totalorder %s17, 0
      %p71 = por %p69, %p70
      %p72 = scmp.ne.s32.totalorder %s60, %s61
      %p73 = scmp.eq.s32.totalorder %s18, 15
      %p74 = por %p72, %p73
      %p76 = scmp.ne.s32.totalorder %s61, %s75
      %p77 = scmp.eq.s32.totalorder %s18, 0
      %p78 = por %p76, %p77
      %s80 = sadd.s32 %s79, 1
      %p83 = scmp.eq.s32.totalorder %s12, 15
      %p84 = scmp.ne.s32.totalorder %s79, %s81
      %p85 = scmp.eq.s32.totalorder %s12, 0
      %p86 = por %p84, %p85
      %p87 = scmp.ne.s32.totalorder %s79, %s81
      %p88 = scmp.eq.s32.totalorder %s17, 15
      %p89 = por %p87, %p88
      %p90 = scmp.ne.s32.totalorder %s81, %s82
      %p91 = scmp.eq.s32.totalorder %s17, 0
      %p92 = por %p90, %p91
      %p93 = scmp.ne.s32.totalorder %s81, %s82
      %p94 = scmp.eq.s32.totalorder %s18, 15
      %p95 = por %p93, %p94
      %p97 = scmp.ne.s32.totalorder %s82, %s96
      %p98 = scmp.eq.s32.totalorder %s18, 0
      %p99 = por %p97, %p98
      %s100 = smul.u32 %s19, 8
      %s101 = sadd.s32 %s100, %s20
      %s102 = smul.u32 %s31, 8
      %s103 = sadd.s32 %s102, %s27
      %s104 = ssub.s32 %s101, %s103
      %p105 = scmp.eq.s32.totalorder %s104, 0
      %s107 = sadd.s32 %s106, 1
      %s108 = scalar_select %p105, %s106, %s107
      %p111 = pneg %p105
      %p112 = scmp.eq.s32.totalorder %s12, 15
      %p113 = por %p111, %p112
      %p114 = scmp.ne.s32.totalorder %s106, %s109
      %p115 = scmp.eq.s32.totalorder %s12, 0
      %p116 = por %p114, %p115
      %p117 = scmp.ne.s32.totalorder %s106, %s109
      %p118 = scmp.eq.s32.totalorder %s17, 15
      %p119 = por %p117, %p118
      %p120 = scmp.ne.s32.totalorder %s109, %s110
      %p121 = scmp.eq.s32.totalorder %s17, 0
      %p122 = por %p120, %p121
      %p123 = scmp.ne.s32.totalorder %s109, %s110
      %p124 = scmp.eq.s32.totalorder %s18, 15
      %p125 = por %p123, %p124
      %p127 = scmp.ne.s32.totalorder %s110, %s126
      %p128 = scmp.eq.s32.totalorder %s18, 0
      %p129 = por %p127, %p128
      %p130 = scmp.le.s32.totalorder 1, %s12
      %p131 = scmp.lt.s32.totalorder %s12, 17
      %p132 = pnand %p130, %p131
      %p133 = pneg %p132
      // Predicated region
      $region9: #{downsample_forward.1} parent=5 // pred_check
        _
      $region10: #{downsample_forward.1} parent=5 // pred_check_branch
        %135 = sbr.rel (%p132) target = $region12
      $region11: #{downsample_forward.1} parent=5 // pred_region
        %s136 = ssub.s32 %s12, 1
        // Predicated region
        $region13: #{downsample_forward.1} parent=11 // pred_check
          %p137 = pneg %p71
        $region14: #{downsample_forward.1} parent=11 // pred_check_branch
          %139 = sbr.rel (%p137) target = $region16
        $region15: #{downsample_forward.1} parent=11 // pred_region
          _
        $region16: #{downsample_forward.1} parent=11 // pred_fallthru
          _
        // Predicated region
        $region17: #{downsample_forward.1} parent=11 // pred_check
          %p140 = pneg %p92
        $region18: #{downsample_forward.1} parent=11 // pred_check_branch
          %142 = sbr.rel (%p140) target = $region20
        $region19: #{downsample_forward.1} parent=11 // pred_region
          _
        $region20: #{downsample_forward.1} parent=11 // pred_fallthru
          _
      $region12: #{downsample_forward.1} parent=5 // pred_fallthru
        _
      %p143 = scmp.lt.s32.totalorder %s12, 16
      // Predicated region
      $region21: #{downsample_forward.1} parent=5 // pred_check
        %p144 = pneg %p143
      $region22: #{downsample_forward.1} parent=5 // pred_check_branch
        %146 = sbr.rel (%p144) target = $region24
      $region23: #{downsample_forward.1} parent=5 // pred_region
        // Predicated region
        $region25: #{downsample_forward.1} parent=23 // pred_check
          %p147 = pneg %p44
        $region26: #{downsample_forward.1} parent=23 // pred_check_branch
          %149 = sbr.rel (%p147) target = $region28
        $region27: #{downsample_forward.1} parent=23 // pred_region
          %s150 = smul.u32 162, %s19
          %p151 = scmp.lt.s32.totalorder %s150, 323
          %s152 = scalar_select %p151, %s150, 323
          %s153 = smul.addr %s152, 8
          %s154 = smul.addr %s153, 4
          %s155 = scalar_lea.vmem %s0, %s154
          %s156 = smul.u32 162, %s19
        $region28: #{downsample_forward.1} parent=23 // pred_fallthru
          _
      $region24: #{downsample_forward.1} parent=5 // pred_fallthru
        _
      %p157 = scmp.le.s32.totalorder 1, %s12
      %p158 = scmp.lt.s32.totalorder %s12, 17
      %p159 = pnand %p157, %p158
      %p160 = pneg %p159
      // Predicated region
      $region29: #{downsample_forward.1} parent=5 // pred_check
        _
      $region30: #{downsample_forward.1} parent=5 // pred_check_branch
        %162 = sbr.rel (%p159) target = $region32
      $region31: #{downsample_forward.1} parent=5 // pred_region
        %s163 = ssub.s32 %s12, 1
        %s164 = smul.u32 162, %s21
        %p165 = scmp.lt.s32.totalorder %s164, 323
        %s166 = scalar_select %p165, %s164, 323
        %s167 = smul.addr %s166, 8
        %s168 = smul.addr %s167, 4
        %s169 = scalar_lea.vmem %s0, %s168
        %p170 = pneg %p50
        %p171 = pneg %p47
        %p172 = pneg %p71
        %p173 = pneg %p68
        %p174 = pneg %p92
        %p175 = pneg %p89
        %p176 = pneg %p122
        %p177 = pneg %p119
        %s178 = sand.u32 %s109, 1
        %s179 = scalar_lea.sflag [#allocation3], %s178
        %s180 = sand.u32 %s109, 1
        %s181 = smul.addr %s180, 64
        %s182 = scalar_lea.vmem [#allocation2], %s181
        %s183 = smul.u32 162, %s21
        %p184 = scmp.lt.s32.totalorder %s183, 323
        %s185 = scalar_select %p184, %s183, 323
        %s186 = smul.addr %s185, 8
        %s187 = smul.addr %s186, 4
        %s188 = scalar_lea.vmem %s0, %s187
        %s189 = smul.u32 162, %s21
        %s190 = smul.u32 %s21, 8
        %s191 = sadd.s32 %s190, %s22
        %s193 = smul.u32 %s22, 8
        %s194 = smul.addr %s193, 4
        %s195 = scalar_lea.vmem %s188, %s194
        %v196 = vld [vmem:[%s195] sm:$0xf]
        %v197 = vld [vmem:[%s195 + $0x4] sm:$0xf]
        %v198 = vld [vmem:[%s195 + $0x8] sm:$0xf]
        %v199 = vld [vmem:[%s195 + $0xc] sm:$0xf]
        %v200 = vld [vmem:[%s195 + $0x10] sm:$0xf]
        %v201 = vld [vmem:[%s195 + $0x14] sm:$0xf]
        %v202 = vld [vmem:[%s195 + $0x18] sm:$0xf]
        %v203 = vld [vmem:[%s195 + $0x1c] sm:$0xf]
        %v204 = vld [vmem:[%s1] sm:$0xf]
        %v205 = vld [vmem:[%s1 + $0x4] sm:$0xf]
        %v206 = vld [vmem:[%s1 + $0x8] sm:$0xf]
        %v207 = vld [vmem:[%s1 + $0xc] sm:$0xf]
        %v208 = vld [vmem:[%s1 + $0x10] sm:$0xf]
        %v209 = vld [vmem:[%s1 + $0x14] sm:$0xf]
        %v210 = vld [vmem:[%s1 + $0x18] sm:$0xf]
        %v211 = vld [vmem:[%s1 + $0x1c] sm:$0xf]
        %s212 = sadd.s32 %s22, 9
        %s213 = smul.u32 %s212, 8
        %s214 = smul.addr %s213, 4
        %s215 = scalar_lea.vmem %s188, %s214
        %v216 = vld [vmem:[%s215] sm:$0xf]
        %v217 = vld [vmem:[%s215 + $0x4] sm:$0xf]
        %v218 = vld [vmem:[%s215 + $0x8] sm:$0xf]
        %v219 = vld [vmem:[%s215 + $0xc] sm:$0xf]
        %v220 = vld [vmem:[%s215 + $0x10] sm:$0xf]
        %v221 = vld [vmem:[%s215 + $0x14] sm:$0xf]
        %v222 = vld [vmem:[%s215 + $0x18] sm:$0xf]
        %v223 = vld [vmem:[%s215 + $0x1c] sm:$0xf]
        %s224 = scalar_lea.vmem %s1, 32
        %v225 = vld [vmem:[%s224] sm:$0xf]
        %v226 = vld [vmem:[%s224 + $0x4] sm:$0xf]
        %v227 = vld [vmem:[%s224 + $0x8] sm:$0xf]
        %v228 = vld [vmem:[%s224 + $0xc] sm:$0xf]
        %v229 = vld [vmem:[%s224 + $0x10] sm:$0xf]
        %v230 = vld [vmem:[%s224 + $0x14] sm:$0xf]
        %v231 = vld [vmem:[%s224 + $0x18] sm:$0xf]
        %v232 = vld [vmem:[%s224 + $0x1c] sm:$0xf]
        %v241 = vunpack.c.l.b16 %v216
        %v242 = vunpack.c.l.b16 %v217
        %v243 = vunpack.c.l.b16 %v218
        %v244 = vunpack.c.l.b16 %v219
        %v245 = vunpack.c.l.b16 %v220
        %v246 = vunpack.c.l.b16 %v221
        %v247 = vunpack.c.l.b16 %v222
        %v248 = vunpack.c.l.b16 %v223
        %v249 = vpack.c.b16 %v242, %v241
        %v250 = vpack.c.b16 %v244, %v243
        %v251 = vpack.c.b16 %v246, %v245
        %v252 = vpack.c.b16 %v248, %v247
        %v261 = vunpack.c.l.b16 %v225
        %v262 = vunpack.c.l.b16 %v226
        %v263 = vunpack.c.l.b16 %v227
        %v264 = vunpack.c.l.b16 %v228
        %v265 = vunpack.c.l.b16 %v229
        %v266 = vunpack.c.l.b16 %v230
        %v267 = vunpack.c.l.b16 %v231
        %v268 = vunpack.c.l.b16 %v232
        %v269 = vpack.c.b16 %v262, %v261
        %v270 = vpack.c.b16 %v264, %v263
        %v271 = vpack.c.b16 %v266, %v265
        %v272 = vpack.c.b16 %v268, %v267
        %vm277 = vcmask 523264
        %v279 = vsel %vm277, %v249, 0
        %v282 = vsel %vm277, %v250, 0
        %v285 = vsel %vm277, %v251, 0
        %v288 = vsel %vm277, %v252, 0
        %290 = vmatprep.subr.bf16.mxu0 0
        %291 = vmatpush1.bf16.msra.mxu0 %v269
        %292 = vmatprep.subr.bf16.mxu0 0
        %293 = vmatpush1.bf16.msra.mxu0 %v270
        %294 = vmatprep.subr.bf16.mxu0 0
        %295 = vmatpush1.bf16.msra.mxu0 %v271
        %296 = vmatprep.subr.bf16.mxu0 0
        %297 = vmatpush1.bf16.msra.mxu0 %v272
        %298 = vmatprep.subr.bf16.mxu0 0
        %299 = vmatpush1.bf16.msra.mxu0 0
        %300 = vmatprep.subr.bf16.mxu0 0
        %301 = vmatpush1.bf16.msra.mxu0 0
        %302 = vmatprep.subr.bf16.mxu0 0
        %303 = vmatpush1.bf16.msra.mxu0 0
        %304 = vmatprep.subr.bf16.mxu0 0
        %305 = vmatpush1.bf16.msra.mxu0 0
        %306 = vmatprep.subr.bf16.mxu0 0
        %307 = vmatpush1.bf16.msra.mxu0 0
        %308 = vmatprep.subr.bf16.mxu0 0
        %309 = vmatpush1.bf16.msra.mxu0 0
        %310 = vmatprep.subr.bf16.mxu0 0
        %311 = vmatpush1.bf16.msra.mxu0 0
        %312 = vmatprep.subr.bf16.mxu0 0
        %313 = vmatpush1.bf16.msra.mxu0 0
        %314 = vmatprep.subr.bf16.mxu0 0
        %315 = vmatpush1.bf16.msra.mxu0 0
        %316 = vmatprep.subr.bf16.mxu0 0
        %317 = vmatpush1.bf16.msra.mxu0 0
        %318 = vmatprep.subr.bf16.mxu0 0
        %319 = vmatpush1.bf16.msra.mxu0 0
        %320 = vmatprep.subr.bf16.mxu0 0
        %321 = vmatpush1.bf16.msra.mxu0 0
        %322 = vmatprep.mubr.bf16.mxu0 0
        %323 = vmatmul.mubr.bf16.gmra.mrb[0].mxu0 %v279
        %v324 = vpop.f32.mrb[0].mxu0
        %v325 = vadd.f32 0.0, %v324
        %v326 = vpop.f32.mrb[0].mxu0
        %v327 = vpop.f32.mrb[0].mxu0
        %v328 = vadd.f32 0.0, %v327
        %v329 = vpop.f32.mrb[0].mxu0
        %330 = vmatprep.mubr.bf16.mxu0 0
        %331 = vmatmul.mubr.bf16.gmra.mrb[0].mxu0 %v282
        %v332 = vpop.f32.mrb[0].mxu0
        %v333 = vadd.f32 0.0, %v332
        %v334 = vpop.f32.mrb[0].mxu0
        %v335 = vpop.f32.mrb[0].mxu0
        %v336 = vadd.f32 0.0, %v335
        %v337 = vpop.f32.mrb[0].mxu0
        %338 = vmatprep.mubr.bf16.mxu0 0
        %339 = vmatmul.mubr.bf16.gmra.mrb[0].mxu0 %v285
        %v340 = vpop.f32.mrb[0].mxu0
        %v341 = vadd.f32 0.0, %v340
        %v342 = vpop.f32.mrb[0].mxu0
        %v343 = vpop.f32.mrb[0].mxu0
        %v344 = vadd.f32 0.0, %v343
        %v345 = vpop.f32.mrb[0].mxu0
        %346 = vmatprep.mubr.bf16.mxu0 0
        %347 = vmatmul.mubr.bf16.gmra.mrb[0].mxu0 %v288
        %v348 = vpop.f32.mrb[0].mxu0
        %v349 = vadd.f32 0.0, %v348
        %v350 = vpop.f32.mrb[0].mxu0
        %v351 = vpop.f32.mrb[0].mxu0
        %v352 = vadd.f32 0.0, %v351
        %v353 = vpop.f32.mrb[0].mxu0
        %354 = vdwg.mxu0
        %v363 = vunpack.c.l.b16 %v196
        %v364 = vunpack.c.l.b16 %v197
        %v365 = vunpack.c.l.b16 %v198
        %v366 = vunpack.c.l.b16 %v199
        %v367 = vunpack.c.l.b16 %v200
        %v368 = vunpack.c.l.b16 %v201
        %v369 = vunpack.c.l.b16 %v202
        %v370 = vunpack.c.l.b16 %v203
        %v371 = vpack.c.b16 %v364, %v363
        %v372 = vpack.c.b16 %v366, %v365
        %v373 = vpack.c.b16 %v368, %v367
        %v374 = vpack.c.b16 %v370, %v369
        %v383 = vunpack.c.l.b16 %v204
        %v384 = vunpack.c.l.b16 %v205
        %v385 = vunpack.c.l.b16 %v206
        %v386 = vunpack.c.l.b16 %v207
        %v387 = vunpack.c.l.b16 %v208
        %v388 = vunpack.c.l.b16 %v209
        %v389 = vunpack.c.l.b16 %v210
        %v390 = vunpack.c.l.b16 %v211
        %v391 = vpack.c.b16 %v384, %v383
        %v392 = vpack.c.b16 %v386, %v385
        %v393 = vpack.c.b16 %v388, %v387
        %v394 = vpack.c.b16 %v390, %v389
        %v400 = vsel %vm277, %v371, 0
        %v403 = vsel %vm277, %v372, 0
        %v406 = vsel %vm277, %v373, 0
        %v409 = vsel %vm277, %v374, 0
        %411 = vmatprep.subr.bf16.mxu0 0
        %412 = vmatpush1.bf16.msra.mxu0 %v391
        %413 = vmatprep.subr.bf16.mxu0 0
        %414 = vmatpush1.bf16.msra.mxu0 %v392
        %415 = vmatprep.subr.bf16.mxu0 0
        %416 = vmatpush1.bf16.msra.mxu0 %v393
        %417 = vmatprep.subr.bf16.mxu0 0
        %418 = vmatpush1.bf16.msra.mxu0 %v394
        %419 = vmatprep.subr.bf16.mxu0 0
        %420 = vmatpush1.bf16.msra.mxu0 0
        %421 = vmatprep.subr.bf16.mxu0 0
        %422 = vmatpush1.bf16.msra.mxu0 0
        %423 = vmatprep.subr.bf16.mxu0 0
        %424 = vmatpush1.bf16.msra.mxu0 0
        %425 = vmatprep.subr.bf16.mxu0 0
        %426 = vmatpush1.bf16.msra.mxu0 0
        %427 = vmatprep.subr.bf16.mxu0 0
        %428 = vmatpush1.bf16.msra.mxu0 0
        %429 = vmatprep.subr.bf16.mxu0 0
        %430 = vmatpush1.bf16.msra.mxu0 0
        %431 = vmatprep.subr.bf16.mxu0 0
        %432 = vmatpush1.bf16.msra.mxu0 0
        %433 = vmatprep.subr.bf16.mxu0 0
        %434 = vmatpush1.bf16.msra.mxu0 0
        %435 = vmatprep.subr.bf16.mxu0 0
        %436 = vmatpush1.bf16.msra.mxu0 0
        %437 = vmatprep.subr.bf16.mxu0 0
        %438 = vmatpush1.bf16.msra.mxu0 0
        %439 = vmatprep.subr.bf16.mxu0 0
        %440 = vmatpush1.bf16.msra.mxu0 0
        %441 = vmatprep.subr.bf16.mxu0 0
        %442 = vmatpush1.bf16.msra.mxu0 0
        %443 = vmatprep.mubr.bf16.mxu0 0
        %444 = vmatmul.mubr.bf16.gmra.mrb[0].mxu0 %v400
        %v445 = vpop.f32.mrb[0].mxu0
        %v446 = vadd.f32 %v325, %v445
        %v447 = vpop.f32.mrb[0].mxu0
        %v448 = vpop.f32.mrb[0].mxu0
        %v449 = vadd.f32 %v328, %v448
        %v450 = vpop.f32.mrb[0].mxu0
        %451 = vmatprep.mubr.bf16.mxu0 0
        %452 = vmatmul.mubr.bf16.gmra.mrb[0].mxu0 %v403
        %v453 = vpop.f32.mrb[0].mxu0
        %v454 = vadd.f32 %v333, %v453
        %v455 = vpop.f32.mrb[0].mxu0
        %v456 = vpop.f32.mrb[0].mxu0
        %v457 = vadd.f32 %v336, %v456
        %v458 = vpop.f32.mrb[0].mxu0
        %459 = vmatprep.mubr.bf16.mxu0 0
        %460 = vmatmul.mubr.bf16.gmra.mrb[0].mxu0 %v406
        %v461 = vpop.f32.mrb[0].mxu0
        %v462 = vadd.f32 %v341, %v461
        %v463 = vpop.f32.mrb[0].mxu0
        %v464 = vpop.f32.mrb[0].mxu0
        %v465 = vadd.f32 %v344, %v464
        %v466 = vpop.f32.mrb[0].mxu0
        %467 = vmatprep.mubr.bf16.mxu0 0
        %468 = vmatmul.mubr.bf16.gmra.mrb[0].mxu0 %v409
        %v469 = vpop.f32.mrb[0].mxu0
        %v470 = vadd.f32 %v349, %v469
        %v471 = vpop.f32.mrb[0].mxu0
        %v472 = vpop.f32.mrb[0].mxu0
        %v473 = vadd.f32 %v352, %v472
        %v474 = vpop.f32.mrb[0].mxu0
        %475 = vdwg.mxu0
        %s476 = sadd.s32 %s22, 18
        %s477 = smul.u32 %s476, 8
        %s478 = smul.addr %s477, 4
        %s479 = scalar_lea.vmem %s188, %s478
        %v480 = vld [vmem:[%s479] sm:$0xf]
        %v481 = vld [vmem:[%s479 + $0x4] sm:$0xf]
        %v482 = vld [vmem:[%s479 + $0x8] sm:$0xf]
        %v483 = vld [vmem:[%s479 + $0xc] sm:$0xf]
        %v484 = vld [vmem:[%s479 + $0x10] sm:$0xf]
        %v485 = vld [vmem:[%s479 + $0x14] sm:$0xf]
        %v486 = vld [vmem:[%s479 + $0x18] sm:$0xf]
        %v487 = vld [vmem:[%s479 + $0x1c] sm:$0xf]
        %s488 = scalar_lea.vmem %s1, 64
        %v489 = vld [vmem:[%s488] sm:$0xf]
        %v490 = vld [vmem:[%s488 + $0x4] sm:$0xf]
        %v491 = vld [vmem:[%s488 + $0x8] sm:$0xf]
        %v492 = vld [vmem:[%s488 + $0xc] sm:$0xf]
        %v493 = vld [vmem:[%s488 + $0x10] sm:$0xf]
        %v494 = vld [vmem:[%s488 + $0x14] sm:$0xf]
        %v495 = vld [vmem:[%s488 + $0x18] sm:$0xf]
        %v496 = vld [vmem:[%s488 + $0x1c] sm:$0xf]
        %v505 = vunpack.c.l.b16 %v480
        %v506 = vunpack.c.l.b16 %v481
        %v507 = vunpack.c.l.b16 %v482
        %v508 = vunpack.c.l.b16 %v483
        %v509 = vunpack.c.l.b16 %v484
        %v510 = vunpack.c.l.b16 %v485
        %v511 = vunpack.c.l.b16 %v486
        %v512 = vunpack.c.l.b16 %v487
        %v513 = vpack.c.b16 %v506, %v505
        %v514 = vpack.c.b16 %v508, %v507
        %v515 = vpack.c.b16 %v510, %v509
        %v516 = vpack.c.b16 %v512, %v511
        %v525 = vunpack.c.l.b16 %v489
        %v526 = vunpack.c.l.b16 %v490
        %v527 = vunpack.c.l.b16 %v491
        %v528 = vunpack.c.l.b16 %v492
        %v529 = vunpack.c.l.b16 %v493
        %v530 = vunpack.c.l.b16 %v494
        %v531 = vunpack.c.l.b16 %v495
        %v532 = vunpack.c.l.b16 %v496
        %v533 = vpack.c.b16 %v526, %v525
        %v534 = vpack.c.b16 %v528, %v527
        %v535 = vpack.c.b16 %v530, %v529
        %v536 = vpack.c.b16 %v532, %v531
        %v542 = vsel %vm277, %v513, 0
        %v545 = vsel %vm277, %v514, 0
        %v548 = vsel %vm277, %v515, 0
        %v551 = vsel %vm277, %v516, 0
        %553 = vmatprep.subr.bf16.mxu0 0
        %554 = vmatpush1.bf16.msra.mxu0 %v533
        %555 = vmatprep.subr.bf16.mxu0 0
        %556 = vmatpush1.bf16.msra.mxu0 %v534
        %557 = vmatprep.subr.bf16.mxu0 0
        %558 = vmatpush1.bf16.msra.mxu0 %v535
        %559 = vmatprep.subr.bf16.mxu0 0
        %560 = vmatpush1.bf16.msra.mxu0 %v536
        %561 = vmatprep.subr.bf16.mxu0 0
        %562 = vmatpush1.bf16.msra.mxu0 0
        %563 = vmatprep.subr.bf16.mxu0 0
        %564 = vmatpush1.bf16.msra.mxu0 0
        %565 = vmatprep.subr.bf16.mxu0 0
        %566 = vmatpush1.bf16.msra.mxu0 0
        %567 = vmatprep.subr.bf16.mxu0 0
        %568 = vmatpush1.bf16.msra.mxu0 0
        %569 = vmatprep.subr.bf16.mxu0 0
        %570 = vmatpush1.bf16.msra.mxu0 0
        %571 = vmatprep.subr.bf16.mxu0 0
        %572 = vmatpush1.bf16.msra.mxu0 0
        %573 = vmatprep.subr.bf16.mxu0 0
        %574 = vmatpush1.bf16.msra.mxu0 0
        %575 = vmatprep.subr.bf16.mxu0 0
        %576 = vmatpush1.bf16.msra.mxu0 0
        %577 = vmatprep.subr.bf16.mxu0 0
        %578 = vmatpush1.bf16.msra.mxu0 0
        %579 = vmatprep.subr.bf16.mxu0 0
        %580 = vmatpush1.bf16.msra.mxu0 0
        %581 = vmatprep.subr.bf16.mxu0 0
        %582 = vmatpush1.bf16.msra.mxu0 0
        %583 = vmatprep.subr.bf16.mxu0 0
        %584 = vmatpush1.bf16.msra.mxu0 0
        %585 = vmatprep.mubr.bf16.mxu0 0
        %586 = vmatmul.mubr.bf16.gmra.mrb[0].mxu0 %v542
        %v587 = vpop.f32.mrb[0].mxu0
        %v588 = vadd.f32 0.0, %v587
        %v589 = vpop.f32.mrb[0].mxu0
        %v590 = vpop.f32.mrb[0].mxu0
        %v591 = vadd.f32 0.0, %v590
        %v592 = vpop.f32.mrb[0].mxu0
        %593 = vmatprep.mubr.bf16.mxu0 0
        %594 = vmatmul.mubr.bf16.gmra.mrb[0].mxu0 %v545
        %v595 = vpop.f32.mrb[0].mxu0
        %v596 = vadd.f32 0.0, %v595
        %v597 = vpop.f32.mrb[0].mxu0
        %v598 = vpop.f32.mrb[0].mxu0
        %v599 = vadd.f32 0.0, %v598
        %v600 = vpop.f32.mrb[0].mxu0
        %601 = vmatprep.mubr.bf16.mxu0 0
        %602 = vmatmul.mubr.bf16.gmra.mrb[0].mxu0 %v548
        %v603 = vpop.f32.mrb[0].mxu0
        %v604 = vadd.f32 0.0, %v603
        %v605 = vpop.f32.mrb[0].mxu0
        %v606 = vpop.f32.mrb[0].mxu0
        %v607 = vadd.f32 0.0, %v606
        %v608 = vpop.f32.mrb[0].mxu0
        %609 = vmatprep.mubr.bf16.mxu0 0
        %610 = vmatmul.mubr.bf16.gmra.mrb[0].mxu0 %v551
        %v611 = vpop.f32.mrb[0].mxu0
        %v612 = vadd.f32 0.0, %v611
        %v613 = vpop.f32.mrb[0].mxu0
        %v614 = vpop.f32.mrb[0].mxu0
        %v615 = vadd.f32 0.0, %v614
        %v616 = vpop.f32.mrb[0].mxu0
        %617 = vdwg.mxu0
        %v618 = vadd.f32 %v446, %v588
        %v619 = vadd.f32 %v449, %v591
        %v620 = vadd.f32 %v454, %v596
        %v621 = vadd.f32 %v457, %v599
        %v622 = vadd.f32 %v462, %v604
        %v623 = vadd.f32 %v465, %v607
        %v624 = vadd.f32 %v470, %v612
        %v625 = vadd.f32 %v473, %v615
        %s626 = sadd.s32 %s22, 27
        %s627 = smul.u32 %s626, 8
        %s628 = smul.addr %s627, 4
        %s629 = scalar_lea.vmem %s188, %s628
        %v630 = vld [vmem:[%s629] sm:$0xf]
        %v631 = vld [vmem:[%s629 + $0x4] sm:$0xf]
        %v632 = vld [vmem:[%s629 + $0x8] sm:$0xf]
        %v633 = vld [vmem:[%s629 + $0xc] sm:$0xf]
        %v634 = vld [vmem:[%s629 + $0x10] sm:$0xf]
        %v635 = vld [vmem:[%s629 + $0x14] sm:$0xf]
        %v636 = vld [vmem:[%s629 + $0x18] sm:$0xf]
        %v637 = vld [vmem:[%s629 + $0x1c] sm:$0xf]
        %s638 = scalar_lea.vmem %s1, 96
        %v639 = vld [vmem:[%s638] sm:$0xf]
        %v640 = vld [vmem:[%s638 + $0x4] sm:$0xf]
        %v641 = vld [vmem:[%s638 + $0x8] sm:$0xf]
        %v642 = vld [vmem:[%s638 + $0xc] sm:$0xf]
        %v643 = vld [vmem:[%s638 + $0x10] sm:$0xf]
        %v644 = vld [vmem:[%s638 + $0x14] sm:$0xf]
        %v645 = vld [vmem:[%s638 + $0x18] sm:$0xf]
        %v646 = vld [vmem:[%s638 + $0x1c] sm:$0xf]
        %v655 = vunpack.c.l.b16 %v630
        %v656 = vunpack.c.l.b16 %v631
        %v657 = vunpack.c.l.b16 %v632
        %v658 = vunpack.c.l.b16 %v633
        %v659 = vunpack.c.l.b16 %v634
        %v660 = vunpack.c.l.b16 %v635
        %v661 = vunpack.c.l.b16 %v636
        %v662 = vunpack.c.l.b16 %v637
        %v663 = vpack.c.b16 %v656, %v655
        %v664 = vpack.c.b16 %v658, %v657
        %v665 = vpack.c.b16 %v660, %v659
        %v666 = vpack.c.b16 %v662, %v661
        %v675 = vunpack.c.l.b16 %v639
        %v676 = vunpack.c.l.b16 %v640
        %v677 = vunpack.c.l.b16 %v641
        %v678 = vunpack.c.l.b16 %v642
        %v679 = vunpack.c.l.b16 %v643
        %v680 = vunpack.c.l.b16 %v644
        %v681 = vunpack.c.l.b16 %v645
        %v682 = vunpack.c.l.b16 %v646
        %v683 = vpack.c.b16 %v676, %v675
        %v684 = vpack.c.b16 %v678, %v677
        %v685 = vpack.c.b16 %v680, %v679
        %v686 = vpack.c.b16 %v682, %v681
        %v692 = vsel %vm277, %v663, 0
        %v695 = vsel %vm277, %v664, 0
        %v698 = vsel %vm277, %v665, 0
        %v701 = vsel %vm277, %v666, 0
        %703 = vmatprep.subr.bf16.mxu0 0
        %704 = vmatpush1.bf16.msra.mxu0 %v683
        %705 = vmatprep.subr.bf16.mxu0 0
        %706 = vmatpush1.bf16.msra.mxu0 %v684
        %707 = vmatprep.subr.bf16.mxu0 0
        %708 = vmatpush1.bf16.msra.mxu0 %v685
        %709 = vmatprep.subr.bf16.mxu0 0
        %710 = vmatpush1.bf16.msra.mxu0 %v686
        %711 = vmatprep.subr.bf16.mxu0 0
        %712 = vmatpush1.bf16.msra.mxu0 0
        %713 = vmatprep.subr.bf16.mxu0 0
        %714 = vmatpush1.bf16.msra.mxu0 0
        %715 = vmatprep.subr.bf16.mxu0 0
        %716 = vmatpush1.bf16.msra.mxu0 0
        %717 = vmatprep.subr.bf16.mxu0 0
        %718 = vmatpush1.bf16.msra.mxu0 0
        %719 = vmatprep.subr.bf16.mxu0 0
        %720 = vmatpush1.bf16.msra.mxu0 0
        %721 = vmatprep.subr.bf16.mxu0 0
        %722 = vmatpush1.bf16.msra.mxu0 0
        %723 = vmatprep.subr.bf16.mxu0 0
        %724 = vmatpush1.bf16.msra.mxu0 0
        %725 = vmatprep.subr.bf16.mxu0 0
        %726 = vmatpush1.bf16.msra.mxu0 0
        %727 = vmatprep.subr.bf16.mxu0 0
        %728 = vmatpush1.bf16.msra.mxu0 0
        %729 = vmatprep.subr.bf16.mxu0 0
        %730 = vmatpush1.bf16.msra.mxu0 0
        %731 = vmatprep.subr.bf16.mxu0 0
        %732 = vmatpush1.bf16.msra.mxu0 0
        %733 = vmatprep.subr.bf16.mxu0 0
        %734 = vmatpush1.bf16.msra.mxu0 0
        %735 = vmatprep.mubr.bf16.mxu0 0
        %736 = vmatmul.mubr.bf16.gmra.mrb[0].mxu0 %v692
        %v737 = vpop.f32.mrb[0].mxu0
        %v738 = vadd.f32 0.0, %v737
        %v739 = vpop.f32.mrb[0].mxu0
        %v740 = vpop.f32.mrb[0].mxu0
        %v741 = vadd.f32 0.0, %v740
        %v742 = vpop.f32.mrb[0].mxu0
        %743 = vmatprep.mubr.bf16.mxu0 0
        %744 = vmatmul.mubr.bf16.gmra.mrb[0].mxu0 %v695
        %v745 = vpop.f32.mrb[0].mxu0
        %v746 = vadd.f32 0.0, %v745
        %v747 = vpop.f32.mrb[0].mxu0
        %v748 = vpop.f32.mrb[0].mxu0
        %v749 = vadd.f32 0.0, %v748
        %v750 = vpop.f32.mrb[0].mxu0
        %751 = vmatprep.mubr.bf16.mxu0 0
        %752 = vmatmul.mubr.bf16.gmra.mrb[0].mxu0 %v698
        %v753 = vpop.f32.mrb[0].mxu0
        %v754 = vadd.f32 0.0, %v753
        %v755 = vpop.f32.mrb[0].mxu0
        %v756 = vpop.f32.mrb[0].mxu0
        %v757 = vadd.f32 0.0, %v756
        %v758 = vpop.f32.mrb[0].mxu0
        %759 = vmatprep.mubr.bf16.mxu0 0
        %760 = vmatmul.mubr.bf16.gmra.mrb[0].mxu0 %v701
        %v761 = vpop.f32.mrb[0].mxu0
        %v762 = vadd.f32 0.0, %v761
        %v763 = vpop.f32.mrb[0].mxu0
        %v764 = vpop.f32.mrb[0].mxu0
        %v765 = vadd.f32 0.0, %v764
        %v766 = vpop.f32.mrb[0].mxu0
        %767 = vdwg.mxu0
        %v768 = vadd.f32 %v618, %v738
        %v769 = vadd.f32 %v619, %v741
        %v770 = vadd.f32 %v620, %v746
        %v771 = vadd.f32 %v621, %v749
        %v772 = vadd.f32 %v622, %v754
        %v773 = vadd.f32 %v623, %v757
        %v774 = vadd.f32 %v624, %v762
        %v775 = vadd.f32 %v625, %v765
        %s776 = sadd.s32 %s22, 36
        %s777 = smul.u32 %s776, 8
        %s778 = smul.addr %s777, 4
        %s779 = scalar_lea.vmem %s188, %s778
        %v780 = vld [vmem:[%s779] sm:$0xf]
        %v781 = vld [vmem:[%s779 + $0x4] sm:$0xf]
        %v782 = vld [vmem:[%s779 + $0x8] sm:$0xf]
        %v783 = vld [vmem:[%s779 + $0xc] sm:$0xf]
        %v784 = vld [vmem:[%s779 + $0x10] sm:$0xf]
        %v785 = vld [vmem:[%s779 + $0x14] sm:$0xf]
        %v786 = vld [vmem:[%s779 + $0x18] sm:$0xf]
        %v787 = vld [vmem:[%s779 + $0x1c] sm:$0xf]
        %s788 = scalar_lea.vmem %s1, 128
        %v789 = vld [vmem:[%s788] sm:$0xf]
        %v790 = vld [vmem:[%s788 + $0x4] sm:$0xf]
        %v791 = vld [vmem:[%s788 + $0x8] sm:$0xf]
        %v792 = vld [vmem:[%s788 + $0xc] sm:$0xf]
        %v793 = vld [vmem:[%s788 + $0x10] sm:$0xf]
        %v794 = vld [vmem:[%s788 + $0x14] sm:$0xf]
        %v795 = vld [vmem:[%s788 + $0x18] sm:$0xf]
        %v796 = vld [vmem:[%s788 + $0x1c] sm:$0xf]
        %v805 = vunpack.c.l.b16 %v780
        %v806 = vunpack.c.l.b16 %v781
        %v807 = vunpack.c.l.b16 %v782
        %v808 = vunpack.c.l.b16 %v783
        %v809 = vunpack.c.l.b16 %v784
        %v810 = vunpack.c.l.b16 %v785
        %v811 = vunpack.c.l.b16 %v786
        %v812 = vunpack.c.l.b16 %v787
        %v813 = vpack.c.b16 %v806, %v805
        %v814 = vpack.c.b16 %v808, %v807
        %v815 = vpack.c.b16 %v810, %v809
        %v816 = vpack.c.b16 %v812, %v811
        %v825 = vunpack.c.l.b16 %v789
        %v826 = vunpack.c.l.b16 %v790
        %v827 = vunpack.c.l.b16 %v791
        %v828 = vunpack.c.l.b16 %v792
        %v829 = vunpack.c.l.b16 %v793
        %v830 = vunpack.c.l.b16 %v794
        %v831 = vunpack.c.l.b16 %v795
        %v832 = vunpack.c.l.b16 %v796
        %v833 = vpack.c.b16 %v826, %v825
        %v834 = vpack.c.b16 %v828, %v827
        %v835 = vpack.c.b16 %v830, %v829
        %v836 = vpack.c.b16 %v832, %v831
        %v842 = vsel %vm277, %v813, 0
        %v845 = vsel %vm277, %v814, 0
        %v848 = vsel %vm277, %v815, 0
        %v851 = vsel %vm277, %v816, 0
        %853 = vmatprep.subr.bf16.mxu0 0
        %854 = vmatpush1.bf16.msra.mxu0 %v833
        %855 = vmatprep.subr.bf16.mxu0 0
        %856 = vmatpush1.bf16.msra.mxu0 %v834
        %857 = vmatprep.subr.bf16.mxu0 0
        %858 = vmatpush1.bf16.msra.mxu0 %v835
        %859 = vmatprep.subr.bf16.mxu0 0
        %860 = vmatpush1.bf16.msra.mxu0 %v836
        %861 = vmatprep.subr.bf16.mxu0 0
        %862 = vmatpush1.bf16.msra.mxu0 0
        %863 = vmatprep.subr.bf16.mxu0 0
        %864 = vmatpush1.bf16.msra.mxu0 0
        %865 = vmatprep.subr.bf16.mxu0 0
        %866 = vmatpush1.bf16.msra.mxu0 0
        %867 = vmatprep.subr.bf16.mxu0 0
        %868 = vmatpush1.bf16.msra.mxu0 0
        %869 = vmatprep.subr.bf16.mxu0 0
        %870 = vmatpush1.bf16.msra.mxu0 0
        %871 = vmatprep.subr.bf16.mxu0 0
        %872 = vmatpush1.bf16.msra.mxu0 0
        %873 = vmatprep.subr.bf16.mxu0 0
        %874 = vmatpush1.bf16.msra.mxu0 0
        %875 = vmatprep.subr.bf16.mxu0 0
        %876 = vmatpush1.bf16.msra.mxu0 0
        %877 = vmatprep.subr.bf16.mxu0 0
        %878 = vmatpush1.bf16.msra.mxu0 0
        %879 = vmatprep.subr.bf16.mxu0 0
        %880 = vmatpush1.bf16.msra.mxu0 0
        %881 = vmatprep.subr.bf16.mxu0 0
        %882 = vmatpush1.bf16.msra.mxu0 0
        %883 = vmatprep.subr.bf16.mxu0 0
        %884 = vmatpush1.bf16.msra.mxu0 0
        %885 = vmatprep.mubr.bf16.mxu0 0
        %886 = vmatmul.mubr.bf16.gmra.mrb[0].mxu0 %v842
        %v887 = vpop.f32.mrb[0].mxu0
        %v888 = vadd.f32 0.0, %v887
        %v889 = vpop.f32.mrb[0].mxu0
        %v890 = vpop.f32.mrb[0].mxu0
        %v891 = vadd.f32 0.0, %v890
        %v892 = vpop.f32.mrb[0].mxu0
        %893 = vmatprep.mubr.bf16.mxu0 0
        %894 = vmatmul.mubr.bf16.gmra.mrb[0].mxu0 %v845
        %v895 = vpop.f32.mrb[0].mxu0
        %v896 = vadd.f32 0.0, %v895
        %v897 = vpop.f32.mrb[0].mxu0
        %v898 = vpop.f32.mrb[0].mxu0
        %v899 = vadd.f32 0.0, %v898
        %v900 = vpop.f32.mrb[0].mxu0
        %901 = vmatprep.mubr.bf16.mxu0 0
        %902 = vmatmul.mubr.bf16.gmra.mrb[0].mxu0 %v848
        %v903 = vpop.f32.mrb[0].mxu0
        %v904 = vadd.f32 0.0, %v903
        %v905 = vpop.f32.mrb[0].mxu0
        %v906 = vpop.f32.mrb[0].mxu0
        %v907 = vadd.f32 0.0, %v906
        %v908 = vpop.f32.mrb[0].mxu0
        %909 = vmatprep.mubr.bf16.mxu0 0
        %910 = vmatmul.mubr.bf16.gmra.mrb[0].mxu0 %v851
        %v911 = vpop.f32.mrb[0].mxu0
        %v912 = vadd.f32 0.0, %v911
        %v913 = vpop.f32.mrb[0].mxu0
        %v914 = vpop.f32.mrb[0].mxu0
        %v915 = vadd.f32 0.0, %v914
        %v916 = vpop.f32.mrb[0].mxu0
        %917 = vdwg.mxu0
        %v918 = vadd.f32 %v768, %v888
        %v919 = vadd.f32 %v769, %v891
        %v920 = vadd.f32 %v770, %v896
        %v921 = vadd.f32 %v771, %v899
        %v922 = vadd.f32 %v772, %v904
        %v923 = vadd.f32 %v773, %v907
        %v924 = vadd.f32 %v774, %v912
        %v925 = vadd.f32 %v775, %v915
        %s926 = sadd.s32 %s22, 45
        %s927 = smul.u32 %s926, 8
        %s928 = smul.addr %s927, 4
        %s929 = scalar_lea.vmem %s188, %s928
        %v930 = vld [vmem:[%s929] sm:$0xf]
        %v931 = vld [vmem:[%s929 + $0x4] sm:$0xf]
        %v932 = vld [vmem:[%s929 + $0x8] sm:$0xf]
        %v933 = vld [vmem:[%s929 + $0xc] sm:$0xf]
        %v934 = vld [vmem:[%s929 + $0x10] sm:$0xf]
        %v935 = vld [vmem:[%s929 + $0x14] sm:$0xf]
        %v936 = vld [vmem:[%s929 + $0x18] sm:$0xf]
        %v937 = vld [vmem:[%s929 + $0x1c] sm:$0xf]
        %s938 = scalar_lea.vmem %s1, 160
        %v939 = vld [vmem:[%s938] sm:$0xf]
        %v940 = vld [vmem:[%s938 + $0x4] sm:$0xf]
        %v941 = vld [vmem:[%s938 + $0x8] sm:$0xf]
        %v942 = vld [vmem:[%s938 + $0xc] sm:$0xf]
        %v943 = vld [vmem:[%s938 + $0x10] sm:$0xf]
        %v944 = vld [vmem:[%s938 + $0x14] sm:$0xf]
        %v945 = vld [vmem:[%s938 + $0x18] sm:$0xf]
        %v946 = vld [vmem:[%s938 + $0x1c] sm:$0xf]
        %v955 = vunpack.c.l.b16 %v930
        %v956 = vunpack.c.l.b16 %v931
        %v957 = vunpack.c.l.b16 %v932
        %v958 = vunpack.c.l.b16 %v933
        %v959 = vunpack.c.l.b16 %v934
        %v960 = vunpack.c.l.b16 %v935
        %v961 = vunpack.c.l.b16 %v936
        %v962 = vunpack.c.l.b16 %v937
        %v963 = vpack.c.b16 %v956, %v955
        %v964 = vpack.c.b16 %v958, %v957
        %v965 = vpack.c.b16 %v960, %v959
        %v966 = vpack.c.b16 %v962, %v961
        %v975 = vunpack.c.l.b16 %v939
        %v976 = vunpack.c.l.b16 %v940
        %v977 = vunpack.c.l.b16 %v941
        %v978 = vunpack.c.l.b16 %v942
        %v979 = vunpack.c.l.b16 %v943
        %v980 = vunpack.c.l.b16 %v944
        %v981 = vunpack.c.l.b16 %v945
        %v982 = vunpack.c.l.b16 %v946
        %v983 = vpack.c.b16 %v976, %v975
        %v984 = vpack.c.b16 %v978, %v977
        %v985 = vpack.c.b16 %v980, %v979
        %v986 = vpack.c.b16 %v982, %v981
        %v992 = vsel %vm277, %v963, 0
        %v995 = vsel %vm277, %v964, 0
        %v998 = vsel %vm277, %v965, 0
        %v1001 = vsel %vm277, %v966, 0
        %1003 = vmatprep.subr.bf16.mxu0 0
        %1004 = vmatpush1.bf16.msra.mxu0 %v983
        %1005 = vmatprep.subr.bf16.mxu0 0
        %1006 = vmatpush1.bf16.msra.mxu0 %v984
        %1007 = vmatprep.subr.bf16.mxu0 0
        %1008 = vmatpush1.bf16.msra.mxu0 %v985
        %1009 = vmatprep.subr.bf16.mxu0 0
        %1010 = vmatpush1.bf16.msra.mxu0 %v986
        %1011 = vmatprep.subr.bf16.mxu0 0
        %1012 = vmatpush1.bf16.msra.mxu0 0
        %1013 = vmatprep.subr.bf16.mxu0 0
        %1014 = vmatpush1.bf16.msra.mxu0 0
        %1015 = vmatprep.subr.bf16.mxu0 0
        %1016 = vmatpush1.bf16.msra.mxu0 0
        %1017 = vmatprep.subr.bf16.mxu0 0
        %1018 = vmatpush1.bf16.msra.mxu0 0
        %1019 = vmatprep.subr.bf16.mxu0 0
        %1020 = vmatpush1.bf16.msra.mxu0 0
        %1021 = vmatprep.subr.bf16.mxu0 0
        %1022 = vmatpush1.bf16.msra.mxu0 0
        %1023 = vmatprep.subr.bf16.mxu0 0
        %1024 = vmatpush1.bf16.msra.mxu0 0
        %1025 = vmatprep.subr.bf16.mxu0 0
        %1026 = vmatpush1.bf16.msra.mxu0 0
        %1027 = vmatprep.subr.bf16.mxu0 0
        %1028 = vmatpush1.bf16.msra.mxu0 0
        %1029 = vmatprep.subr.bf16.mxu0 0
        %1030 = vmatpush1.bf16.msra.mxu0 0
        %1031 = vmatprep.subr.bf16.mxu0 0
        %1032 = vmatpush1.bf16.msra.mxu0 0
        %1033 = vmatprep.subr.bf16.mxu0 0
        %1034 = vmatpush1.bf16.msra.mxu0 0
        %1035 = vmatprep.mubr.bf16.mxu0 0
        %1036 = vmatmul.mubr.bf16.gmra.mrb[0].mxu0 %v992
        %v1037 = vpop.f32.mrb[0].mxu0
        %v1038 = vadd.f32 0.0, %v1037
        %v1039 = vpop.f32.mrb[0].mxu0
        %v1040 = vpop.f32.mrb[0].mxu0
        %v1041 = vadd.f32 0.0, %v1040
        %v1042 = vpop.f32.mrb[0].mxu0
        %1043 = vmatprep.mubr.bf16.mxu0 0
        %1044 = vmatmul.mubr.bf16.gmra.mrb[0].mxu0 %v995
        %v1045 = vpop.f32.mrb[0].mxu0
        %v1046 = vadd.f32 0.0, %v1045
        %v1047 = vpop.f32.mrb[0].mxu0
        %v1048 = vpop.f32.mrb[0].mxu0
        %v1049 = vadd.f32 0.0, %v1048
        %v1050 = vpop.f32.mrb[0].mxu0
        %1051 = vmatprep.mubr.bf16.mxu0 0
        %1052 = vmatmul.mubr.bf16.gmra.mrb[0].mxu0 %v998
        %v1053 = vpop.f32.mrb[0].mxu0
        %v1054 = vadd.f32 0.0, %v1053
        %v1055 = vpop.f32.mrb[0].mxu0
        %v1056 = vpop.f32.mrb[0].mxu0
        %v1057 = vadd.f32 0.0, %v1056
        %v1058 = vpop.f32.mrb[0].mxu0
        %1059 = vmatprep.mubr.bf16.mxu0 0
        %1060 = vmatmul.mubr.bf16.gmra.mrb[0].mxu0 %v1001
        %v1061 = vpop.f32.mrb[0].mxu0
        %v1062 = vadd.f32 0.0, %v1061
        %v1063 = vpop.f32.mrb[0].mxu0
        %v1064 = vpop.f32.mrb[0].mxu0
        %v1065 = vadd.f32 0.0, %v1064
        %v1066 = vpop.f32.mrb[0].mxu0
        %1067 = vdwg.mxu0
        %v1068 = vadd.f32 %v918, %v1038
        %v1069 = vadd.f32 %v919, %v1041
        %v1070 = vadd.f32 %v920, %v1046
        %v1071 = vadd.f32 %v921, %v1049
        %v1072 = vadd.f32 %v922, %v1054
        %v1073 = vadd.f32 %v923, %v1057
        %v1074 = vadd.f32 %v924, %v1062
        %v1075 = vadd.f32 %v925, %v1065
        %s1076 = sadd.s32 %s22, 54
        %s1077 = smul.u32 %s1076, 8
        %s1078 = smul.addr %s1077, 4
        %s1079 = scalar_lea.vmem %s188, %s1078
        %v1080 = vld [vmem:[%s1079] sm:$0xf]
        %v1081 = vld [vmem:[%s1079 + $0x4] sm:$0xf]
        %v1082 = vld [vmem:[%s1079 + $0x8] sm:$0xf]
        %v1083 = vld [vmem:[%s1079 + $0xc] sm:$0xf]
        %v1084 = vld [vmem:[%s1079 + $0x10] sm:$0xf]
        %v1085 = vld [vmem:[%s1079 + $0x14] sm:$0xf]
        %v1086 = vld [vmem:[%s1079 + $0x18] sm:$0xf]
        %v1087 = vld [vmem:[%s1079 + $0x1c] sm:$0xf]
        %s1088 = scalar_lea.vmem %s1, 192
        %v1089 = vld [vmem:[%s1088] sm:$0xf]
        %v1090 = vld [vmem:[%s1088 + $0x4] sm:$0xf]
        %v1091 = vld [vmem:[%s1088 + $0x8] sm:$0xf]
        %v1092 = vld [vmem:[%s1088 + $0xc] sm:$0xf]
        %v1093 = vld [vmem:[%s1088 + $0x10] sm:$0xf]
        %v1094 = vld [vmem:[%s1088 + $0x14] sm:$0xf]
        %v1095 = vld [vmem:[%s1088 + $0x18] sm:$0xf]
        %v1096 = vld [vmem:[%s1088 + $0x1c] sm:$0xf]
        %v1105 = vunpack.c.l.b16 %v1080
        %v1106 = vunpack.c.l.b16 %v1081
        %v1107 = vunpack.c.l.b16 %v1082
        %v1108 = vunpack.c.l.b16 %v1083
        %v1109 = vunpack.c.l.b16 %v1084
        %v1110 = vunpack.c.l.b16 %v1085
        %v1111 = vunpack.c.l.b16 %v1086
        %v1112 = vunpack.c.l.b16 %v1087
        %v1113 = vpack.c.b16 %v1106, %v1105
        %v1114 = vpack.c.b16 %v1108, %v1107
        %v1115 = vpack.c.b16 %v1110, %v1109
        %v1116 = vpack.c.b16 %v1112, %v1111
        %v1125 = vunpack.c.l.b16 %v1089
        %v1126 = vunpack.c.l.b16 %v1090
        %v1127 = vunpack.c.l.b16 %v1091
        %v1128 = vunpack.c.l.b16 %v1092
        %v1129 = vunpack.c.l.b16 %v1093
        %v1130 = vunpack.c.l.b16 %v1094
        %v1131 = vunpack.c.l.b16 %v1095
        %v1132 = vunpack.c.l.b16 %v1096
        %v1133 = vpack.c.b16 %v1126, %v1125
        %v1134 = vpack.c.b16 %v1128, %v1127
        %v1135 = vpack.c.b16 %v1130, %v1129
        %v1136 = vpack.c.b16 %v1132, %v1131
        %v1142 = vsel %vm277, %v1113, 0
        %v1145 = vsel %vm277, %v1114, 0
        %v1148 = vsel %vm277, %v1115, 0
        %v1151 = vsel %vm277, %v1116, 0
        %1153 = vmatprep.subr.bf16.mxu0 0
        %1154 = vmatpush1.bf16.msra.mxu0 %v1133
        %1155 = vmatprep.subr.bf16.mxu0 0
        %1156 = vmatpush1.bf16.msra.mxu0 %v1134
        %1157 = vmatprep.subr.bf16.mxu0 0
        %1158 = vmatpush1.bf16.msra.mxu0 %v1135
        %1159 = vmatprep.subr.bf16.mxu0 0
        %1160 = vmatpush1.bf16.msra.mxu0 %v1136
        %1161 = vmatprep.subr.bf16.mxu0 0
        %1162 = vmatpush1.bf16.msra.mxu0 0
        %1163 = vmatprep.subr.bf16.mxu0 0
        %1164 = vmatpush1.bf16.msra.mxu0 0
        %1165 = vmatprep.subr.bf16.mxu0 0
        %1166 = vmatpush1.bf16.msra.mxu0 0
        %1167 = vmatprep.subr.bf16.mxu0 0
        %1168 = vmatpush1.bf16.msra.mxu0 0
        %1169 = vmatprep.subr.bf16.mxu0 0
        %1170 = vmatpush1.bf16.msra.mxu0 0
        %1171 = vmatprep.subr.bf16.mxu0 0
        %1172 = vmatpush1.bf16.msra.mxu0 0
        %1173 = vmatprep.subr.bf16.mxu0 0
        %1174 = vmatpush1.bf16.msra.mxu0 0
        %1175 = vmatprep.subr.bf16.mxu0 0
        %1176 = vmatpush1.bf16.msra.mxu0 0
        %1177 = vmatprep.subr.bf16.mxu0 0
        %1178 = vmatpush1.bf16.msra.mxu0 0
        %1179 = vmatprep.subr.bf16.mxu0 0
        %1180 = vmatpush1.bf16.msra.mxu0 0
        %1181 = vmatprep.subr.bf16.mxu0 0
        %1182 = vmatpush1.bf16.msra.mxu0 0
        %1183 = vmatprep.subr.bf16.mxu0 0
        %1184 = vmatpush1.bf16.msra.mxu0 0
        %1185 = vmatprep.mubr.bf16.mxu0 0
        %1186 = vmatmul.mubr.bf16.gmra.mrb[0].mxu0 %v1142
        %v1187 = vpop.f32.mrb[0].mxu0
        %v1188 = vadd.f32 0.0, %v1187
        %v1189 = vpop.f32.mrb[0].mxu0
        %v1190 = vpop.f32.mrb[0].mxu0
        %v1191 = vadd.f32 0.0, %v1190
        %v1192 = vpop.f32.mrb[0].mxu0
        %1193 = vmatprep.mubr.bf16.mxu0 0
        %1194 = vmatmul.mubr.bf16.gmra.mrb[0].mxu0 %v1145
        %v1195 = vpop.f32.mrb[0].mxu0
        %v1196 = vadd.f32 0.0, %v1195
        %v1197 = vpop.f32.mrb[0].mxu0
        %v1198 = vpop.f32.mrb[0].mxu0
        %v1199 = vadd.f32 0.0, %v1198
        %v1200 = vpop.f32.mrb[0].mxu0
        %1201 = vmatprep.mubr.bf16.mxu0 0
        %1202 = vmatmul.mubr.bf16.gmra.mrb[0].mxu0 %v1148
        %v1203 = vpop.f32.mrb[0].mxu0
        %v1204 = vadd.f32 0.0, %v1203
        %v1205 = vpop.f32.mrb[0].mxu0
        %v1206 = vpop.f32.mrb[0].mxu0
        %v1207 = vadd.f32 0.0, %v1206
        %v1208 = vpop.f32.mrb[0].mxu0
        %1209 = vmatprep.mubr.bf16.mxu0 0
        %1210 = vmatmul.mubr.bf16.gmra.mrb[0].mxu0 %v1151
        %v1211 = vpop.f32.mrb[0].mxu0
        %v1212 = vadd.f32 0.0, %v1211
        %v1213 = vpop.f32.mrb[0].mxu0
        %v1214 = vpop.f32.mrb[0].mxu0
        %v1215 = vadd.f32 0.0, %v1214
        %v1216 = vpop.f32.mrb[0].mxu0
        %1217 = vdwg.mxu0
        %v1218 = vadd.f32 %v1068, %v1188
        %v1219 = vadd.f32 %v1069, %v1191
        %v1220 = vadd.f32 %v1070, %v1196
        %v1221 = vadd.f32 %v1071, %v1199
        %v1222 = vadd.f32 %v1072, %v1204
        %v1223 = vadd.f32 %v1073, %v1207
        %v1224 = vadd.f32 %v1074, %v1212
        %v1225 = vadd.f32 %v1075, %v1215
        %s1226 = sadd.s32 %s22, 63
        %s1227 = smul.u32 %s1226, 8
        %s1228 = smul.addr %s1227, 4
        %s1229 = scalar_lea.vmem %s188, %s1228
        %v1230 = vld [vmem:[%s1229] sm:$0xf]
        %v1231 = vld [vmem:[%s1229 + $0x4] sm:$0xf]
        %v1232 = vld [vmem:[%s1229 + $0x8] sm:$0xf]
        %v1233 = vld [vmem:[%s1229 + $0xc] sm:$0xf]
        %v1234 = vld [vmem:[%s1229 + $0x10] sm:$0xf]
        %v1235 = vld [vmem:[%s1229 + $0x14] sm:$0xf]
        %v1236 = vld [vmem:[%s1229 + $0x18] sm:$0xf]
        %v1237 = vld [vmem:[%s1229 + $0x1c] sm:$0xf]
        %s1238 = scalar_lea.vmem %s1, 224
        %v1239 = vld [vmem:[%s1238] sm:$0xf]
        %v1240 = vld [vmem:[%s1238 + $0x4] sm:$0xf]
        %v1241 = vld [vmem:[%s1238 + $0x8] sm:$0xf]
        %v1242 = vld [vmem:[%s1238 + $0xc] sm:$0xf]
        %v1243 = vld [vmem:[%s1238 + $0x10] sm:$0xf]
        %v1244 = vld [vmem:[%s1238 + $0x14] sm:$0xf]
        %v1245 = vld [vmem:[%s1238 + $0x18] sm:$0xf]
        %v1246 = vld [vmem:[%s1238 + $0x1c] sm:$0xf]
        %v1255 = vunpack.c.l.b16 %v1230
        %v1256 = vunpack.c.l.b16 %v1231
        %v1257 = vunpack.c.l.b16 %v1232
        %v1258 = vunpack.c.l.b16 %v1233
        %v1259 = vunpack.c.l.b16 %v1234
        %v1260 = vunpack.c.l.b16 %v1235
        %v1261 = vunpack.c.l.b16 %v1236
        %v1262 = vunpack.c.l.b16 %v1237
        %v1263 = vpack.c.b16 %v1256, %v1255
        %v1264 = vpack.c.b16 %v1258, %v1257
        %v1265 = vpack.c.b16 %v1260, %v1259
        %v1266 = vpack.c.b16 %v1262, %v1261
        %v1275 = vunpack.c.l.b16 %v1239
        %v1276 = vunpack.c.l.b16 %v1240
        %v1277 = vunpack.c.l.b16 %v1241
        %v1278 = vunpack.c.l.b16 %v1242
        %v1279 = vunpack.c.l.b16 %v1243
        %v1280 = vunpack.c.l.b16 %v1244
        %v1281 = vunpack.c.l.b16 %v1245
        %v1282 = vunpack.c.l.b16 %v1246
        %v1283 = vpack.c.b16 %v1276, %v1275
        %v1284 = vpack.c.b16 %v1278, %v1277
        %v1285 = vpack.c.b16 %v1280, %v1279
        %v1286 = vpack.c.b16 %v1282, %v1281
        %v1292 = vsel %vm277, %v1263, 0
        %v1295 = vsel %vm277, %v1264, 0
        %v1298 = vsel %vm277, %v1265, 0
        %v1301 = vsel %vm277, %v1266, 0
        %1303 = vmatprep.subr.bf16.mxu0 0
        %1304 = vmatpush1.bf16.msra.mxu0 %v1283
        %1305 = vmatprep.subr.bf16.mxu0 0
        %1306 = vmatpush1.bf16.msra.mxu0 %v1284
        %1307 = vmatprep.subr.bf16.mxu0 0
        %1308 = vmatpush1.bf16.msra.mxu0 %v1285
        %1309 = vmatprep.subr.bf16.mxu0 0
        %1310 = vmatpush1.bf16.msra.mxu0 %v1286
        %1311 = vmatprep.subr.bf16.mxu0 0
        %1312 = vmatpush1.bf16.msra.mxu0 0
        %1313 = vmatprep.subr.bf16.mxu0 0
        %1314 = vmatpush1.bf16.msra.mxu0 0
        %1315 = vmatprep.subr.bf16.mxu0 0
        %1316 = vmatpush1.bf16.msra.mxu0 0
        %1317 = vmatprep.subr.bf16.mxu0 0
        %1318 = vmatpush1.bf16.msra.mxu0 0
        %1319 = vmatprep.subr.bf16.mxu0 0
        %1320 = vmatpush1.bf16.msra.mxu0 0
        %1321 = vmatprep.subr.bf16.mxu0 0
        %1322 = vmatpush1.bf16.msra.mxu0 0
        %1323 = vmatprep.subr.bf16.mxu0 0
        %1324 = vmatpush1.bf16.msra.mxu0 0
        %1325 = vmatprep.subr.bf16.mxu0 0
        %1326 = vmatpush1.bf16.msra.mxu0 0
        %1327 = vmatprep.subr.bf16.mxu0 0
        %1328 = vmatpush1.bf16.msra.mxu0 0
        %1329 = vmatprep.subr.bf16.mxu0 0
        %1330 = vmatpush1.bf16.msra.mxu0 0
        %1331 = vmatprep.subr.bf16.mxu0 0
        %1332 = vmatpush1.bf16.msra.mxu0 0
        %1333 = vmatprep.subr.bf16.mxu0 0
        %1334 = vmatpush1.bf16.msra.mxu0 0
        %1335 = vmatprep.mubr.bf16.mxu0 0
        %1336 = vmatmul.mubr.bf16.gmra.mrb[0].mxu0 %v1292
        %v1337 = vpop.f32.mrb[0].mxu0
        %v1338 = vadd.f32 0.0, %v1337
        %v1339 = vpop.f32.mrb[0].mxu0
        %v1340 = vpop.f32.mrb[0].mxu0
        %v1341 = vadd.f32 0.0, %v1340
        %v1342 = vpop.f32.mrb[0].mxu0
        %1343 = vmatprep.mubr.bf16.mxu0 0
        %1344 = vmatmul.mubr.bf16.gmra.mrb[0].mxu0 %v1295
        %v1345 = vpop.f32.mrb[0].mxu0
        %v1346 = vadd.f32 0.0, %v1345
        %v1347 = vpop.f32.mrb[0].mxu0
        %v1348 = vpop.f32.mrb[0].mxu0
        %v1349 = vadd.f32 0.0, %v1348
        %v1350 = vpop.f32.mrb[0].mxu0
        %1351 = vmatprep.mubr.bf16.mxu0 0
        %1352 = vmatmul.mubr.bf16.gmra.mrb[0].mxu0 %v1298
        %v1353 = vpop.f32.mrb[0].mxu0
        %v1354 = vadd.f32 0.0, %v1353
        %v1355 = vpop.f32.mrb[0].mxu0
        %v1356 = vpop.f32.mrb[0].mxu0
        %v1357 = vadd.f32 0.0, %v1356
        %v1358 = vpop.f32.mrb[0].mxu0
        %1359 = vmatprep.mubr.bf16.mxu0 0
        %1360 = vmatmul.mubr.bf16.gmra.mrb[0].mxu0 %v1301
        %v1361 = vpop.f32.mrb[0].mxu0
        %v1362 = vadd.f32 0.0, %v1361
        %v1363 = vpop.f32.mrb[0].mxu0
        %v1364 = vpop.f32.mrb[0].mxu0
        %v1365 = vadd.f32 0.0, %v1364
        %v1366 = vpop.f32.mrb[0].mxu0
        %1367 = vdwg.mxu0
        %v1368 = vadd.f32 %v1218, %v1338
        %v1369 = vadd.f32 %v1219, %v1341
        %v1370 = vadd.f32 %v1220, %v1346
        %v1371 = vadd.f32 %v1221, %v1349
        %v1372 = vadd.f32 %v1222, %v1354
        %v1373 = vadd.f32 %v1223, %v1357
        %v1374 = vadd.f32 %v1224, %v1362
        %v1375 = vadd.f32 %v1225, %v1365
        %s1376 = sadd.s32 %s22, 72
        %s1377 = smul.u32 %s1376, 8
        %s1378 = smul.addr %s1377, 4
        %s1379 = scalar_lea.vmem %s188, %s1378
        %v1380 = vld [vmem:[%s1379] sm:$0xf]
        %v1381 = vld [vmem:[%s1379 + $0x4] sm:$0xf]
        %v1382 = vld [vmem:[%s1379 + $0x8] sm:$0xf]
        %v1383 = vld [vmem:[%s1379 + $0xc] sm:$0xf]
        %v1384 = vld [vmem:[%s1379 + $0x10] sm:$0xf]
        %v1385 = vld [vmem:[%s1379 + $0x14] sm:$0xf]
        %v1386 = vld [vmem:[%s1379 + $0x18] sm:$0xf]
        %v1387 = vld [vmem:[%s1379 + $0x1c] sm:$0xf]
        %s1388 = scalar_lea.vmem %s1, 256
        %v1389 = vld [vmem:[%s1388] sm:$0xf]
        %v1390 = vld [vmem:[%s1388 + $0x4] sm:$0xf]
        %v1391 = vld [vmem:[%s1388 + $0x8] sm:$0xf]
        %v1392 = vld [vmem:[%s1388 + $0xc] sm:$0xf]
        %v1393 = vld [vmem:[%s1388 + $0x10] sm:$0xf]
        %v1394 = vld [vmem:[%s1388 + $0x14] sm:$0xf]
        %v1395 = vld [vmem:[%s1388 + $0x18] sm:$0xf]
        %v1396 = vld [vmem:[%s1388 + $0x1c] sm:$0xf]
        %v1405 = vunpack.c.l.b16 %v1380
        %v1406 = vunpack.c.l.b16 %v1381
        %v1407 = vunpack.c.l.b16 %v1382
        %v1408 = vunpack.c.l.b16 %v1383
        %v1409 = vunpack.c.l.b16 %v1384
        %v1410 = vunpack.c.l.b16 %v1385
        %v1411 = vunpack.c.l.b16 %v1386
        %v1412 = vunpack.c.l.b16 %v1387
        %v1413 = vpack.c.b16 %v1406, %v1405
        %v1414 = vpack.c.b16 %v1408, %v1407
        %v1415 = vpack.c.b16 %v1410, %v1409
        %v1416 = vpack.c.b16 %v1412, %v1411
        %v1425 = vunpack.c.l.b16 %v1389
        %v1426 = vunpack.c.l.b16 %v1390
        %v1427 = vunpack.c.l.b16 %v1391
        %v1428 = vunpack.c.l.b16 %v1392
        %v1429 = vunpack.c.l.b16 %v1393
        %v1430 = vunpack.c.l.b16 %v1394
        %v1431 = vunpack.c.l.b16 %v1395
        %v1432 = vunpack.c.l.b16 %v1396
        %v1433 = vpack.c.b16 %v1426, %v1425
        %v1434 = vpack.c.b16 %v1428, %v1427
        %v1435 = vpack.c.b16 %v1430, %v1429
        %v1436 = vpack.c.b16 %v1432, %v1431
        %v1442 = vsel %vm277, %v1413, 0
        %v1445 = vsel %vm277, %v1414, 0
        %v1448 = vsel %vm277, %v1415, 0
        %v1451 = vsel %vm277, %v1416, 0
        %1453 = vmatprep.subr.bf16.mxu0 0
        %1454 = vmatpush1.bf16.msra.mxu0 %v1433
        %1455 = vmatprep.subr.bf16.mxu0 0
        %1456 = vmatpush1.bf16.msra.mxu0 %v1434
        %1457 = vmatprep.subr.bf16.mxu0 0
        %1458 = vmatpush1.bf16.msra.mxu0 %v1435
        %1459 = vmatprep.subr.bf16.mxu0 0
        %1460 = vmatpush1.bf16.msra.mxu0 %v1436
        %1461 = vmatprep.subr.bf16.mxu0 0
        %1462 = vmatpush1.bf16.msra.mxu0 0
        %1463 = vmatprep.subr.bf16.mxu0 0
        %1464 = vmatpush1.bf16.msra.mxu0 0
        %1465 = vmatprep.subr.bf16.mxu0 0
        %1466 = vmatpush1.bf16.msra.mxu0 0
        %1467 = vmatprep.subr.bf16.mxu0 0
        %1468 = vmatpush1.bf16.msra.mxu0 0
        %1469 = vmatprep.subr.bf16.mxu0 0
        %1470 = vmatpush1.bf16.msra.mxu0 0
        %1471 = vmatprep.subr.bf16.mxu0 0
        %1472 = vmatpush1.bf16.msra.mxu0 0
        %1473 = vmatprep.subr.bf16.mxu0 0
        %1474 = vmatpush1.bf16.msra.mxu0 0
        %1475 = vmatprep.subr.bf16.mxu0 0
        %1476 = vmatpush1.bf16.msra.mxu0 0
        %1477 = vmatprep.subr.bf16.mxu0 0
        %1478 = vmatpush1.bf16.msra.mxu0 0
        %1479 = vmatprep.subr.bf16.mxu0 0
        %1480 = vmatpush1.bf16.msra.mxu0 0
        %1481 = vmatprep.subr.bf16.mxu0 0
        %1482 = vmatpush1.bf16.msra.mxu0 0
        %1483 = vmatprep.subr.bf16.mxu0 0
        %1484 = vmatpush1.bf16.msra.mxu0 0
        %1485 = vmatprep.mubr.bf16.mxu0 0
        %1486 = vmatmul.mubr.bf16.gmra.mrb[0].mxu0 %v1442
        %v1487 = vpop.f32.mrb[0].mxu0
        %v1488 = vadd.f32 0.0, %v1487
        %v1489 = vpop.f32.mrb[0].mxu0
        %v1490 = vpop.f32.mrb[0].mxu0
        %v1491 = vadd.f32 0.0, %v1490
        %v1492 = vpop.f32.mrb[0].mxu0
        %1493 = vmatprep.mubr.bf16.mxu0 0
        %1494 = vmatmul.mubr.bf16.gmra.mrb[0].mxu0 %v1445
        %v1495 = vpop.f32.mrb[0].mxu0
        %v1496 = vadd.f32 0.0, %v1495
        %v1497 = vpop.f32.mrb[0].mxu0
        %v1498 = vpop.f32.mrb[0].mxu0
        %v1499 = vadd.f32 0.0, %v1498
        %v1500 = vpop.f32.mrb[0].mxu0
        %1501 = vmatprep.mubr.bf16.mxu0 0
        %1502 = vmatmul.mubr.bf16.gmra.mrb[0].mxu0 %v1448
        %v1503 = vpop.f32.mrb[0].mxu0
        %v1504 = vadd.f32 0.0, %v1503
        %v1505 = vpop.f32.mrb[0].mxu0
        %v1506 = vpop.f32.mrb[0].mxu0
        %v1507 = vadd.f32 0.0, %v1506
        %v1508 = vpop.f32.mrb[0].mxu0
        %1509 = vmatprep.mubr.bf16.mxu0 0
        %1510 = vmatmul.mubr.bf16.gmra.mrb[0].mxu0 %v1451
        %v1511 = vpop.f32.mrb[0].mxu0
        %v1512 = vadd.f32 0.0, %v1511
        %v1513 = vpop.f32.mrb[0].mxu0
        %v1514 = vpop.f32.mrb[0].mxu0
        %v1515 = vadd.f32 0.0, %v1514
        %v1516 = vpop.f32.mrb[0].mxu0
        %1517 = vdwg.mxu0
        %v1518 = vadd.f32 %v1368, %v1488
        %v1519 = vadd.f32 %v1369, %v1491
        %v1520 = vadd.f32 %v1370, %v1496
        %v1521 = vadd.f32 %v1371, %v1499
        %v1522 = vadd.f32 %v1372, %v1504
        %v1523 = vadd.f32 %v1373, %v1507
        %v1524 = vadd.f32 %v1374, %v1512
        %v1525 = vadd.f32 %v1375, %v1515
        %s1526 = sadd.s32 %s22, 81
        %s1527 = smul.u32 %s1526, 8
        %s1528 = smul.addr %s1527, 4
        %s1529 = scalar_lea.vmem %s188, %s1528
        %v1530 = vld [vmem:[%s1529] sm:$0xf]
        %v1531 = vld [vmem:[%s1529 + $0x4] sm:$0xf]
        %v1532 = vld [vmem:[%s1529 + $0x8] sm:$0xf]
        %v1533 = vld [vmem:[%s1529 + $0xc] sm:$0xf]
        %v1534 = vld [vmem:[%s1529 + $0x10] sm:$0xf]
        %v1535 = vld [vmem:[%s1529 + $0x14] sm:$0xf]
        %v1536 = vld [vmem:[%s1529 + $0x18] sm:$0xf]
        %v1537 = vld [vmem:[%s1529 + $0x1c] sm:$0xf]
        %s1538 = scalar_lea.vmem %s1, 288
        %v1539 = vld [vmem:[%s1538] sm:$0xf]
        %v1540 = vld [vmem:[%s1538 + $0x4] sm:$0xf]
        %v1541 = vld [vmem:[%s1538 + $0x8] sm:$0xf]
        %v1542 = vld [vmem:[%s1538 + $0xc] sm:$0xf]
        %v1543 = vld [vmem:[%s1538 + $0x10] sm:$0xf]
        %v1544 = vld [vmem:[%s1538 + $0x14] sm:$0xf]
        %v1545 = vld [vmem:[%s1538 + $0x18] sm:$0xf]
        %v1546 = vld [vmem:[%s1538 + $0x1c] sm:$0xf]
        %v1555 = vunpack.c.l.b16 %v1530
        %v1556 = vunpack.c.l.b16 %v1531
        %v1557 = vunpack.c.l.b16 %v1532
        %v1558 = vunpack.c.l.b16 %v1533
        %v1559 = vunpack.c.l.b16 %v1534
        %v1560 = vunpack.c.l.b16 %v1535
        %v1561 = vunpack.c.l.b16 %v1536
        %v1562 = vunpack.c.l.b16 %v1537
        %v1563 = vpack.c.b16 %v1556, %v1555
        %v1564 = vpack.c.b16 %v1558, %v1557
        %v1565 = vpack.c.b16 %v1560, %v1559
        %v1566 = vpack.c.b16 %v1562, %v1561
        %v1575 = vunpack.c.l.b16 %v1539
        %v1576 = vunpack.c.l.b16 %v1540
        %v1577 = vunpack.c.l.b16 %v1541
        %v1578 = vunpack.c.l.b16 %v1542
        %v1579 = vunpack.c.l.b16 %v1543
        %v1580 = vunpack.c.l.b16 %v1544
        %v1581 = vunpack.c.l.b16 %v1545
        %v1582 = vunpack.c.l.b16 %v1546
        %v1583 = vpack.c.b16 %v1576, %v1575
        %v1584 = vpack.c.b16 %v1578, %v1577
        %v1585 = vpack.c.b16 %v1580, %v1579
        %v1586 = vpack.c.b16 %v1582, %v1581
        %v1592 = vsel %vm277, %v1563, 0
        %v1595 = vsel %vm277, %v1564, 0
        %v1598 = vsel %vm277, %v1565, 0
        %v1601 = vsel %vm277, %v1566, 0
        %1603 = vmatprep.subr.bf16.mxu0 0
        %1604 = vmatpush1.bf16.msra.mxu0 %v1583
        %1605 = vmatprep.subr.bf16.mxu0 0
        %1606 = vmatpush1.bf16.msra.mxu0 %v1584
        %1607 = vmatprep.subr.bf16.mxu0 0
        %1608 = vmatpush1.bf16.msra.mxu0 %v1585
        %1609 = vmatprep.subr.bf16.mxu0 0
        %1610 = vmatpush1.bf16.msra.mxu0 %v1586
        %1611 = vmatprep.subr.bf16.mxu0 0
        %1612 = vmatpush1.bf16.msra.mxu0 0
        %1613 = vmatprep.subr.bf16.mxu0 0
        %1614 = vmatpush1.bf16.msra.mxu0 0
        %1615 = vmatprep.subr.bf16.mxu0 0
        %1616 = vmatpush1.bf16.msra.mxu0 0
        %1617 = vmatprep.subr.bf16.mxu0 0
        %1618 = vmatpush1.bf16.msra.mxu0 0
        %1619 = vmatprep.subr.bf16.mxu0 0
        %1620 = vmatpush1.bf16.msra.mxu0 0
        %1621 = vmatprep.subr.bf16.mxu0 0
        %1622 = vmatpush1.bf16.msra.mxu0 0
        %1623 = vmatprep.subr.bf16.mxu0 0
        %1624 = vmatpush1.bf16.msra.mxu0 0
        %1625 = vmatprep.subr.bf16.mxu0 0
        %1626 = vmatpush1.bf16.msra.mxu0 0
        %1627 = vmatprep.subr.bf16.mxu0 0
        %1628 = vmatpush1.bf16.msra.mxu0 0
        %1629 = vmatprep.subr.bf16.mxu0 0
        %1630 = vmatpush1.bf16.msra.mxu0 0
        %1631 = vmatprep.subr.bf16.mxu0 0
        %1632 = vmatpush1.bf16.msra.mxu0 0
        %1633 = vmatprep.subr.bf16.mxu0 0
        %1634 = vmatpush1.bf16.msra.mxu0 0
        %1635 = vmatprep.mubr.bf16.mxu0 0
        %1636 = vmatmul.mubr.bf16.gmra.mrb[0].mxu0 %v1592
        %v1637 = vpop.f32.mrb[0].mxu0
        %v1638 = vadd.f32 0.0, %v1637
        %v1639 = vpop.f32.mrb[0].mxu0
        %v1640 = vpop.f32.mrb[0].mxu0
        %v1641 = vadd.f32 0.0, %v1640
        %v1642 = vpop.f32.mrb[0].mxu0
        %1643 = vmatprep.mubr.bf16.mxu0 0
        %1644 = vmatmul.mubr.bf16.gmra.mrb[0].mxu0 %v1595
        %v1645 = vpop.f32.mrb[0].mxu0
        %v1646 = vadd.f32 0.0, %v1645
        %v1647 = vpop.f32.mrb[0].mxu0
        %v1648 = vpop.f32.mrb[0].mxu0
        %v1649 = vadd.f32 0.0, %v1648
        %v1650 = vpop.f32.mrb[0].mxu0
        %1651 = vmatprep.mubr.bf16.mxu0 0
        %1652 = vmatmul.mubr.bf16.gmra.mrb[0].mxu0 %v1598
        %v1653 = vpop.f32.mrb[0].mxu0
        %v1654 = vadd.f32 0.0, %v1653
        %v1655 = vpop.f32.mrb[0].mxu0
        %v1656 = vpop.f32.mrb[0].mxu0
        %v1657 = vadd.f32 0.0, %v1656
        %v1658 = vpop.f32.mrb[0].mxu0
        %1659 = vmatprep.mubr.bf16.mxu0 0
        %1660 = vmatmul.mubr.bf16.gmra.mrb[0].mxu0 %v1601
        %v1661 = vpop.f32.mrb[0].mxu0
        %v1662 = vadd.f32 0.0, %v1661
        %v1663 = vpop.f32.mrb[0].mxu0
        %v1664 = vpop.f32.mrb[0].mxu0
        %v1665 = vadd.f32 0.0, %v1664
        %v1666 = vpop.f32.mrb[0].mxu0
        %1667 = vdwg.mxu0
        %v1668 = vadd.f32 %v1518, %v1638
        %v1669 = vadd.f32 %v1519, %v1641
        %v1670 = vadd.f32 %v1520, %v1646
        %v1671 = vadd.f32 %v1521, %v1649
        %v1672 = vadd.f32 %v1522, %v1654
        %v1673 = vadd.f32 %v1523, %v1657
        %v1674 = vadd.f32 %v1524, %v1662
        %v1675 = vadd.f32 %v1525, %v1665
        %s1676 = sadd.s32 %s22, 90
        %s1677 = smul.u32 %s1676, 8
        %s1678 = smul.addr %s1677, 4
        %s1679 = scalar_lea.vmem %s188, %s1678
        %v1680 = vld [vmem:[%s1679] sm:$0xf]
        %v1681 = vld [vmem:[%s1679 + $0x4] sm:$0xf]
        %v1682 = vld [vmem:[%s1679 + $0x8] sm:$0xf]
        %v1683 = vld [vmem:[%s1679 + $0xc] sm:$0xf]
        %v1684 = vld [vmem:[%s1679 + $0x10] sm:$0xf]
        %v1685 = vld [vmem:[%s1679 + $0x14] sm:$0xf]
        %v1686 = vld [vmem:[%s1679 + $0x18] sm:$0xf]
        %v1687 = vld [vmem:[%s1679 + $0x1c] sm:$0xf]
        %s1688 = scalar_lea.vmem %s1, 320
        %v1689 = vld [vmem:[%s1688] sm:$0xf]
        %v1690 = vld [vmem:[%s1688 + $0x4] sm:$0xf]
        %v1691 = vld [vmem:[%s1688 + $0x8] sm:$0xf]
        %v1692 = vld [vmem:[%s1688 + $0xc] sm:$0xf]
        %v1693 = vld [vmem:[%s1688 + $0x10] sm:$0xf]
        %v1694 = vld [vmem:[%s1688 + $0x14] sm:$0xf]
        %v1695 = vld [vmem:[%s1688 + $0x18] sm:$0xf]
        %v1696 = vld [vmem:[%s1688 + $0x1c] sm:$0xf]
        %v1705 = vunpack.c.l.b16 %v1680
        %v1706 = vunpack.c.l.b16 %v1681
        %v1707 = vunpack.c.l.b16 %v1682
        %v1708 = vunpack.c.l.b16 %v1683
        %v1709 = vunpack.c.l.b16 %v1684
        %v1710 = vunpack.c.l.b16 %v1685
        %v1711 = vunpack.c.l.b16 %v1686
        %v1712 = vunpack.c.l.b16 %v1687
        %v1713 = vpack.c.b16 %v1706, %v1705
        %v1714 = vpack.c.b16 %v1708, %v1707
        %v1715 = vpack.c.b16 %v1710, %v1709
        %v1716 = vpack.c.b16 %v1712, %v1711
        %v1725 = vunpack.c.l.b16 %v1689
        %v1726 = vunpack.c.l.b16 %v1690
        %v1727 = vunpack.c.l.b16 %v1691
        %v1728 = vunpack.c.l.b16 %v1692
        %v1729 = vunpack.c.l.b16 %v1693
        %v1730 = vunpack.c.l.b16 %v1694
        %v1731 = vunpack.c.l.b16 %v1695
        %v1732 = vunpack.c.l.b16 %v1696
        %v1733 = vpack.c.b16 %v1726, %v1725
        %v1734 = vpack.c.b16 %v1728, %v1727
        %v1735 = vpack.c.b16 %v1730, %v1729
        %v1736 = vpack.c.b16 %v1732, %v1731
        %v1742 = vsel %vm277, %v1713, 0
        %v1745 = vsel %vm277, %v1714, 0
        %v1748 = vsel %vm277, %v1715, 0
        %v1751 = vsel %vm277, %v1716, 0
        %1753 = vmatprep.subr.bf16.mxu0 0
        %1754 = vmatpush1.bf16.msra.mxu0 %v1733
        %1755 = vmatprep.subr.bf16.mxu0 0
        %1756 = vmatpush1.bf16.msra.mxu0 %v1734
        %1757 = vmatprep.subr.bf16.mxu0 0
        %1758 = vmatpush1.bf16.msra.mxu0 %v1735
        %1759 = vmatprep.subr.bf16.mxu0 0
        %1760 = vmatpush1.bf16.msra.mxu0 %v1736
        %1761 = vmatprep.subr.bf16.mxu0 0
        %1762 = vmatpush1.bf16.msra.mxu0 0
        %1763 = vmatprep.subr.bf16.mxu0 0
        %1764 = vmatpush1.bf16.msra.mxu0 0
        %1765 = vmatprep.subr.bf16.mxu0 0
        %1766 = vmatpush1.bf16.msra.mxu0 0
        %1767 = vmatprep.subr.bf16.mxu0 0
        %1768 = vmatpush1.bf16.msra.mxu0 0
        %1769 = vmatprep.subr.bf16.mxu0 0
        %1770 = vmatpush1.bf16.msra.mxu0 0
        %1771 = vmatprep.subr.bf16.mxu0 0
        %1772 = vmatpush1.bf16.msra.mxu0 0
        %1773 = vmatprep.subr.bf16.mxu0 0
        %1774 = vmatpush1.bf16.msra.mxu0 0
        %1775 = vmatprep.subr.bf16.mxu0 0
        %1776 = vmatpush1.bf16.msra.mxu0 0
        %1777 = vmatprep.subr.bf16.mxu0 0
        %1778 = vmatpush1.bf16.msra.mxu0 0
        %1779 = vmatprep.subr.bf16.mxu0 0
        %1780 = vmatpush1.bf16.msra.mxu0 0
        %1781 = vmatprep.subr.bf16.mxu0 0
        %1782 = vmatpush1.bf16.msra.mxu0 0
        %1783 = vmatprep.subr.bf16.mxu0 0
        %1784 = vmatpush1.bf16.msra.mxu0 0
        %1785 = vmatprep.mubr.bf16.mxu0 0
        %1786 = vmatmul.mubr.bf16.gmra.mrb[0].mxu0 %v1742
        %v1787 = vpop.f32.mrb[0].mxu0
        %v1788 = vadd.f32 0.0, %v1787
        %v1789 = vpop.f32.mrb[0].mxu0
        %v1790 = vpop.f32.mrb[0].mxu0
        %v1791 = vadd.f32 0.0, %v1790
        %v1792 = vpop.f32.mrb[0].mxu0
        %1793 = vmatprep.mubr.bf16.mxu0 0
        %1794 = vmatmul.mubr.bf16.gmra.mrb[0].mxu0 %v1745
        %v1795 = vpop.f32.mrb[0].mxu0
        %v1796 = vadd.f32 0.0, %v1795
        %v1797 = vpop.f32.mrb[0].mxu0
        %v1798 = vpop.f32.mrb[0].mxu0
        %v1799 = vadd.f32 0.0, %v1798
        %v1800 = vpop.f32.mrb[0].mxu0
        %1801 = vmatprep.mubr.bf16.mxu0 0
        %1802 = vmatmul.mubr.bf16.gmra.mrb[0].mxu0 %v1748
        %v1803 = vpop.f32.mrb[0].mxu0
        %v1804 = vadd.f32 0.0, %v1803
        %v1805 = vpop.f32.mrb[0].mxu0
        %v1806 = vpop.f32.mrb[0].mxu0
        %v1807 = vadd.f32 0.0, %v1806
        %v1808 = vpop.f32.mrb[0].mxu0
        %1809 = vmatprep.mubr.bf16.mxu0 0
        %1810 = vmatmul.mubr.bf16.gmra.mrb[0].mxu0 %v1751
        %v1811 = vpop.f32.mrb[0].mxu0
        %v1812 = vadd.f32 0.0, %v1811
        %v1813 = vpop.f32.mrb[0].mxu0
        %v1814 = vpop.f32.mrb[0].mxu0
        %v1815 = vadd.f32 0.0, %v1814
        %v1816 = vpop.f32.mrb[0].mxu0
        %1817 = vdwg.mxu0
        %v1818 = vadd.f32 %v1668, %v1788
        %v1819 = vadd.f32 %v1669, %v1791
        %v1820 = vadd.f32 %v1670, %v1796
        %v1821 = vadd.f32 %v1671, %v1799
        %v1822 = vadd.f32 %v1672, %v1804
        %v1823 = vadd.f32 %v1673, %v1807
        %v1824 = vadd.f32 %v1674, %v1812
        %v1825 = vadd.f32 %v1675, %v1815
        %s1826 = sadd.s32 %s22, 99
        %s1827 = smul.u32 %s1826, 8
        %s1828 = smul.addr %s1827, 4
        %s1829 = scalar_lea.vmem %s188, %s1828
        %v1830 = vld [vmem:[%s1829] sm:$0xf]
        %v1831 = vld [vmem:[%s1829 + $0x4] sm:$0xf]
        %v1832 = vld [vmem:[%s1829 + $0x8] sm:$0xf]
        %v1833 = vld [vmem:[%s1829 + $0xc] sm:$0xf]
        %v1834 = vld [vmem:[%s1829 + $0x10] sm:$0xf]
        %v1835 = vld [vmem:[%s1829 + $0x14] sm:$0xf]
        %v1836 = vld [vmem:[%s1829 + $0x18] sm:$0xf]
        %v1837 = vld [vmem:[%s1829 + $0x1c] sm:$0xf]
        %s1838 = scalar_lea.vmem %s1, 352
        %v1839 = vld [vmem:[%s1838] sm:$0xf]
        %v1840 = vld [vmem:[%s1838 + $0x4] sm:$0xf]
        %v1841 = vld [vmem:[%s1838 + $0x8] sm:$0xf]
        %v1842 = vld [vmem:[%s1838 + $0xc] sm:$0xf]
        %v1843 = vld [vmem:[%s1838 + $0x10] sm:$0xf]
        %v1844 = vld [vmem:[%s1838 + $0x14] sm:$0xf]
        %v1845 = vld [vmem:[%s1838 + $0x18] sm:$0xf]
        %v1846 = vld [vmem:[%s1838 + $0x1c] sm:$0xf]
        %v1855 = vunpack.c.l.b16 %v1830
        %v1856 = vunpack.c.l.b16 %v1831
        %v1857 = vunpack.c.l.b16 %v1832
        %v1858 = vunpack.c.l.b16 %v1833
        %v1859 = vunpack.c.l.b16 %v1834
        %v1860 = vunpack.c.l.b16 %v1835
        %v1861 = vunpack.c.l.b16 %v1836
        %v1862 = vunpack.c.l.b16 %v1837
        %v1863 = vpack.c.b16 %v1856, %v1855
        %v1864 = vpack.c.b16 %v1858, %v1857
        %v1865 = vpack.c.b16 %v1860, %v1859
        %v1866 = vpack.c.b16 %v1862, %v1861
        %v1875 = vunpack.c.l.b16 %v1839
        %v1876 = vunpack.c.l.b16 %v1840
        %v1877 = vunpack.c.l.b16 %v1841
        %v1878 = vunpack.c.l.b16 %v1842
        %v1879 = vunpack.c.l.b16 %v1843
        %v1880 = vunpack.c.l.b16 %v1844
        %v1881 = vunpack.c.l.b16 %v1845
        %v1882 = vunpack.c.l.b16 %v1846
        %v1883 = vpack.c.b16 %v1876, %v1875
        %v1884 = vpack.c.b16 %v1878, %v1877
        %v1885 = vpack.c.b16 %v1880, %v1879
        %v1886 = vpack.c.b16 %v1882, %v1881
        %v1892 = vsel %vm277, %v1863, 0
        %v1895 = vsel %vm277, %v1864, 0
        %v1898 = vsel %vm277, %v1865, 0
        %v1901 = vsel %vm277, %v1866, 0
        %1903 = vmatprep.subr.bf16.mxu0 0
        %1904 = vmatpush1.bf16.msra.mxu0 %v1883
        %1905 = vmatprep.subr.bf16.mxu0 0
        %1906 = vmatpush1.bf16.msra.mxu0 %v1884
        %1907 = vmatprep.subr.bf16.mxu0 0
        %1908 = vmatpush1.bf16.msra.mxu0 %v1885
        %1909 = vmatprep.subr.bf16.mxu0 0
        %1910 = vmatpush1.bf16.msra.mxu0 %v1886
        %1911 = vmatprep.subr.bf16.mxu0 0
        %1912 = vmatpush1.bf16.msra.mxu0 0
        %1913 = vmatprep.subr.bf16.mxu0 0
        %1914 = vmatpush1.bf16.msra.mxu0 0
        %1915 = vmatprep.subr.bf16.mxu0 0
        %1916 = vmatpush1.bf16.msra.mxu0 0
        %1917 = vmatprep.subr.bf16.mxu0 0
        %1918 = vmatpush1.bf16.msra.mxu0 0
        %1919 = vmatprep.subr.bf16.mxu0 0
        %1920 = vmatpush1.bf16.msra.mxu0 0
        %1921 = vmatprep.subr.bf16.mxu0 0
        %1922 = vmatpush1.bf16.msra.mxu0 0
        %1923 = vmatprep.subr.bf16.mxu0 0
        %1924 = vmatpush1.bf16.msra.mxu0 0
        %1925 = vmatprep.subr.bf16.mxu0 0
        %1926 = vmatpush1.bf16.msra.mxu0 0
        %1927 = vmatprep.subr.bf16.mxu0 0
        %1928 = vmatpush1.bf16.msra.mxu0 0
        %1929 = vmatprep.subr.bf16.mxu0 0
        %1930 = vmatpush1.bf16.msra.mxu0 0
        %1931 = vmatprep.subr.bf16.mxu0 0
        %1932 = vmatpush1.bf16.msra.mxu0 0
        %1933 = vmatprep.subr.bf16.mxu0 0
        %1934 = vmatpush1.bf16.msra.mxu0 0
        %1935 = vmatprep.mubr.bf16.mxu0 0
        %1936 = vmatmul.mubr.bf16.gmra.mrb[0].mxu0 %v1892
        %v1937 = vpop.f32.mrb[0].mxu0
        %v1938 = vadd.f32 0.0, %v1937
        %v1939 = vpop.f32.mrb[0].mxu0
        %v1940 = vpop.f32.mrb[0].mxu0
        %v1941 = vadd.f32 0.0, %v1940
        %v1942 = vpop.f32.mrb[0].mxu0
        %1943 = vmatprep.mubr.bf16.mxu0 0
        %1944 = vmatmul.mubr.bf16.gmra.mrb[0].mxu0 %v1895
        %v1945 = vpop.f32.mrb[0].mxu0
        %v1946 = vadd.f32 0.0, %v1945
        %v1947 = vpop.f32.mrb[0].mxu0
        %v1948 = vpop.f32.mrb[0].mxu0
        %v1949 = vadd.f32 0.0, %v1948
        %v1950 = vpop.f32.mrb[0].mxu0
        %1951 = vmatprep.mubr.bf16.mxu0 0
        %1952 = vmatmul.mubr.bf16.gmra.mrb[0].mxu0 %v1898
        %v1953 = vpop.f32.mrb[0].mxu0
        %v1954 = vadd.f32 0.0, %v1953
        %v1955 = vpop.f32.mrb[0].mxu0
        %v1956 = vpop.f32.mrb[0].mxu0
        %v1957 = vadd.f32 0.0, %v1956
        %v1958 = vpop.f32.mrb[0].mxu0
        %1959 = vmatprep.mubr.bf16.mxu0 0
        %1960 = vmatmul.mubr.bf16.gmra.mrb[0].mxu0 %v1901
        %v1961 = vpop.f32.mrb[0].mxu0
        %v1962 = vadd.f32 0.0, %v1961
        %v1963 = vpop.f32.mrb[0].mxu0
        %v1964 = vpop.f32.mrb[0].mxu0
        %v1965 = vadd.f32 0.0, %v1964
        %v1966 = vpop.f32.mrb[0].mxu0
        %1967 = vdwg.mxu0
        %v1968 = vadd.f32 %v1818, %v1938
        %v1969 = vadd.f32 %v1819, %v1941
        %v1970 = vadd.f32 %v1820, %v1946
        %v1971 = vadd.f32 %v1821, %v1949
        %v1972 = vadd.f32 %v1822, %v1954
        %v1973 = vadd.f32 %v1823, %v1957
        %v1974 = vadd.f32 %v1824, %v1962
        %v1975 = vadd.f32 %v1825, %v1965
        %s1976 = sadd.s32 %s22, 108
        %s1977 = smul.u32 %s1976, 8
        %s1978 = smul.addr %s1977, 4
        %s1979 = scalar_lea.vmem %s188, %s1978
        %v1980 = vld [vmem:[%s1979] sm:$0xf]
        %v1981 = vld [vmem:[%s1979 + $0x4] sm:$0xf]
        %v1982 = vld [vmem:[%s1979 + $0x8] sm:$0xf]
        %v1983 = vld [vmem:[%s1979 + $0xc] sm:$0xf]
        %v1984 = vld [vmem:[%s1979 + $0x10] sm:$0xf]
        %v1985 = vld [vmem:[%s1979 + $0x14] sm:$0xf]
        %v1986 = vld [vmem:[%s1979 + $0x18] sm:$0xf]
        %v1987 = vld [vmem:[%s1979 + $0x1c] sm:$0xf]
        %s1988 = scalar_lea.vmem %s1, 384
        %v1989 = vld [vmem:[%s1988] sm:$0xf]
        %v1990 = vld [vmem:[%s1988 + $0x4] sm:$0xf]
        %v1991 = vld [vmem:[%s1988 + $0x8] sm:$0xf]
        %v1992 = vld [vmem:[%s1988 + $0xc] sm:$0xf]
        %v1993 = vld [vmem:[%s1988 + $0x10] sm:$0xf]
        %v1994 = vld [vmem:[%s1988 + $0x14] sm:$0xf]
        %v1995 = vld [vmem:[%s1988 + $0x18] sm:$0xf]
        %v1996 = vld [vmem:[%s1988 + $0x1c] sm:$0xf]
        %v2005 = vunpack.c.l.b16 %v1980
        %v2006 = vunpack.c.l.b16 %v1981
        %v2007 = vunpack.c.l.b16 %v1982
        %v2008 = vunpack.c.l.b16 %v1983
        %v2009 = vunpack.c.l.b16 %v1984
        %v2010 = vunpack.c.l.b16 %v1985
        %v2011 = vunpack.c.l.b16 %v1986
        %v2012 = vunpack.c.l.b16 %v1987
        %v2013 = vpack.c.b16 %v2006, %v2005
        %v2014 = vpack.c.b16 %v2008, %v2007
        %v2015 = vpack.c.b16 %v2010, %v2009
        %v2016 = vpack.c.b16 %v2012, %v2011
        %v2025 = vunpack.c.l.b16 %v1989
        %v2026 = vunpack.c.l.b16 %v1990
        %v2027 = vunpack.c.l.b16 %v1991
        %v2028 = vunpack.c.l.b16 %v1992
        %v2029 = vunpack.c.l.b16 %v1993
        %v2030 = vunpack.c.l.b16 %v1994
        %v2031 = vunpack.c.l.b16 %v1995
        %v2032 = vunpack.c.l.b16 %v1996
        %v2033 = vpack.c.b16 %v2026, %v2025
        %v2034 = vpack.c.b16 %v2028, %v2027
        %v2035 = vpack.c.b16 %v2030, %v2029
        %v2036 = vpack.c.b16 %v2032, %v2031
        %v2042 = vsel %vm277, %v2013, 0
        %v2045 = vsel %vm277, %v2014, 0
        %v2048 = vsel %vm277, %v2015, 0
        %v2051 = vsel %vm277, %v2016, 0
        %2053 = vmatprep.subr.bf16.mxu0 0
        %2054 = vmatpush1.bf16.msra.mxu0 %v2033
        %2055 = vmatprep.subr.bf16.mxu0 0
        %2056 = vmatpush1.bf16.msra.mxu0 %v2034
        %2057 = vmatprep.subr.bf16.mxu0 0
        %2058 = vmatpush1.bf16.msra.mxu0 %v2035
        %2059 = vmatprep.subr.bf16.mxu0 0
        %2060 = vmatpush1.bf16.msra.mxu0 %v2036
        %2061 = vmatprep.subr.bf16.mxu0 0
        %2062 = vmatpush1.bf16.msra.mxu0 0
        %2063 = vmatprep.subr.bf16.mxu0 0
        %2064 = vmatpush1.bf16.msra.mxu0 0
        %2065 = vmatprep.subr.bf16.mxu0 0
        %2066 = vmatpush1.bf16.msra.mxu0 0
        %2067 = vmatprep.subr.bf16.mxu0 0
        %2068 = vmatpush1.bf16.msra.mxu0 0
        %2069 = vmatprep.subr.bf16.mxu0 0
        %2070 = vmatpush1.bf16.msra.mxu0 0
        %2071 = vmatprep.subr.bf16.mxu0 0
        %2072 = vmatpush1.bf16.msra.mxu0 0
        %2073 = vmatprep.subr.bf16.mxu0 0
        %2074 = vmatpush1.bf16.msra.mxu0 0
        %2075 = vmatprep.subr.bf16.mxu0 0
        %2076 = vmatpush1.bf16.msra.mxu0 0
        %2077 = vmatprep.subr.bf16.mxu0 0
        %2078 = vmatpush1.bf16.msra.mxu0 0
        %2079 = vmatprep.subr.bf16.mxu0 0
        %2080 = vmatpush1.bf16.msra.mxu0 0
        %2081 = vmatprep.subr.bf16.mxu0 0
        %2082 = vmatpush1.bf16.msra.mxu0 0
        %2083 = vmatprep.subr.bf16.mxu0 0
        %2084 = vmatpush1.bf16.msra.mxu0 0
        %2085 = vmatprep.mubr.bf16.mxu0 0
        %2086 = vmatmul.mubr.bf16.gmra.mrb[0].mxu0 %v2042
        %v2087 = vpop.f32.mrb[0].mxu0
        %v2088 = vadd.f32 0.0, %v2087
        %v2089 = vpop.f32.mrb[0].mxu0
        %v2090 = vpop.f32.mrb[0].mxu0
        %v2091 = vadd.f32 0.0, %v2090
        %v2092 = vpop.f32.mrb[0].mxu0
        %2093 = vmatprep.mubr.bf16.mxu0 0
        %2094 = vmatmul.mubr.bf16.gmra.mrb[0].mxu0 %v2045
        %v2095 = vpop.f32.mrb[0].mxu0
        %v2096 = vadd.f32 0.0, %v2095
        %v2097 = vpop.f32.mrb[0].mxu0
        %v2098 = vpop.f32.mrb[0].mxu0
        %v2099 = vadd.f32 0.0, %v2098
        %v2100 = vpop.f32.mrb[0].mxu0
        %2101 = vmatprep.mubr.bf16.mxu0 0
        %2102 = vmatmul.mubr.bf16.gmra.mrb[0].mxu0 %v2048
        %v2103 = vpop.f32.mrb[0].mxu0
        %v2104 = vadd.f32 0.0, %v2103
        %v2105 = vpop.f32.mrb[0].mxu0
        %v2106 = vpop.f32.mrb[0].mxu0
        %v2107 = vadd.f32 0.0, %v2106
        %v2108 = vpop.f32.mrb[0].mxu0
        %2109 = vmatprep.mubr.bf16.mxu0 0
        %2110 = vmatmul.mubr.bf16.gmra.mrb[0].mxu0 %v2051
        %v2111 = vpop.f32.mrb[0].mxu0
        %v2112 = vadd.f32 0.0, %v2111
        %v2113 = vpop.f32.mrb[0].mxu0
        %v2114 = vpop.f32.mrb[0].mxu0
        %v2115 = vadd.f32 0.0, %v2114
        %v2116 = vpop.f32.mrb[0].mxu0
        %2117 = vdwg.mxu0
        %v2118 = vadd.f32 %v1968, %v2088
        %v2119 = vadd.f32 %v1969, %v2091
        %v2120 = vadd.f32 %v1970, %v2096
        %v2121 = vadd.f32 %v1971, %v2099
        %v2122 = vadd.f32 %v1972, %v2104
        %v2123 = vadd.f32 %v1973, %v2107
        %v2124 = vadd.f32 %v1974, %v2112
        %v2125 = vadd.f32 %v1975, %v2115
        %s2126 = sadd.s32 %s22, 117
        %s2127 = smul.u32 %s2126, 8
        %s2128 = smul.addr %s2127, 4
        %s2129 = scalar_lea.vmem %s188, %s2128
        %v2130 = vld [vmem:[%s2129] sm:$0xf]
        %v2131 = vld [vmem:[%s2129 + $0x4] sm:$0xf]
        %v2132 = vld [vmem:[%s2129 + $0x8] sm:$0xf]
        %v2133 = vld [vmem:[%s2129 + $0xc] sm:$0xf]
        %v2134 = vld [vmem:[%s2129 + $0x10] sm:$0xf]
        %v2135 = vld [vmem:[%s2129 + $0x14] sm:$0xf]
        %v2136 = vld [vmem:[%s2129 + $0x18] sm:$0xf]
        %v2137 = vld [vmem:[%s2129 + $0x1c] sm:$0xf]
        %s2138 = scalar_lea.vmem %s1, 416
        %v2139 = vld [vmem:[%s2138] sm:$0xf]
        %v2140 = vld [vmem:[%s2138 + $0x4] sm:$0xf]
        %v2141 = vld [vmem:[%s2138 + $0x8] sm:$0xf]
        %v2142 = vld [vmem:[%s2138 + $0xc] sm:$0xf]
        %v2143 = vld [vmem:[%s2138 + $0x10] sm:$0xf]
        %v2144 = vld [vmem:[%s2138 + $0x14] sm:$0xf]
        %v2145 = vld [vmem:[%s2138 + $0x18] sm:$0xf]
        %v2146 = vld [vmem:[%s2138 + $0x1c] sm:$0xf]
        %v2155 = vunpack.c.l.b16 %v2130
        %v2156 = vunpack.c.l.b16 %v2131
        %v2157 = vunpack.c.l.b16 %v2132
        %v2158 = vunpack.c.l.b16 %v2133
        %v2159 = vunpack.c.l.b16 %v2134
        %v2160 = vunpack.c.l.b16 %v2135
        %v2161 = vunpack.c.l.b16 %v2136
        %v2162 = vunpack.c.l.b16 %v2137
        %v2163 = vpack.c.b16 %v2156, %v2155
        %v2164 = vpack.c.b16 %v2158, %v2157
        %v2165 = vpack.c.b16 %v2160, %v2159
        %v2166 = vpack.c.b16 %v2162, %v2161
        %v2175 = vunpack.c.l.b16 %v2139
        %v2176 = vunpack.c.l.b16 %v2140
        %v2177 = vunpack.c.l.b16 %v2141
        %v2178 = vunpack.c.l.b16 %v2142
        %v2179 = vunpack.c.l.b16 %v2143
        %v2180 = vunpack.c.l.b16 %v2144
        %v2181 = vunpack.c.l.b16 %v2145
        %v2182 = vunpack.c.l.b16 %v2146
        %v2183 = vpack.c.b16 %v2176, %v2175
        %v2184 = vpack.c.b16 %v2178, %v2177
        %v2185 = vpack.c.b16 %v2180, %v2179
        %v2186 = vpack.c.b16 %v2182, %v2181
        %v2192 = vsel %vm277, %v2163, 0
        %v2195 = vsel %vm277, %v2164, 0
        %v2198 = vsel %vm277, %v2165, 0
        %v2201 = vsel %vm277, %v2166, 0
        %2203 = vmatprep.subr.bf16.mxu0 0
        %2204 = vmatpush1.bf16.msra.mxu0 %v2183
        %2205 = vmatprep.subr.bf16.mxu0 0
        %2206 = vmatpush1.bf16.msra.mxu0 %v2184
        %2207 = vmatprep.subr.bf16.mxu0 0
        %2208 = vmatpush1.bf16.msra.mxu0 %v2185
        %2209 = vmatprep.subr.bf16.mxu0 0
        %2210 = vmatpush1.bf16.msra.mxu0 %v2186
        %2211 = vmatprep.subr.bf16.mxu0 0
        %2212 = vmatpush1.bf16.msra.mxu0 0
        %2213 = vmatprep.subr.bf16.mxu0 0
        %2214 = vmatpush1.bf16.msra.mxu0 0
        %2215 = vmatprep.subr.bf16.mxu0 0
        %2216 = vmatpush1.bf16.msra.mxu0 0
        %2217 = vmatprep.subr.bf16.mxu0 0
        %2218 = vmatpush1.bf16.msra.mxu0 0
        %2219 = vmatprep.subr.bf16.mxu0 0
        %2220 = vmatpush1.bf16.msra.mxu0 0
        %2221 = vmatprep.subr.bf16.mxu0 0
        %2222 = vmatpush1.bf16.msra.mxu0 0
        %2223 = vmatprep.subr.bf16.mxu0 0
        %2224 = vmatpush1.bf16.msra.mxu0 0
        %2225 = vmatprep.subr.bf16.mxu0 0
        %2226 = vmatpush1.bf16.msra.mxu0 0
        %2227 = vmatprep.subr.bf16.mxu0 0
        %2228 = vmatpush1.bf16.msra.mxu0 0
        %2229 = vmatprep.subr.bf16.mxu0 0
        %2230 = vmatpush1.bf16.msra.mxu0 0
        %2231 = vmatprep.subr.bf16.mxu0 0
        %2232 = vmatpush1.bf16.msra.mxu0 0
        %2233 = vmatprep.subr.bf16.mxu0 0
        %2234 = vmatpush1.bf16.msra.mxu0 0
        %2235 = vmatprep.mubr.bf16.mxu0 0
        %2236 = vmatmul.mubr.bf16.gmra.mrb[0].mxu0 %v2192
        %v2237 = vpop.f32.mrb[0].mxu0
        %v2238 = vadd.f32 0.0, %v2237
        %v2239 = vpop.f32.mrb[0].mxu0
        %v2240 = vpop.f32.mrb[0].mxu0
        %v2241 = vadd.f32 0.0, %v2240
        %v2242 = vpop.f32.mrb[0].mxu0
        %2243 = vmatprep.mubr.bf16.mxu0 0
        %2244 = vmatmul.mubr.bf16.gmra.mrb[0].mxu0 %v2195
        %v2245 = vpop.f32.mrb[0].mxu0
        %v2246 = vadd.f32 0.0, %v2245
        %v2247 = vpop.f32.mrb[0].mxu0
        %v2248 = vpop.f32.mrb[0].mxu0
        %v2249 = vadd.f32 0.0, %v2248
        %v2250 = vpop.f32.mrb[0].mxu0
        %2251 = vmatprep.mubr.bf16.mxu0 0
        %2252 = vmatmul.mubr.bf16.gmra.mrb[0].mxu0 %v2198
        %v2253 = vpop.f32.mrb[0].mxu0
        %v2254 = vadd.f32 0.0, %v2253
        %v2255 = vpop.f32.mrb[0].mxu0
        %v2256 = vpop.f32.mrb[0].mxu0
        %v2257 = vadd.f32 0.0, %v2256
        %v2258 = vpop.f32.mrb[0].mxu0
        %2259 = vmatprep.mubr.bf16.mxu0 0
        %2260 = vmatmul.mubr.bf16.gmra.mrb[0].mxu0 %v2201
        %v2261 = vpop.f32.mrb[0].mxu0
        %v2262 = vadd.f32 0.0, %v2261
        %v2263 = vpop.f32.mrb[0].mxu0
        %v2264 = vpop.f32.mrb[0].mxu0
        %v2265 = vadd.f32 0.0, %v2264
        %v2266 = vpop.f32.mrb[0].mxu0
        %2267 = vdwg.mxu0
        %v2268 = vadd.f32 %v2118, %v2238
        %v2269 = vadd.f32 %v2119, %v2241
        %v2270 = vadd.f32 %v2120, %v2246
        %v2271 = vadd.f32 %v2121, %v2249
        %v2272 = vadd.f32 %v2122, %v2254
        %v2273 = vadd.f32 %v2123, %v2257
        %v2274 = vadd.f32 %v2124, %v2262
        %v2275 = vadd.f32 %v2125, %v2265
        %s2276 = sadd.s32 %s22, 126
        %s2277 = smul.u32 %s2276, 8
        %s2278 = smul.addr %s2277, 4
        %s2279 = scalar_lea.vmem %s188, %s2278
        %v2280 = vld [vmem:[%s2279] sm:$0xf]
        %v2281 = vld [vmem:[%s2279 + $0x4] sm:$0xf]
        %v2282 = vld [vmem:[%s2279 + $0x8] sm:$0xf]
        %v2283 = vld [vmem:[%s2279 + $0xc] sm:$0xf]
        %v2284 = vld [vmem:[%s2279 + $0x10] sm:$0xf]
        %v2285 = vld [vmem:[%s2279 + $0x14] sm:$0xf]
        %v2286 = vld [vmem:[%s2279 + $0x18] sm:$0xf]
        %v2287 = vld [vmem:[%s2279 + $0x1c] sm:$0xf]
        %s2288 = scalar_lea.vmem %s1, 448
        %v2289 = vld [vmem:[%s2288] sm:$0xf]
        %v2290 = vld [vmem:[%s2288 + $0x4] sm:$0xf]
        %v2291 = vld [vmem:[%s2288 + $0x8] sm:$0xf]
        %v2292 = vld [vmem:[%s2288 + $0xc] sm:$0xf]
        %v2293 = vld [vmem:[%s2288 + $0x10] sm:$0xf]
        %v2294 = vld [vmem:[%s2288 + $0x14] sm:$0xf]
        %v2295 = vld [vmem:[%s2288 + $0x18] sm:$0xf]
        %v2296 = vld [vmem:[%s2288 + $0x1c] sm:$0xf]
        %v2305 = vunpack.c.l.b16 %v2280
        %v2306 = vunpack.c.l.b16 %v2281
        %v2307 = vunpack.c.l.b16 %v2282
        %v2308 = vunpack.c.l.b16 %v2283
        %v2309 = vunpack.c.l.b16 %v2284
        %v2310 = vunpack.c.l.b16 %v2285
        %v2311 = vunpack.c.l.b16 %v2286
        %v2312 = vunpack.c.l.b16 %v2287
        %v2313 = vpack.c.b16 %v2306, %v2305
        %v2314 = vpack.c.b16 %v2308, %v2307
        %v2315 = vpack.c.b16 %v2310, %v2309
        %v2316 = vpack.c.b16 %v2312, %v2311
        %v2325 = vunpack.c.l.b16 %v2289
        %v2326 = vunpack.c.l.b16 %v2290
        %v2327 = vunpack.c.l.b16 %v2291
        %v2328 = vunpack.c.l.b16 %v2292
        %v2329 = vunpack.c.l.b16 %v2293
        %v2330 = vunpack.c.l.b16 %v2294
        %v2331 = vunpack.c.l.b16 %v2295
        %v2332 = vunpack.c.l.b16 %v2296
        %v2333 = vpack.c.b16 %v2326, %v2325
        %v2334 = vpack.c.b16 %v2328, %v2327
        %v2335 = vpack.c.b16 %v2330, %v2329
        %v2336 = vpack.c.b16 %v2332, %v2331
        %v2342 = vsel %vm277, %v2313, 0
        %v2345 = vsel %vm277, %v2314, 0
        %v2348 = vsel %vm277, %v2315, 0
        %v2351 = vsel %vm277, %v2316, 0
        %2353 = vmatprep.subr.bf16.mxu0 0
        %2354 = vmatpush1.bf16.msra.mxu0 %v2333
        %2355 = vmatprep.subr.bf16.mxu0 0
        %2356 = vmatpush1.bf16.msra.mxu0 %v2334
        %2357 = vmatprep.subr.bf16.mxu0 0
        %2358 = vmatpush1.bf16.msra.mxu0 %v2335
        %2359 = vmatprep.subr.bf16.mxu0 0
        %2360 = vmatpush1.bf16.msra.mxu0 %v2336
        %2361 = vmatprep.subr.bf16.mxu0 0
        %2362 = vmatpush1.bf16.msra.mxu0 0
        %2363 = vmatprep.subr.bf16.mxu0 0
        %2364 = vmatpush1.bf16.msra.mxu0 0
        %2365 = vmatprep.subr.bf16.mxu0 0
        %2366 = vmatpush1.bf16.msra.mxu0 0
        %2367 = vmatprep.subr.bf16.mxu0 0
        %2368 = vmatpush1.bf16.msra.mxu0 0
        %2369 = vmatprep.subr.bf16.mxu0 0
        %2370 = vmatpush1.bf16.msra.mxu0 0
        %2371 = vmatprep.subr.bf16.mxu0 0
        %2372 = vmatpush1.bf16.msra.mxu0 0
        %2373 = vmatprep.subr.bf16.mxu0 0
        %2374 = vmatpush1.bf16.msra.mxu0 0
        %2375 = vmatprep.subr.bf16.mxu0 0
        %2376 = vmatpush1.bf16.msra.mxu0 0
        %2377 = vmatprep.subr.bf16.mxu0 0
        %2378 = vmatpush1.bf16.msra.mxu0 0
        %2379 = vmatprep.subr.bf16.mxu0 0
        %2380 = vmatpush1.bf16.msra.mxu0 0
        %2381 = vmatprep.subr.bf16.mxu0 0
        %2382 = vmatpush1.bf16.msra.mxu0 0
        %2383 = vmatprep.subr.bf16.mxu0 0
        %2384 = vmatpush1.bf16.msra.mxu0 0
        %2385 = vmatprep.mubr.bf16.mxu0 0
        %2386 = vmatmul.mubr.bf16.gmra.mrb[0].mxu0 %v2342
        %v2387 = vpop.f32.mrb[0].mxu0
        %v2388 = vadd.f32 0.0, %v2387
        %v2389 = vpop.f32.mrb[0].mxu0
        %v2390 = vpop.f32.mrb[0].mxu0
        %v2391 = vadd.f32 0.0, %v2390
        %v2392 = vpop.f32.mrb[0].mxu0
        %2393 = vmatprep.mubr.bf16.mxu0 0
        %2394 = vmatmul.mubr.bf16.gmra.mrb[0].mxu0 %v2345
        %v2395 = vpop.f32.mrb[0].mxu0
        %v2396 = vadd.f32 0.0, %v2395
        %v2397 = vpop.f32.mrb[0].mxu0
        %v2398 = vpop.f32.mrb[0].mxu0
        %v2399 = vadd.f32 0.0, %v2398
        %v2400 = vpop.f32.mrb[0].mxu0
        %2401 = vmatprep.mubr.bf16.mxu0 0
        %2402 = vmatmul.mubr.bf16.gmra.mrb[0].mxu0 %v2348
        %v2403 = vpop.f32.mrb[0].mxu0
        %v2404 = vadd.f32 0.0, %v2403
        %v2405 = vpop.f32.mrb[0].mxu0
        %v2406 = vpop.f32.mrb[0].mxu0
        %v2407 = vadd.f32 0.0, %v2406
        %v2408 = vpop.f32.mrb[0].mxu0
        %2409 = vmatprep.mubr.bf16.mxu0 0
        %2410 = vmatmul.mubr.bf16.gmra.mrb[0].mxu0 %v2351
        %v2411 = vpop.f32.mrb[0].mxu0
        %v2412 = vadd.f32 0.0, %v2411
        %v2413 = vpop.f32.mrb[0].mxu0
        %v2414 = vpop.f32.mrb[0].mxu0
        %v2415 = vadd.f32 0.0, %v2414
        %v2416 = vpop.f32.mrb[0].mxu0
        %2417 = vdwg.mxu0
        %v2418 = vadd.f32 %v2268, %v2388
        %v2419 = vadd.f32 %v2269, %v2391
        %v2420 = vadd.f32 %v2270, %v2396
        %v2421 = vadd.f32 %v2271, %v2399
        %v2422 = vadd.f32 %v2272, %v2404
        %v2423 = vadd.f32 %v2273, %v2407
        %v2424 = vadd.f32 %v2274, %v2412
        %v2425 = vadd.f32 %v2275, %v2415
        %s2426 = sadd.s32 %s22, 135
        %s2427 = smul.u32 %s2426, 8
        %s2428 = smul.addr %s2427, 4
        %s2429 = scalar_lea.vmem %s188, %s2428
        %v2430 = vld [vmem:[%s2429] sm:$0xf]
        %v2431 = vld [vmem:[%s2429 + $0x4] sm:$0xf]
        %v2432 = vld [vmem:[%s2429 + $0x8] sm:$0xf]
        %v2433 = vld [vmem:[%s2429 + $0xc] sm:$0xf]
        %v2434 = vld [vmem:[%s2429 + $0x10] sm:$0xf]
        %v2435 = vld [vmem:[%s2429 + $0x14] sm:$0xf]
        %v2436 = vld [vmem:[%s2429 + $0x18] sm:$0xf]
        %v2437 = vld [vmem:[%s2429 + $0x1c] sm:$0xf]
        %s2438 = scalar_lea.vmem %s1, 480
        %v2439 = vld [vmem:[%s2438] sm:$0xf]
        %v2440 = vld [vmem:[%s2438 + $0x4] sm:$0xf]
        %v2441 = vld [vmem:[%s2438 + $0x8] sm:$0xf]
        %v2442 = vld [vmem:[%s2438 + $0xc] sm:$0xf]
        %v2443 = vld [vmem:[%s2438 + $0x10] sm:$0xf]
        %v2444 = vld [vmem:[%s2438 + $0x14] sm:$0xf]
        %v2445 = vld [vmem:[%s2438 + $0x18] sm:$0xf]
        %v2446 = vld [vmem:[%s2438 + $0x1c] sm:$0xf]
        %v2455 = vunpack.c.l.b16 %v2430
        %v2456 = vunpack.c.l.b16 %v2431
        %v2457 = vunpack.c.l.b16 %v2432
        %v2458 = vunpack.c.l.b16 %v2433
        %v2459 = vunpack.c.l.b16 %v2434
        %v2460 = vunpack.c.l.b16 %v2435
        %v2461 = vunpack.c.l.b16 %v2436
        %v2462 = vunpack.c.l.b16 %v2437
        %v2463 = vpack.c.b16 %v2456, %v2455
        %v2464 = vpack.c.b16 %v2458, %v2457
        %v2465 = vpack.c.b16 %v2460, %v2459
        %v2466 = vpack.c.b16 %v2462, %v2461
        %v2475 = vunpack.c.l.b16 %v2439
        %v2476 = vunpack.c.l.b16 %v2440
        %v2477 = vunpack.c.l.b16 %v2441
        %v2478 = vunpack.c.l.b16 %v2442
        %v2479 = vunpack.c.l.b16 %v2443
        %v2480 = vunpack.c.l.b16 %v2444
        %v2481 = vunpack.c.l.b16 %v2445
        %v2482 = vunpack.c.l.b16 %v2446
        %v2483 = vpack.c.b16 %v2476, %v2475
        %v2484 = vpack.c.b16 %v2478, %v2477
        %v2485 = vpack.c.b16 %v2480, %v2479
        %v2486 = vpack.c.b16 %v2482, %v2481
        %v2492 = vsel %vm277, %v2463, 0
        %v2495 = vsel %vm277, %v2464, 0
        %v2498 = vsel %vm277, %v2465, 0
        %v2501 = vsel %vm277, %v2466, 0
        %2503 = vmatprep.subr.bf16.mxu0 0
        %2504 = vmatpush1.bf16.msra.mxu0 %v2483
        %2505 = vmatprep.subr.bf16.mxu0 0
        %2506 = vmatpush1.bf16.msra.mxu0 %v2484
        %2507 = vmatprep.subr.bf16.mxu0 0
        %2508 = vmatpush1.bf16.msra.mxu0 %v2485
        %2509 = vmatprep.subr.bf16.mxu0 0
        %2510 = vmatpush1.bf16.msra.mxu0 %v2486
        %2511 = vmatprep.subr.bf16.mxu0 0
        %2512 = vmatpush1.bf16.msra.mxu0 0
        %2513 = vmatprep.subr.bf16.mxu0 0
        %2514 = vmatpush1.bf16.msra.mxu0 0
        %2515 = vmatprep.subr.bf16.mxu0 0
        %2516 = vmatpush1.bf16.msra.mxu0 0
        %2517 = vmatprep.subr.bf16.mxu0 0
        %2518 = vmatpush1.bf16.msra.mxu0 0
        %2519 = vmatprep.subr.bf16.mxu0 0
        %2520 = vmatpush1.bf16.msra.mxu0 0
        %2521 = vmatprep.subr.bf16.mxu0 0
        %2522 = vmatpush1.bf16.msra.mxu0 0
        %2523 = vmatprep.subr.bf16.mxu0 0
        %2524 = vmatpush1.bf16.msra.mxu0 0
        %2525 = vmatprep.subr.bf16.mxu0 0
        %2526 = vmatpush1.bf16.msra.mxu0 0
        %2527 = vmatprep.subr.bf16.mxu0 0
        %2528 = vmatpush1.bf16.msra.mxu0 0
        %2529 = vmatprep.subr.bf16.mxu0 0
        %2530 = vmatpush1.bf16.msra.mxu0 0
        %2531 = vmatprep.subr.bf16.mxu0 0
        %2532 = vmatpush1.bf16.msra.mxu0 0
        %2533 = vmatprep.subr.bf16.mxu0 0
        %2534 = vmatpush1.bf16.msra.mxu0 0
        %2535 = vmatprep.mubr.bf16.mxu0 0
        %2536 = vmatmul.mubr.bf16.gmra.mrb[0].mxu0 %v2492
        %v2537 = vpop.f32.mrb[0].mxu0
        %v2538 = vadd.f32 0.0, %v2537
        %v2539 = vpop.f32.mrb[0].mxu0
        %v2540 = vpop.f32.mrb[0].mxu0
        %v2541 = vadd.f32 0.0, %v2540
        %v2542 = vpop.f32.mrb[0].mxu0
        %2543 = vmatprep.mubr.bf16.mxu0 0
        %2544 = vmatmul.mubr.bf16.gmra.mrb[0].mxu0 %v2495
        %v2545 = vpop.f32.mrb[0].mxu0
        %v2546 = vadd.f32 0.0, %v2545
        %v2547 = vpop.f32.mrb[0].mxu0
        %v2548 = vpop.f32.mrb[0].mxu0
        %v2549 = vadd.f32 0.0, %v2548
        %v2550 = vpop.f32.mrb[0].mxu0
        %2551 = vmatprep.mubr.bf16.mxu0 0
        %2552 = vmatmul.mubr.bf16.gmra.mrb[0].mxu0 %v2498
        %v2553 = vpop.f32.mrb[0].mxu0
        %v2554 = vadd.f32 0.0, %v2553
        %v2555 = vpop.f32.mrb[0].mxu0
        %v2556 = vpop.f32.mrb[0].mxu0
        %v2557 = vadd.f32 0.0, %v2556
        %v2558 = vpop.f32.mrb[0].mxu0
        %2559 = vmatprep.mubr.bf16.mxu0 0
        %2560 = vmatmul.mubr.bf16.gmra.mrb[0].mxu0 %v2501
        %v2561 = vpop.f32.mrb[0].mxu0
        %v2562 = vadd.f32 0.0, %v2561
        %v2563 = vpop.f32.mrb[0].mxu0
        %v2564 = vpop.f32.mrb[0].mxu0
        %v2565 = vadd.f32 0.0, %v2564
        %v2566 = vpop.f32.mrb[0].mxu0
        %2567 = vdwg.mxu0
        %v2568 = vadd.f32 %v2418, %v2538
        %v2569 = vadd.f32 %v2419, %v2541
        %v2570 = vadd.f32 %v2420, %v2546
        %v2571 = vadd.f32 %v2421, %v2549
        %v2572 = vadd.f32 %v2422, %v2554
        %v2573 = vadd.f32 %v2423, %v2557
        %v2574 = vadd.f32 %v2424, %v2562
        %v2575 = vadd.f32 %v2425, %v2565
        %s2576 = sadd.s32 %s22, 144
        %s2577 = smul.u32 %s2576, 8
        %s2578 = smul.addr %s2577, 4
        %s2579 = scalar_lea.vmem %s188, %s2578
        %v2580 = vld [vmem:[%s2579] sm:$0xf]
        %v2581 = vld [vmem:[%s2579 + $0x4] sm:$0xf]
        %v2582 = vld [vmem:[%s2579 + $0x8] sm:$0xf]
        %v2583 = vld [vmem:[%s2579 + $0xc] sm:$0xf]
        %v2584 = vld [vmem:[%s2579 + $0x10] sm:$0xf]
        %v2585 = vld [vmem:[%s2579 + $0x14] sm:$0xf]
        %v2586 = vld [vmem:[%s2579 + $0x18] sm:$0xf]
        %v2587 = vld [vmem:[%s2579 + $0x1c] sm:$0xf]
        %s2588 = scalar_lea.vmem %s1, 512
        %v2589 = vld [vmem:[%s2588] sm:$0xf]
        %v2590 = vld [vmem:[%s2588 + $0x4] sm:$0xf]
        %v2591 = vld [vmem:[%s2588 + $0x8] sm:$0xf]
        %v2592 = vld [vmem:[%s2588 + $0xc] sm:$0xf]
        %v2593 = vld [vmem:[%s2588 + $0x10] sm:$0xf]
        %v2594 = vld [vmem:[%s2588 + $0x14] sm:$0xf]
        %v2595 = vld [vmem:[%s2588 + $0x18] sm:$0xf]
        %v2596 = vld [vmem:[%s2588 + $0x1c] sm:$0xf]
        %v2605 = vunpack.c.l.b16 %v2580
        %v2606 = vunpack.c.l.b16 %v2581
        %v2607 = vunpack.c.l.b16 %v2582
        %v2608 = vunpack.c.l.b16 %v2583
        %v2609 = vunpack.c.l.b16 %v2584
        %v2610 = vunpack.c.l.b16 %v2585
        %v2611 = vunpack.c.l.b16 %v2586
        %v2612 = vunpack.c.l.b16 %v2587
        %v2613 = vpack.c.b16 %v2606, %v2605
        %v2614 = vpack.c.b16 %v2608, %v2607
        %v2615 = vpack.c.b16 %v2610, %v2609
        %v2616 = vpack.c.b16 %v2612, %v2611
        %v2625 = vunpack.c.l.b16 %v2589
        %v2626 = vunpack.c.l.b16 %v2590
        %v2627 = vunpack.c.l.b16 %v2591
        %v2628 = vunpack.c.l.b16 %v2592
        %v2629 = vunpack.c.l.b16 %v2593
        %v2630 = vunpack.c.l.b16 %v2594
        %v2631 = vunpack.c.l.b16 %v2595
        %v2632 = vunpack.c.l.b16 %v2596
        %v2633 = vpack.c.b16 %v2626, %v2625
        %v2634 = vpack.c.b16 %v2628, %v2627
        %v2635 = vpack.c.b16 %v2630, %v2629
        %v2636 = vpack.c.b16 %v2632, %v2631
        %v2642 = vsel %vm277, %v2613, 0
        %v2645 = vsel %vm277, %v2614, 0
        %v2648 = vsel %vm277, %v2615, 0
        %v2651 = vsel %vm277, %v2616, 0
        %2653 = vmatprep.subr.bf16.mxu0 0
        %2654 = vmatpush1.bf16.msra.mxu0 %v2633
        %2655 = vmatprep.subr.bf16.mxu0 0
        %2656 = vmatpush1.bf16.msra.mxu0 %v2634
        %2657 = vmatprep.subr.bf16.mxu0 0
        %2658 = vmatpush1.bf16.msra.mxu0 %v2635
        %2659 = vmatprep.subr.bf16.mxu0 0
        %2660 = vmatpush1.bf16.msra.mxu0 %v2636
        %2661 = vmatprep.subr.bf16.mxu0 0
        %2662 = vmatpush1.bf16.msra.mxu0 0
        %2663 = vmatprep.subr.bf16.mxu0 0
        %2664 = vmatpush1.bf16.msra.mxu0 0
        %2665 = vmatprep.subr.bf16.mxu0 0
        %2666 = vmatpush1.bf16.msra.mxu0 0
        %2667 = vmatprep.subr.bf16.mxu0 0
        %2668 = vmatpush1.bf16.msra.mxu0 0
        %2669 = vmatprep.subr.bf16.mxu0 0
        %2670 = vmatpush1.bf16.msra.mxu0 0
        %2671 = vmatprep.subr.bf16.mxu0 0
        %2672 = vmatpush1.bf16.msra.mxu0 0
        %2673 = vmatprep.subr.bf16.mxu0 0
        %2674 = vmatpush1.bf16.msra.mxu0 0
        %2675 = vmatprep.subr.bf16.mxu0 0
        %2676 = vmatpush1.bf16.msra.mxu0 0
        %2677 = vmatprep.subr.bf16.mxu0 0
        %2678 = vmatpush1.bf16.msra.mxu0 0
        %2679 = vmatprep.subr.bf16.mxu0 0
        %2680 = vmatpush1.bf16.msra.mxu0 0
        %2681 = vmatprep.subr.bf16.mxu0 0
        %2682 = vmatpush1.bf16.msra.mxu0 0
        %2683 = vmatprep.subr.bf16.mxu0 0
        %2684 = vmatpush1.bf16.msra.mxu0 0
        %2685 = vmatprep.mubr.bf16.mxu0 0
        %2686 = vmatmul.mubr.bf16.gmra.mrb[0].mxu0 %v2642
        %v2687 = vpop.f32.mrb[0].mxu0
        %v2688 = vadd.f32 0.0, %v2687
        %v2689 = vpop.f32.mrb[0].mxu0
        %v2690 = vpop.f32.mrb[0].mxu0
        %v2691 = vadd.f32 0.0, %v2690
        %v2692 = vpop.f32.mrb[0].mxu0
        %2693 = vmatprep.mubr.bf16.mxu0 0
        %2694 = vmatmul.mubr.bf16.gmra.mrb[0].mxu0 %v2645
        %v2695 = vpop.f32.mrb[0].mxu0
        %v2696 = vadd.f32 0.0, %v2695
        %v2697 = vpop.f32.mrb[0].mxu0
        %v2698 = vpop.f32.mrb[0].mxu0
        %v2699 = vadd.f32 0.0, %v2698
        %v2700 = vpop.f32.mrb[0].mxu0
        %2701 = vmatprep.mubr.bf16.mxu0 0
        %2702 = vmatmul.mubr.bf16.gmra.mrb[0].mxu0 %v2648
        %v2703 = vpop.f32.mrb[0].mxu0
        %v2704 = vadd.f32 0.0, %v2703
        %v2705 = vpop.f32.mrb[0].mxu0
        %v2706 = vpop.f32.mrb[0].mxu0
        %v2707 = vadd.f32 0.0, %v2706
        %v2708 = vpop.f32.mrb[0].mxu0
        %2709 = vmatprep.mubr.bf16.mxu0 0
        %2710 = vmatmul.mubr.bf16.gmra.mrb[0].mxu0 %v2651
        %v2711 = vpop.f32.mrb[0].mxu0
        %v2712 = vadd.f32 0.0, %v2711
        %v2713 = vpop.f32.mrb[0].mxu0
        %v2714 = vpop.f32.mrb[0].mxu0
        %v2715 = vadd.f32 0.0, %v2714
        %v2716 = vpop.f32.mrb[0].mxu0
        %2717 = vdwg.mxu0
        %v2718 = vadd.f32 %v2568, %v2688
        %v2719 = vadd.f32 %v2569, %v2691
        %v2720 = vadd.f32 %v2570, %v2696
        %v2721 = vadd.f32 %v2571, %v2699
        %v2722 = vadd.f32 %v2572, %v2704
        %v2723 = vadd.f32 %v2573, %v2707
        %v2724 = vadd.f32 %v2574, %v2712
        %v2725 = vadd.f32 %v2575, %v2715
        %s2726 = sadd.s32 %s22, 153
        %s2727 = smul.u32 %s2726, 8
        %s2728 = smul.addr %s2727, 4
        %s2729 = scalar_lea.vmem %s188, %s2728
        %v2730 = vld [vmem:[%s2729] sm:$0xf]
        %v2731 = vld [vmem:[%s2729 + $0x4] sm:$0xf]
        %v2732 = vld [vmem:[%s2729 + $0x8] sm:$0xf]
        %v2733 = vld [vmem:[%s2729 + $0xc] sm:$0xf]
        %v2734 = vld [vmem:[%s2729 + $0x10] sm:$0xf]
        %v2735 = vld [vmem:[%s2729 + $0x14] sm:$0xf]
        %v2736 = vld [vmem:[%s2729 + $0x18] sm:$0xf]
        %v2737 = vld [vmem:[%s2729 + $0x1c] sm:$0xf]
        %s2738 = scalar_lea.vmem %s1, 544
        %v2739 = vld [vmem:[%s2738] sm:$0xf]
        %v2740 = vld [vmem:[%s2738 + $0x4] sm:$0xf]
        %v2741 = vld [vmem:[%s2738 + $0x8] sm:$0xf]
        %v2742 = vld [vmem:[%s2738 + $0xc] sm:$0xf]
        %v2743 = vld [vmem:[%s2738 + $0x10] sm:$0xf]
        %v2744 = vld [vmem:[%s2738 + $0x14] sm:$0xf]
        %v2745 = vld [vmem:[%s2738 + $0x18] sm:$0xf]
        %v2746 = vld [vmem:[%s2738 + $0x1c] sm:$0xf]
        %v2755 = vunpack.c.l.b16 %v2730
        %v2756 = vunpack.c.l.b16 %v2731
        %v2757 = vunpack.c.l.b16 %v2732
        %v2758 = vunpack.c.l.b16 %v2733
        %v2759 = vunpack.c.l.b16 %v2734
        %v2760 = vunpack.c.l.b16 %v2735
        %v2761 = vunpack.c.l.b16 %v2736
        %v2762 = vunpack.c.l.b16 %v2737
        %v2763 = vpack.c.b16 %v2756, %v2755
        %v2764 = vpack.c.b16 %v2758, %v2757
        %v2765 = vpack.c.b16 %v2760, %v2759
        %v2766 = vpack.c.b16 %v2762, %v2761
        %v2775 = vunpack.c.l.b16 %v2739
        %v2776 = vunpack.c.l.b16 %v2740
        %v2777 = vunpack.c.l.b16 %v2741
        %v2778 = vunpack.c.l.b16 %v2742
        %v2779 = vunpack.c.l.b16 %v2743
        %v2780 = vunpack.c.l.b16 %v2744
        %v2781 = vunpack.c.l.b16 %v2745
        %v2782 = vunpack.c.l.b16 %v2746
        %v2783 = vpack.c.b16 %v2776, %v2775
        %v2784 = vpack.c.b16 %v2778, %v2777
        %v2785 = vpack.c.b16 %v2780, %v2779
        %v2786 = vpack.c.b16 %v2782, %v2781
        %v2792 = vsel %vm277, %v2763, 0
        %v2795 = vsel %vm277, %v2764, 0
        %v2798 = vsel %vm277, %v2765, 0
        %v2801 = vsel %vm277, %v2766, 0
        %2803 = vmatprep.subr.bf16.mxu0 0
        %2804 = vmatpush1.bf16.msra.mxu0 %v2783
        %2805 = vmatprep.subr.bf16.mxu0 0
        %2806 = vmatpush1.bf16.msra.mxu0 %v2784
        %2807 = vmatprep.subr.bf16.mxu0 0
        %2808 = vmatpush1.bf16.msra.mxu0 %v2785
        %2809 = vmatprep.subr.bf16.mxu0 0
        %2810 = vmatpush1.bf16.msra.mxu0 %v2786
        %2811 = vmatprep.subr.bf16.mxu0 0
        %2812 = vmatpush1.bf16.msra.mxu0 0
        %2813 = vmatprep.subr.bf16.mxu0 0
        %2814 = vmatpush1.bf16.msra.mxu0 0
        %2815 = vmatprep.subr.bf16.mxu0 0
        %2816 = vmatpush1.bf16.msra.mxu0 0
        %2817 = vmatprep.subr.bf16.mxu0 0
        %2818 = vmatpush1.bf16.msra.mxu0 0
        %2819 = vmatprep.subr.bf16.mxu0 0
        %2820 = vmatpush1.bf16.msra.mxu0 0
        %2821 = vmatprep.subr.bf16.mxu0 0
        %2822 = vmatpush1.bf16.msra.mxu0 0
        %2823 = vmatprep.subr.bf16.mxu0 0
        %2824 = vmatpush1.bf16.msra.mxu0 0
        %2825 = vmatprep.subr.bf16.mxu0 0
        %2826 = vmatpush1.bf16.msra.mxu0 0
        %2827 = vmatprep.subr.bf16.mxu0 0
        %2828 = vmatpush1.bf16.msra.mxu0 0
        %2829 = vmatprep.subr.bf16.mxu0 0
        %2830 = vmatpush1.bf16.msra.mxu0 0
        %2831 = vmatprep.subr.bf16.mxu0 0
        %2832 = vmatpush1.bf16.msra.mxu0 0
        %2833 = vmatprep.subr.bf16.mxu0 0
        %2834 = vmatpush1.bf16.msra.mxu0 0
        %2835 = vmatprep.mubr.bf16.mxu0 0
        %2836 = vmatmul.mubr.bf16.gmra.mrb[0].mxu0 %v2792
        %v2837 = vpop.f32.mrb[0].mxu0
        %v2838 = vadd.f32 0.0, %v2837
        %v2839 = vpop.f32.mrb[0].mxu0
        %v2840 = vpop.f32.mrb[0].mxu0
        %v2841 = vadd.f32 0.0, %v2840
        %v2842 = vpop.f32.mrb[0].mxu0
        %2843 = vmatprep.mubr.bf16.mxu0 0
        %2844 = vmatmul.mubr.bf16.gmra.mrb[0].mxu0 %v2795
        %v2845 = vpop.f32.mrb[0].mxu0
        %v2846 = vadd.f32 0.0, %v2845
        %v2847 = vpop.f32.mrb[0].mxu0
        %v2848 = vpop.f32.mrb[0].mxu0
        %v2849 = vadd.f32 0.0, %v2848
        %v2850 = vpop.f32.mrb[0].mxu0
        %2851 = vmatprep.mubr.bf16.mxu0 0
        %2852 = vmatmul.mubr.bf16.gmra.mrb[0].mxu0 %v2798
        %v2853 = vpop.f32.mrb[0].mxu0
        %v2854 = vadd.f32 0.0, %v2853
        %v2855 = vpop.f32.mrb[0].mxu0
        %v2856 = vpop.f32.mrb[0].mxu0
        %v2857 = vadd.f32 0.0, %v2856
        %v2858 = vpop.f32.mrb[0].mxu0
        %2859 = vmatprep.mubr.bf16.mxu0 0
        %2860 = vmatmul.mubr.bf16.gmra.mrb[0].mxu0 %v2801
        %v2861 = vpop.f32.mrb[0].mxu0
        %v2862 = vadd.f32 0.0, %v2861
        %v2863 = vpop.f32.mrb[0].mxu0
        %v2864 = vpop.f32.mrb[0].mxu0
        %v2865 = vadd.f32 0.0, %v2864
        %v2866 = vpop.f32.mrb[0].mxu0
        %2867 = vdwg.mxu0
        %v2868 = vadd.f32 %v2718, %v2838
        %v2869 = vadd.f32 %v2719, %v2841
        %v2870 = vadd.f32 %v2720, %v2846
        %v2871 = vadd.f32 %v2721, %v2849
        %v2872 = vadd.f32 %v2722, %v2854
        %v2873 = vadd.f32 %v2723, %v2857
        %v2874 = vadd.f32 %v2724, %v2862
        %v2875 = vadd.f32 %v2725, %v2865
        %s2876 = sadd.s32 %s22, 1
        %s2877 = smul.u32 %s2876, 8
        %s2878 = smul.addr %s2877, 4
        %s2879 = scalar_lea.vmem %s188, %s2878
        %v2880 = vld [vmem:[%s2879] sm:$0xf]
        %v2881 = vld [vmem:[%s2879 + $0x4] sm:$0xf]
        %v2882 = vld [vmem:[%s2879 + $0x8] sm:$0xf]
        %v2883 = vld [vmem:[%s2879 + $0xc] sm:$0xf]
        %v2884 = vld [vmem:[%s2879 + $0x10] sm:$0xf]
        %v2885 = vld [vmem:[%s2879 + $0x14] sm:$0xf]
        %v2886 = vld [vmem:[%s2879 + $0x18] sm:$0xf]
        %v2887 = vld [vmem:[%s2879 + $0x1c] sm:$0xf]
        %s2888 = scalar_lea.vmem %s1, 576
        %v2889 = vld [vmem:[%s2888] sm:$0xf]
        %v2890 = vld [vmem:[%s2888 + $0x4] sm:$0xf]
        %v2891 = vld [vmem:[%s2888 + $0x8] sm:$0xf]
        %v2892 = vld [vmem:[%s2888 + $0xc] sm:$0xf]
        %v2893 = vld [vmem:[%s2888 + $0x10] sm:$0xf]
        %v2894 = vld [vmem:[%s2888 + $0x14] sm:$0xf]
        %v2895 = vld [vmem:[%s2888 + $0x18] sm:$0xf]
        %v2896 = vld [vmem:[%s2888 + $0x1c] sm:$0xf]
        %v2905 = vunpack.c.l.b16 %v2880
        %v2906 = vunpack.c.l.b16 %v2881
        %v2907 = vunpack.c.l.b16 %v2882
        %v2908 = vunpack.c.l.b16 %v2883
        %v2909 = vunpack.c.l.b16 %v2884
        %v2910 = vunpack.c.l.b16 %v2885
        %v2911 = vunpack.c.l.b16 %v2886
        %v2912 = vunpack.c.l.b16 %v2887
        %v2913 = vpack.c.b16 %v2906, %v2905
        %v2914 = vpack.c.b16 %v2908, %v2907
        %v2915 = vpack.c.b16 %v2910, %v2909
        %v2916 = vpack.c.b16 %v2912, %v2911
        %v2925 = vunpack.c.l.b16 %v2889
        %v2926 = vunpack.c.l.b16 %v2890
        %v2927 = vunpack.c.l.b16 %v2891
        %v2928 = vunpack.c.l.b16 %v2892
        %v2929 = vunpack.c.l.b16 %v2893
        %v2930 = vunpack.c.l.b16 %v2894
        %v2931 = vunpack.c.l.b16 %v2895
        %v2932 = vunpack.c.l.b16 %v2896
        %v2933 = vpack.c.b16 %v2926, %v2925
        %v2934 = vpack.c.b16 %v2928, %v2927
        %v2935 = vpack.c.b16 %v2930, %v2929
        %v2936 = vpack.c.b16 %v2932, %v2931
        %v2942 = vsel %vm277, %v2913, 0
        %v2945 = vsel %vm277, %v2914, 0
        %v2948 = vsel %vm277, %v2915, 0
        %v2951 = vsel %vm277, %v2916, 0
        %2953 = vmatprep.subr.bf16.mxu0 0
        %2954 = vmatpush1.bf16.msra.mxu0 %v2933
        %2955 = vmatprep.subr.bf16.mxu0 0
        %2956 = vmatpush1.bf16.msra.mxu0 %v2934
        %2957 = vmatprep.subr.bf16.mxu0 0
        %2958 = vmatpush1.bf16.msra.mxu0 %v2935
        %2959 = vmatprep.subr.bf16.mxu0 0
        %2960 = vmatpush1.bf16.msra.mxu0 %v2936
        %2961 = vmatprep.subr.bf16.mxu0 0
        %2962 = vmatpush1.bf16.msra.mxu0 0
        %2963 = vmatprep.subr.bf16.mxu0 0
        %2964 = vmatpush1.bf16.msra.mxu0 0
        %2965 = vmatprep.subr.bf16.mxu0 0
        %2966 = vmatpush1.bf16.msra.mxu0 0
        %2967 = vmatprep.subr.bf16.mxu0 0
        %2968 = vmatpush1.bf16.msra.mxu0 0
        %2969 = vmatprep.subr.bf16.mxu0 0
        %2970 = vmatpush1.bf16.msra.mxu0 0
        %2971 = vmatprep.subr.bf16.mxu0 0
        %2972 = vmatpush1.bf16.msra.mxu0 0
        %2973 = vmatprep.subr.bf16.mxu0 0
        %2974 = vmatpush1.bf16.msra.mxu0 0
        %2975 = vmatprep.subr.bf16.mxu0 0
        %2976 = vmatpush1.bf16.msra.mxu0 0
        %2977 = vmatprep.subr.bf16.mxu0 0
        %2978 = vmatpush1.bf16.msra.mxu0 0
        %2979 = vmatprep.subr.bf16.mxu0 0
        %2980 = vmatpush1.bf16.msra.mxu0 0
        %2981 = vmatprep.subr.bf16.mxu0 0
        %2982 = vmatpush1.bf16.msra.mxu0 0
        %2983 = vmatprep.subr.bf16.mxu0 0
        %2984 = vmatpush1.bf16.msra.mxu0 0
        %2985 = vmatprep.mubr.bf16.mxu0 0
        %2986 = vmatmul.mubr.bf16.gmra.mrb[0].mxu0 %v2942
        %v2987 = vpop.f32.mrb[0].mxu0
        %v2988 = vadd.f32 0.0, %v2987
        %v2989 = vpop.f32.mrb[0].mxu0
        %v2990 = vpop.f32.mrb[0].mxu0
        %v2991 = vadd.f32 0.0, %v2990
        %v2992 = vpop.f32.mrb[0].mxu0
        %2993 = vmatprep.mubr.bf16.mxu0 0
        %2994 = vmatmul.mubr.bf16.gmra.mrb[0].mxu0 %v2945
        %v2995 = vpop.f32.mrb[0].mxu0
        %v2996 = vadd.f32 0.0, %v2995
        %v2997 = vpop.f32.mrb[0].mxu0
        %v2998 = vpop.f32.mrb[0].mxu0
        %v2999 = vadd.f32 0.0, %v2998
        %v3000 = vpop.f32.mrb[0].mxu0
        %3001 = vmatprep.mubr.bf16.mxu0 0
        %3002 = vmatmul.mubr.bf16.gmra.mrb[0].mxu0 %v2948
        %v3003 = vpop.f32.mrb[0].mxu0
        %v3004 = vadd.f32 0.0, %v3003
        %v3005 = vpop.f32.mrb[0].mxu0
        %v3006 = vpop.f32.mrb[0].mxu0
        %v3007 = vadd.f32 0.0, %v3006
        %v3008 = vpop.f32.mrb[0].mxu0
        %3009 = vmatprep.mubr.bf16.mxu0 0
        %3010 = vmatmul.mubr.bf16.gmra.mrb[0].mxu0 %v2951
        %v3011 = vpop.f32.mrb[0].mxu0
        %v3012 = vadd.f32 0.0, %v3011
        %v3013 = vpop.f32.mrb[0].mxu0
        %v3014 = vpop.f32.mrb[0].mxu0
        %v3015 = vadd.f32 0.0, %v3014
        %v3016 = vpop.f32.mrb[0].mxu0
        %3017 = vdwg.mxu0
        %v3018 = vadd.f32 %v2868, %v2988
        %v3019 = vadd.f32 %v2869, %v2991
        %v3020 = vadd.f32 %v2870, %v2996
        %v3021 = vadd.f32 %v2871, %v2999
        %v3022 = vadd.f32 %v2872, %v3004
        %v3023 = vadd.f32 %v2873, %v3007
        %v3024 = vadd.f32 %v2874, %v3012
        %v3025 = vadd.f32 %v2875, %v3015
        %s3026 = sadd.s32 %s22, 10
        %s3027 = smul.u32 %s3026, 8
        %s3028 = smul.addr %s3027, 4
        %s3029 = scalar_lea.vmem %s188, %s3028
        %v3030 = vld [vmem:[%s3029] sm:$0xf]
        %v3031 = vld [vmem:[%s3029 + $0x4] sm:$0xf]
        %v3032 = vld [vmem:[%s3029 + $0x8] sm:$0xf]
        %v3033 = vld [vmem:[%s3029 + $0xc] sm:$0xf]
        %v3034 = vld [vmem:[%s3029 + $0x10] sm:$0xf]
        %v3035 = vld [vmem:[%s3029 + $0x14] sm:$0xf]
        %v3036 = vld [vmem:[%s3029 + $0x18] sm:$0xf]
        %v3037 = vld [vmem:[%s3029 + $0x1c] sm:$0xf]
        %s3038 = scalar_lea.vmem %s1, 608
        %v3039 = vld [vmem:[%s3038] sm:$0xf]
        %v3040 = vld [vmem:[%s3038 + $0x4] sm:$0xf]
        %v3041 = vld [vmem:[%s3038 + $0x8] sm:$0xf]
        %v3042 = vld [vmem:[%s3038 + $0xc] sm:$0xf]
        %v3043 = vld [vmem:[%s3038 + $0x10] sm:$0xf]
        %v3044 = vld [vmem:[%s3038 + $0x14] sm:$0xf]
        %v3045 = vld [vmem:[%s3038 + $0x18] sm:$0xf]
        %v3046 = vld [vmem:[%s3038 + $0x1c] sm:$0xf]
        %v3055 = vunpack.c.l.b16 %v3030
        %v3056 = vunpack.c.l.b16 %v3031
        %v3057 = vunpack.c.l.b16 %v3032
        %v3058 = vunpack.c.l.b16 %v3033
        %v3059 = vunpack.c.l.b16 %v3034
        %v3060 = vunpack.c.l.b16 %v3035
        %v3061 = vunpack.c.l.b16 %v3036
        %v3062 = vunpack.c.l.b16 %v3037
        %v3063 = vpack.c.b16 %v3056, %v3055
        %v3064 = vpack.c.b16 %v3058, %v3057
        %v3065 = vpack.c.b16 %v3060, %v3059
        %v3066 = vpack.c.b16 %v3062, %v3061
        %v3075 = vunpack.c.l.b16 %v3039
        %v3076 = vunpack.c.l.b16 %v3040
        %v3077 = vunpack.c.l.b16 %v3041
        %v3078 = vunpack.c.l.b16 %v3042
        %v3079 = vunpack.c.l.b16 %v3043
        %v3080 = vunpack.c.l.b16 %v3044
        %v3081 = vunpack.c.l.b16 %v3045
        %v3082 = vunpack.c.l.b16 %v3046
        %v3083 = vpack.c.b16 %v3076, %v3075
        %v3084 = vpack.c.b16 %v3078, %v3077
        %v3085 = vpack.c.b16 %v3080, %v3079
        %v3086 = vpack.c.b16 %v3082, %v3081
        %v3092 = vsel %vm277, %v3063, 0
        %v3095 = vsel %vm277, %v3064, 0
        %v3098 = vsel %vm277, %v3065, 0
        %v3101 = vsel %vm277, %v3066, 0
        %3103 = vmatprep.subr.bf16.mxu0 0
        %3104 = vmatpush1.bf16.msra.mxu0 %v3083
        %3105 = vmatprep.subr.bf16.mxu0 0
        %3106 = vmatpush1.bf16.msra.mxu0 %v3084
        %3107 = vmatprep.subr.bf16.mxu0 0
        %3108 = vmatpush1.bf16.msra.mxu0 %v3085
        %3109 = vmatprep.subr.bf16.mxu0 0
        %3110 = vmatpush1.bf16.msra.mxu0 %v3086
        %3111 = vmatprep.subr.bf16.mxu0 0
        %3112 = vmatpush1.bf16.msra.mxu0 0
        %3113 = vmatprep.subr.bf16.mxu0 0
        %3114 = vmatpush1.bf16.msra.mxu0 0
        %3115 = vmatprep.subr.bf16.mxu0 0
        %3116 = vmatpush1.bf16.msra.mxu0 0
        %3117 = vmatprep.subr.bf16.mxu0 0
        %3118 = vmatpush1.bf16.msra.mxu0 0
        %3119 = vmatprep.subr.bf16.mxu0 0
        %3120 = vmatpush1.bf16.msra.mxu0 0
        %3121 = vmatprep.subr.bf16.mxu0 0
        %3122 = vmatpush1.bf16.msra.mxu0 0
        %3123 = vmatprep.subr.bf16.mxu0 0
        %3124 = vmatpush1.bf16.msra.mxu0 0
        %3125 = vmatprep.subr.bf16.mxu0 0
        %3126 = vmatpush1.bf16.msra.mxu0 0
        %3127 = vmatprep.subr.bf16.mxu0 0
        %3128 = vmatpush1.bf16.msra.mxu0 0
        %3129 = vmatprep.subr.bf16.mxu0 0
        %3130 = vmatpush1.bf16.msra.mxu0 0
        %3131 = vmatprep.subr.bf16.mxu0 0
        %3132 = vmatpush1.bf16.msra.mxu0 0
        %3133 = vmatprep.subr.bf16.mxu0 0
        %3134 = vmatpush1.bf16.msra.mxu0 0
        %3135 = vmatprep.mubr.bf16.mxu0 0
        %3136 = vmatmul.mubr.bf16.gmra.mrb[0].mxu0 %v3092
        %v3137 = vpop.f32.mrb[0].mxu0
        %v3138 = vadd.f32 0.0, %v3137
        %v3139 = vpop.f32.mrb[0].mxu0
        %v3140 = vpop.f32.mrb[0].mxu0
        %v3141 = vadd.f32 0.0, %v3140
        %v3142 = vpop.f32.mrb[0].mxu0
        %3143 = vmatprep.mubr.bf16.mxu0 0
        %3144 = vmatmul.mubr.bf16.gmra.mrb[0].mxu0 %v3095
        %v3145 = vpop.f32.mrb[0].mxu0
        %v3146 = vadd.f32 0.0, %v3145
        %v3147 = vpop.f32.mrb[0].mxu0
        %v3148 = vpop.f32.mrb[0].mxu0
        %v3149 = vadd.f32 0.0, %v3148
        %v3150 = vpop.f32.mrb[0].mxu0
        %3151 = vmatprep.mubr.bf16.mxu0 0
        %3152 = vmatmul.mubr.bf16.gmra.mrb[0].mxu0 %v3098
        %v3153 = vpop.f32.mrb[0].mxu0
        %v3154 = vadd.f32 0.0, %v3153
        %v3155 = vpop.f32.mrb[0].mxu0
        %v3156 = vpop.f32.mrb[0].mxu0
        %v3157 = vadd.f32 0.0, %v3156
        %v3158 = vpop.f32.mrb[0].mxu0
        %3159 = vmatprep.mubr.bf16.mxu0 0
        %3160 = vmatmul.mubr.bf16.gmra.mrb[0].mxu0 %v3101
        %v3161 = vpop.f32.mrb[0].mxu0
        %v3162 = vadd.f32 0.0, %v3161
        %v3163 = vpop.f32.mrb[0].mxu0
        %v3164 = vpop.f32.mrb[0].mxu0
        %v3165 = vadd.f32 0.0, %v3164
        %v3166 = vpop.f32.mrb[0].mxu0
        %3167 = vdwg.mxu0
        %v3168 = vadd.f32 %v3018, %v3138
        %v3169 = vadd.f32 %v3019, %v3141
        %v3170 = vadd.f32 %v3020, %v3146
        %v3171 = vadd.f32 %v3021, %v3149
        %v3172 = vadd.f32 %v3022, %v3154
        %v3173 = vadd.f32 %v3023, %v3157
        %v3174 = vadd.f32 %v3024, %v3162
        %v3175 = vadd.f32 %v3025, %v3165
        %s3176 = sadd.s32 %s22, 19
        %s3177 = smul.u32 %s3176, 8
        %s3178 = smul.addr %s3177, 4
        %s3179 = scalar_lea.vmem %s188, %s3178
        %v3180 = vld [vmem:[%s3179] sm:$0xf]
        %v3181 = vld [vmem:[%s3179 + $0x4] sm:$0xf]
        %v3182 = vld [vmem:[%s3179 + $0x8] sm:$0xf]
        %v3183 = vld [vmem:[%s3179 + $0xc] sm:$0xf]
        %v3184 = vld [vmem:[%s3179 + $0x10] sm:$0xf]
        %v3185 = vld [vmem:[%s3179 + $0x14] sm:$0xf]
        %v3186 = vld [vmem:[%s3179 + $0x18] sm:$0xf]
        %v3187 = vld [vmem:[%s3179 + $0x1c] sm:$0xf]
        %s3188 = scalar_lea.vmem %s1, 640
        %v3189 = vld [vmem:[%s3188] sm:$0xf]
        %v3190 = vld [vmem:[%s3188 + $0x4] sm:$0xf]
        %v3191 = vld [vmem:[%s3188 + $0x8] sm:$0xf]
        %v3192 = vld [vmem:[%s3188 + $0xc] sm:$0xf]
        %v3193 = vld [vmem:[%s3188 + $0x10] sm:$0xf]
        %v3194 = vld [vmem:[%s3188 + $0x14] sm:$0xf]
        %v3195 = vld [vmem:[%s3188 + $0x18] sm:$0xf]
        %v3196 = vld [vmem:[%s3188 + $0x1c] sm:$0xf]
        %v3205 = vunpack.c.l.b16 %v3180
        %v3206 = vunpack.c.l.b16 %v3181
        %v3207 = vunpack.c.l.b16 %v3182
        %v3208 = vunpack.c.l.b16 %v3183
        %v3209 = vunpack.c.l.b16 %v3184
        %v3210 = vunpack.c.l.b16 %v3185
        %v3211 = vunpack.c.l.b16 %v3186
        %v3212 = vunpack.c.l.b16 %v3187
        %v3213 = vpack.c.b16 %v3206, %v3205
        %v3214 = vpack.c.b16 %v3208, %v3207
        %v3215 = vpack.c.b16 %v3210, %v3209
        %v3216 = vpack.c.b16 %v3212, %v3211
        %v3225 = vunpack.c.l.b16 %v3189
        %v3226 = vunpack.c.l.b16 %v3190
        %v3227 = vunpack.c.l.b16 %v3191
        %v3228 = vunpack.c.l.b16 %v3192
        %v3229 = vunpack.c.l.b16 %v3193
        %v3230 = vunpack.c.l.b16 %v3194
        %v3231 = vunpack.c.l.b16 %v3195
        %v3232 = vunpack.c.l.b16 %v3196
        %v3233 = vpack.c.b16 %v3226, %v3225
        %v3234 = vpack.c.b16 %v3228, %v3227
        %v3235 = vpack.c.b16 %v3230, %v3229
        %v3236 = vpack.c.b16 %v3232, %v3231
        %v3242 = vsel %vm277, %v3213, 0
        %v3245 = vsel %vm277, %v3214, 0
        %v3248 = vsel %vm277, %v3215, 0
        %v3251 = vsel %vm277, %v3216, 0
        %3253 = vmatprep.subr.bf16.mxu0 0
        %3254 = vmatpush1.bf16.msra.mxu0 %v3233
        %3255 = vmatprep.subr.bf16.mxu0 0
        %3256 = vmatpush1.bf16.msra.mxu0 %v3234
        %3257 = vmatprep.subr.bf16.mxu0 0
        %3258 = vmatpush1.bf16.msra.mxu0 %v3235
        %3259 = vmatprep.subr.bf16.mxu0 0
        %3260 = vmatpush1.bf16.msra.mxu0 %v3236
        %3261 = vmatprep.subr.bf16.mxu0 0
        %3262 = vmatpush1.bf16.msra.mxu0 0
        %3263 = vmatprep.subr.bf16.mxu0 0
        %3264 = vmatpush1.bf16.msra.mxu0 0
        %3265 = vmatprep.subr.bf16.mxu0 0
        %3266 = vmatpush1.bf16.msra.mxu0 0
        %3267 = vmatprep.subr.bf16.mxu0 0
        %3268 = vmatpush1.bf16.msra.mxu0 0
        %3269 = vmatprep.subr.bf16.mxu0 0
        %3270 = vmatpush1.bf16.msra.mxu0 0
        %3271 = vmatprep.subr.bf16.mxu0 0
        %3272 = vmatpush1.bf16.msra.mxu0 0
        %3273 = vmatprep.subr.bf16.mxu0 0
        %3274 = vmatpush1.bf16.msra.mxu0 0
        %3275 = vmatprep.subr.bf16.mxu0 0
        %3276 = vmatpush1.bf16.msra.mxu0 0
        %3277 = vmatprep.subr.bf16.mxu0 0
        %3278 = vmatpush1.bf16.msra.mxu0 0
        %3279 = vmatprep.subr.bf16.mxu0 0
        %3280 = vmatpush1.bf16.msra.mxu0 0
        %3281 = vmatprep.subr.bf16.mxu0 0
        %3282 = vmatpush1.bf16.msra.mxu0 0
        %3283 = vmatprep.subr.bf16.mxu0 0
        %3284 = vmatpush1.bf16.msra.mxu0 0
        %3285 = vmatprep.mubr.bf16.mxu0 0
        %3286 = vmatmul.mubr.bf16.gmra.mrb[0].mxu0 %v3242
        %v3287 = vpop.f32.mrb[0].mxu0
        %v3288 = vadd.f32 0.0, %v3287
        %v3289 = vpop.f32.mrb[0].mxu0
        %v3290 = vpop.f32.mrb[0].mxu0
        %v3291 = vadd.f32 0.0, %v3290
        %v3292 = vpop.f32.mrb[0].mxu0
        %3293 = vmatprep.mubr.bf16.mxu0 0
        %3294 = vmatmul.mubr.bf16.gmra.mrb[0].mxu0 %v3245
        %v3295 = vpop.f32.mrb[0].mxu0
        %v3296 = vadd.f32 0.0, %v3295
        %v3297 = vpop.f32.mrb[0].mxu0
        %v3298 = vpop.f32.mrb[0].mxu0
        %v3299 = vadd.f32 0.0, %v3298
        %v3300 = vpop.f32.mrb[0].mxu0
        %3301 = vmatprep.mubr.bf16.mxu0 0
        %3302 = vmatmul.mubr.bf16.gmra.mrb[0].mxu0 %v3248
        %v3303 = vpop.f32.mrb[0].mxu0
        %v3304 = vadd.f32 0.0, %v3303
        %v3305 = vpop.f32.mrb[0].mxu0
        %v3306 = vpop.f32.mrb[0].mxu0
        %v3307 = vadd.f32 0.0, %v3306
        %v3308 = vpop.f32.mrb[0].mxu0
        %3309 = vmatprep.mubr.bf16.mxu0 0
        %3310 = vmatmul.mubr.bf16.gmra.mrb[0].mxu0 %v3251
        %v3311 = vpop.f32.mrb[0].mxu0
        %v3312 = vadd.f32 0.0, %v3311
        %v3313 = vpop.f32.mrb[0].mxu0
        %v3314 = vpop.f32.mrb[0].mxu0
        %v3315 = vadd.f32 0.0, %v3314
        %v3316 = vpop.f32.mrb[0].mxu0
        %3317 = vdwg.mxu0
        %v3318 = vadd.f32 %v3168, %v3288
        %v3319 = vadd.f32 %v3169, %v3291
        %v3320 = vadd.f32 %v3170, %v3296
        %v3321 = vadd.f32 %v3171, %v3299
        %v3322 = vadd.f32 %v3172, %v3304
        %v3323 = vadd.f32 %v3173, %v3307
        %v3324 = vadd.f32 %v3174, %v3312
        %v3325 = vadd.f32 %v3175, %v3315
        %s3326 = sadd.s32 %s22, 28
        %s3327 = smul.u32 %s3326, 8
        %s3328 = smul.addr %s3327, 4
        %s3329 = scalar_lea.vmem %s188, %s3328
        %v3330 = vld [vmem:[%s3329] sm:$0xf]
        %v3331 = vld [vmem:[%s3329 + $0x4] sm:$0xf]
        %v3332 = vld [vmem:[%s3329 + $0x8] sm:$0xf]
        %v3333 = vld [vmem:[%s3329 + $0xc] sm:$0xf]
        %v3334 = vld [vmem:[%s3329 + $0x10] sm:$0xf]
        %v3335 = vld [vmem:[%s3329 + $0x14] sm:$0xf]
        %v3336 = vld [vmem:[%s3329 + $0x18] sm:$0xf]
        %v3337 = vld [vmem:[%s3329 + $0x1c] sm:$0xf]
        %s3338 = scalar_lea.vmem %s1, 672
        %v3339 = vld [vmem:[%s3338] sm:$0xf]
        %v3340 = vld [vmem:[%s3338 + $0x4] sm:$0xf]
        %v3341 = vld [vmem:[%s3338 + $0x8] sm:$0xf]
        %v3342 = vld [vmem:[%s3338 + $0xc] sm:$0xf]
        %v3343 = vld [vmem:[%s3338 + $0x10] sm:$0xf]
        %v3344 = vld [vmem:[%s3338 + $0x14] sm:$0xf]
        %v3345 = vld [vmem:[%s3338 + $0x18] sm:$0xf]
        %v3346 = vld [vmem:[%s3338 + $0x1c] sm:$0xf]
        %v3355 = vunpack.c.l.b16 %v3330
        %v3356 = vunpack.c.l.b16 %v3331
        %v3357 = vunpack.c.l.b16 %v3332
        %v3358 = vunpack.c.l.b16 %v3333
        %v3359 = vunpack.c.l.b16 %v3334
        %v3360 = vunpack.c.l.b16 %v3335
        %v3361 = vunpack.c.l.b16 %v3336
        %v3362 = vunpack.c.l.b16 %v3337
        %v3363 = vpack.c.b16 %v3356, %v3355
        %v3364 = vpack.c.b16 %v3358, %v3357
        %v3365 = vpack.c.b16 %v3360, %v3359
        %v3366 = vpack.c.b16 %v3362, %v3361
        %v3375 = vunpack.c.l.b16 %v3339
        %v3376 = vunpack.c.l.b16 %v3340
        %v3377 = vunpack.c.l.b16 %v3341
        %v3378 = vunpack.c.l.b16 %v3342
        %v3379 = vunpack.c.l.b16 %v3343
        %v3380 = vunpack.c.l.b16 %v3344
        %v3381 = vunpack.c.l.b16 %v3345
        %v3382 = vunpack.c.l.b16 %v3346
        %v3383 = vpack.c.b16 %v3376, %v3375
        %v3384 = vpack.c.b16 %v3378, %v3377
        %v3385 = vpack.c.b16 %v3380, %v3379
        %v3386 = vpack.c.b16 %v3382, %v3381
        %v3392 = vsel %vm277, %v3363, 0
        %v3395 = vsel %vm277, %v3364, 0
        %v3398 = vsel %vm277, %v3365, 0
        %v3401 = vsel %vm277, %v3366, 0
        %3403 = vmatprep.subr.bf16.mxu0 0
        %3404 = vmatpush1.bf16.msra.mxu0 %v3383
        %3405 = vmatprep.subr.bf16.mxu0 0
        %3406 = vmatpush1.bf16.msra.mxu0 %v3384
        %3407 = vmatprep.subr.bf16.mxu0 0
        %3408 = vmatpush1.bf16.msra.mxu0 %v3385
        %3409 = vmatprep.subr.bf16.mxu0 0
        %3410 = vmatpush1.bf16.msra.mxu0 %v3386
        %3411 = vmatprep.subr.bf16.mxu0 0
        %3412 = vmatpush1.bf16.msra.mxu0 0
        %3413 = vmatprep.subr.bf16.mxu0 0
        %3414 = vmatpush1.bf16.msra.mxu0 0
        %3415 = vmatprep.subr.bf16.mxu0 0
        %3416 = vmatpush1.bf16.msra.mxu0 0
        %3417 = vmatprep.subr.bf16.mxu0 0
        %3418 = vmatpush1.bf16.msra.mxu0 0
        %3419 = vmatprep.subr.bf16.mxu0 0
        %3420 = vmatpush1.bf16.msra.mxu0 0
        %3421 = vmatprep.subr.bf16.mxu0 0
        %3422 = vmatpush1.bf16.msra.mxu0 0
        %3423 = vmatprep.subr.bf16.mxu0 0
        %3424 = vmatpush1.bf16.msra.mxu0 0
        %3425 = vmatprep.subr.bf16.mxu0 0
        %3426 = vmatpush1.bf16.msra.mxu0 0
        %3427 = vmatprep.subr.bf16.mxu0 0
        %3428 = vmatpush1.bf16.msra.mxu0 0
        %3429 = vmatprep.subr.bf16.mxu0 0
        %3430 = vmatpush1.bf16.msra.mxu0 0
        %3431 = vmatprep.subr.bf16.mxu0 0
        %3432 = vmatpush1.bf16.msra.mxu0 0
        %3433 = vmatprep.subr.bf16.mxu0 0
        %3434 = vmatpush1.bf16.msra.mxu0 0
        %3435 = vmatprep.mubr.bf16.mxu0 0
        %3436 = vmatmul.mubr.bf16.gmra.mrb[0].mxu0 %v3392
        %v3437 = vpop.f32.mrb[0].mxu0
        %v3438 = vadd.f32 0.0, %v3437
        %v3439 = vpop.f32.mrb[0].mxu0
        %v3440 = vpop.f32.mrb[0].mxu0
        %v3441 = vadd.f32 0.0, %v3440
        %v3442 = vpop.f32.mrb[0].mxu0
        %3443 = vmatprep.mubr.bf16.mxu0 0
        %3444 = vmatmul.mubr.bf16.gmra.mrb[0].mxu0 %v3395
        %v3445 = vpop.f32.mrb[0].mxu0
        %v3446 = vadd.f32 0.0, %v3445
        %v3447 = vpop.f32.mrb[0].mxu0
        %v3448 = vpop.f32.mrb[0].mxu0
        %v3449 = vadd.f32 0.0, %v3448
        %v3450 = vpop.f32.mrb[0].mxu0
        %3451 = vmatprep.mubr.bf16.mxu0 0
        %3452 = vmatmul.mubr.bf16.gmra.mrb[0].mxu0 %v3398
        %v3453 = vpop.f32.mrb[0].mxu0
        %v3454 = vadd.f32 0.0, %v3453
        %v3455 = vpop.f32.mrb[0].mxu0
        %v3456 = vpop.f32.mrb[0].mxu0
        %v3457 = vadd.f32 0.0, %v3456
        %v3458 = vpop.f32.mrb[0].mxu0
        %3459 = vmatprep.mubr.bf16.mxu0 0
        %3460 = vmatmul.mubr.bf16.gmra.mrb[0].mxu0 %v3401
        %v3461 = vpop.f32.mrb[0].mxu0
        %v3462 = vadd.f32 0.0, %v3461
        %v3463 = vpop.f32.mrb[0].mxu0
        %v3464 = vpop.f32.mrb[0].mxu0
        %v3465 = vadd.f32 0.0, %v3464
        %v3466 = vpop.f32.mrb[0].mxu0
        %3467 = vdwg.mxu0
        %v3468 = vadd.f32 %v3318, %v3438
        %v3469 = vadd.f32 %v3319, %v3441
        %v3470 = vadd.f32 %v3320, %v3446
        %v3471 = vadd.f32 %v3321, %v3449
        %v3472 = vadd.f32 %v3322, %v3454
        %v3473 = vadd.f32 %v3323, %v3457
        %v3474 = vadd.f32 %v3324, %v3462
        %v3475 = vadd.f32 %v3325, %v3465
        %s3476 = sadd.s32 %s22, 37
        %s3477 = smul.u32 %s3476, 8
        %s3478 = smul.addr %s3477, 4
        %s3479 = scalar_lea.vmem %s188, %s3478
        %v3480 = vld [vmem:[%s3479] sm:$0xf]
        %v3481 = vld [vmem:[%s3479 + $0x4] sm:$0xf]
        %v3482 = vld [vmem:[%s3479 + $0x8] sm:$0xf]
        %v3483 = vld [vmem:[%s3479 + $0xc] sm:$0xf]
        %v3484 = vld [vmem:[%s3479 + $0x10] sm:$0xf]
        %v3485 = vld [vmem:[%s3479 + $0x14] sm:$0xf]
        %v3486 = vld [vmem:[%s3479 + $0x18] sm:$0xf]
        %v3487 = vld [vmem:[%s3479 + $0x1c] sm:$0xf]
        %s3488 = scalar_lea.vmem %s1, 704
        %v3489 = vld [vmem:[%s3488] sm:$0xf]
        %v3490 = vld [vmem:[%s3488 + $0x4] sm:$0xf]
        %v3491 = vld [vmem:[%s3488 + $0x8] sm:$0xf]
        %v3492 = vld [vmem:[%s3488 + $0xc] sm:$0xf]
        %v3493 = vld [vmem:[%s3488 + $0x10] sm:$0xf]
        %v3494 = vld [vmem:[%s3488 + $0x14] sm:$0xf]
        %v3495 = vld [vmem:[%s3488 + $0x18] sm:$0xf]
        %v3496 = vld [vmem:[%s3488 + $0x1c] sm:$0xf]
        %v3505 = vunpack.c.l.b16 %v3480
        %v3506 = vunpack.c.l.b16 %v3481
        %v3507 = vunpack.c.l.b16 %v3482
        %v3508 = vunpack.c.l.b16 %v3483
        %v3509 = vunpack.c.l.b16 %v3484
        %v3510 = vunpack.c.l.b16 %v3485
        %v3511 = vunpack.c.l.b16 %v3486
        %v3512 = vunpack.c.l.b16 %v3487
        %v3513 = vpack.c.b16 %v3506, %v3505
        %v3514 = vpack.c.b16 %v3508, %v3507
        %v3515 = vpack.c.b16 %v3510, %v3509
        %v3516 = vpack.c.b16 %v3512, %v3511
        %v3525 = vunpack.c.l.b16 %v3489
        %v3526 = vunpack.c.l.b16 %v3490
        %v3527 = vunpack.c.l.b16 %v3491
        %v3528 = vunpack.c.l.b16 %v3492
        %v3529 = vunpack.c.l.b16 %v3493
        %v3530 = vunpack.c.l.b16 %v3494
        %v3531 = vunpack.c.l.b16 %v3495
        %v3532 = vunpack.c.l.b16 %v3496
        %v3533 = vpack.c.b16 %v3526, %v3525
        %v3534 = vpack.c.b16 %v3528, %v3527
        %v3535 = vpack.c.b16 %v3530, %v3529
        %v3536 = vpack.c.b16 %v3532, %v3531
        %v3542 = vsel %vm277, %v3513, 0
        %v3545 = vsel %vm277, %v3514, 0
        %v3548 = vsel %vm277, %v3515, 0
        %v3551 = vsel %vm277, %v3516, 0
        %3553 = vmatprep.subr.bf16.mxu0 0
        %3554 = vmatpush1.bf16.msra.mxu0 %v3533
        %3555 = vmatprep.subr.bf16.mxu0 0
        %3556 = vmatpush1.bf16.msra.mxu0 %v3534
        %3557 = vmatprep.subr.bf16.mxu0 0
        %3558 = vmatpush1.bf16.msra.mxu0 %v3535
        %3559 = vmatprep.subr.bf16.mxu0 0
        %3560 = vmatpush1.bf16.msra.mxu0 %v3536
        %3561 = vmatprep.subr.bf16.mxu0 0
        %3562 = vmatpush1.bf16.msra.mxu0 0
        %3563 = vmatprep.subr.bf16.mxu0 0
        %3564 = vmatpush1.bf16.msra.mxu0 0
        %3565 = vmatprep.subr.bf16.mxu0 0
        %3566 = vmatpush1.bf16.msra.mxu0 0
        %3567 = vmatprep.subr.bf16.mxu0 0
        %3568 = vmatpush1.bf16.msra.mxu0 0
        %3569 = vmatprep.subr.bf16.mxu0 0
        %3570 = vmatpush1.bf16.msra.mxu0 0
        %3571 = vmatprep.subr.bf16.mxu0 0
        %3572 = vmatpush1.bf16.msra.mxu0 0
        %3573 = vmatprep.subr.bf16.mxu0 0
        %3574 = vmatpush1.bf16.msra.mxu0 0
        %3575 = vmatprep.subr.bf16.mxu0 0
        %3576 = vmatpush1.bf16.msra.mxu0 0
        %3577 = vmatprep.subr.bf16.mxu0 0
        %3578 = vmatpush1.bf16.msra.mxu0 0
        %3579 = vmatprep.subr.bf16.mxu0 0
        %3580 = vmatpush1.bf16.msra.mxu0 0
        %3581 = vmatprep.subr.bf16.mxu0 0
        %3582 = vmatpush1.bf16.msra.mxu0 0
        %3583 = vmatprep.subr.bf16.mxu0 0
        %3584 = vmatpush1.bf16.msra.mxu0 0
        %3585 = vmatprep.mubr.bf16.mxu0 0
        %3586 = vmatmul.mubr.bf16.gmra.mrb[0].mxu0 %v3542
        %v3587 = vpop.f32.mrb[0].mxu0
        %v3588 = vadd.f32 0.0, %v3587
        %v3589 = vpop.f32.mrb[0].mxu0
        %v3590 = vpop.f32.mrb[0].mxu0
        %v3591 = vadd.f32 0.0, %v3590
        %v3592 = vpop.f32.mrb[0].mxu0
        %3593 = vmatprep.mubr.bf16.mxu0 0
        %3594 = vmatmul.mubr.bf16.gmra.mrb[0].mxu0 %v3545
        %v3595 = vpop.f32.mrb[0].mxu0
        %v3596 = vadd.f32 0.0, %v3595
        %v3597 = vpop.f32.mrb[0].mxu0
        %v3598 = vpop.f32.mrb[0].mxu0
        %v3599 = vadd.f32 0.0, %v3598
        %v3600 = vpop.f32.mrb[0].mxu0
        %3601 = vmatprep.mubr.bf16.mxu0 0
        %3602 = vmatmul.mubr.bf16.gmra.mrb[0].mxu0 %v3548
        %v3603 = vpop.f32.mrb[0].mxu0
        %v3604 = vadd.f32 0.0, %v3603
        %v3605 = vpop.f32.mrb[0].mxu0
        %v3606 = vpop.f32.mrb[0].mxu0
        %v3607 = vadd.f32 0.0, %v3606
        %v3608 = vpop.f32.mrb[0].mxu0
        %3609 = vmatprep.mubr.bf16.mxu0 0
        %3610 = vmatmul.mubr.bf16.gmra.mrb[0].mxu0 %v3551
        %v3611 = vpop.f32.mrb[0].mxu0
        %v3612 = vadd.f32 0.0, %v3611
        %v3613 = vpop.f32.mrb[0].mxu0
        %v3614 = vpop.f32.mrb[0].mxu0
        %v3615 = vadd.f32 0.0, %v3614
        %v3616 = vpop.f32.mrb[0].mxu0
        %3617 = vdwg.mxu0
        %v3618 = vadd.f32 %v3468, %v3588
        %v3619 = vadd.f32 %v3469, %v3591
        %v3620 = vadd.f32 %v3470, %v3596
        %v3621 = vadd.f32 %v3471, %v3599
        %v3622 = vadd.f32 %v3472, %v3604
        %v3623 = vadd.f32 %v3473, %v3607
        %v3624 = vadd.f32 %v3474, %v3612
        %v3625 = vadd.f32 %v3475, %v3615
        %s3626 = sadd.s32 %s22, 46
        %s3627 = smul.u32 %s3626, 8
        %s3628 = smul.addr %s3627, 4
        %s3629 = scalar_lea.vmem %s188, %s3628
        %v3630 = vld [vmem:[%s3629] sm:$0xf]
        %v3631 = vld [vmem:[%s3629 + $0x4] sm:$0xf]
        %v3632 = vld [vmem:[%s3629 + $0x8] sm:$0xf]
        %v3633 = vld [vmem:[%s3629 + $0xc] sm:$0xf]
        %v3634 = vld [vmem:[%s3629 + $0x10] sm:$0xf]
        %v3635 = vld [vmem:[%s3629 + $0x14] sm:$0xf]
        %v3636 = vld [vmem:[%s3629 + $0x18] sm:$0xf]
        %v3637 = vld [vmem:[%s3629 + $0x1c] sm:$0xf]
        %s3638 = scalar_lea.vmem %s1, 736
        %v3639 = vld [vmem:[%s3638] sm:$0xf]
        %v3640 = vld [vmem:[%s3638 + $0x4] sm:$0xf]
        %v3641 = vld [vmem:[%s3638 + $0x8] sm:$0xf]
        %v3642 = vld [vmem:[%s3638 + $0xc] sm:$0xf]
        %v3643 = vld [vmem:[%s3638 + $0x10] sm:$0xf]
        %v3644 = vld [vmem:[%s3638 + $0x14] sm:$0xf]
        %v3645 = vld [vmem:[%s3638 + $0x18] sm:$0xf]
        %v3646 = vld [vmem:[%s3638 + $0x1c] sm:$0xf]
        %v3655 = vunpack.c.l.b16 %v3630
        %v3656 = vunpack.c.l.b16 %v3631
        %v3657 = vunpack.c.l.b16 %v3632
        %v3658 = vunpack.c.l.b16 %v3633
        %v3659 = vunpack.c.l.b16 %v3634
        %v3660 = vunpack.c.l.b16 %v3635
        %v3661 = vunpack.c.l.b16 %v3636
        %v3662 = vunpack.c.l.b16 %v3637
        %v3663 = vpack.c.b16 %v3656, %v3655
        %v3664 = vpack.c.b16 %v3658, %v3657
        %v3665 = vpack.c.b16 %v3660, %v3659
        %v3666 = vpack.c.b16 %v3662, %v3661
        %v3675 = vunpack.c.l.b16 %v3639
        %v3676 = vunpack.c.l.b16 %v3640
        %v3677 = vunpack.c.l.b16 %v3641
        %v3678 = vunpack.c.l.b16 %v3642
        %v3679 = vunpack.c.l.b16 %v3643
        %v3680 = vunpack.c.l.b16 %v3644
        %v3681 = vunpack.c.l.b16 %v3645
        %v3682 = vunpack.c.l.b16 %v3646
        %v3683 = vpack.c.b16 %v3676, %v3675
        %v3684 = vpack.c.b16 %v3678, %v3677
        %v3685 = vpack.c.b16 %v3680, %v3679
        %v3686 = vpack.c.b16 %v3682, %v3681
        %v3692 = vsel %vm277, %v3663, 0
        %v3695 = vsel %vm277, %v3664, 0
        %v3698 = vsel %vm277, %v3665, 0
        %v3701 = vsel %vm277, %v3666, 0
        %3703 = vmatprep.subr.bf16.mxu0 0
        %3704 = vmatpush1.bf16.msra.mxu0 %v3683
        %3705 = vmatprep.subr.bf16.mxu0 0
        %3706 = vmatpush1.bf16.msra.mxu0 %v3684
        %3707 = vmatprep.subr.bf16.mxu0 0
        %3708 = vmatpush1.bf16.msra.mxu0 %v3685
        %3709 = vmatprep.subr.bf16.mxu0 0
        %3710 = vmatpush1.bf16.msra.mxu0 %v3686
        %3711 = vmatprep.subr.bf16.mxu0 0
        %3712 = vmatpush1.bf16.msra.mxu0 0
        %3713 = vmatprep.subr.bf16.mxu0 0
        %3714 = vmatpush1.bf16.msra.mxu0 0
        %3715 = vmatprep.subr.bf16.mxu0 0
        %3716 = vmatpush1.bf16.msra.mxu0 0
        %3717 = vmatprep.subr.bf16.mxu0 0
        %3718 = vmatpush1.bf16.msra.mxu0 0
        %3719 = vmatprep.subr.bf16.mxu0 0
        %3720 = vmatpush1.bf16.msra.mxu0 0
        %3721 = vmatprep.subr.bf16.mxu0 0
        %3722 = vmatpush1.bf16.msra.mxu0 0
        %3723 = vmatprep.subr.bf16.mxu0 0
        %3724 = vmatpush1.bf16.msra.mxu0 0
        %3725 = vmatprep.subr.bf16.mxu0 0
        %3726 = vmatpush1.bf16.msra.mxu0 0
        %3727 = vmatprep.subr.bf16.mxu0 0
        %3728 = vmatpush1.bf16.msra.mxu0 0
        %3729 = vmatprep.subr.bf16.mxu0 0
        %3730 = vmatpush1.bf16.msra.mxu0 0
        %3731 = vmatprep.subr.bf16.mxu0 0
        %3732 = vmatpush1.bf16.msra.mxu0 0
        %3733 = vmatprep.subr.bf16.mxu0 0
        %3734 = vmatpush1.bf16.msra.mxu0 0
        %3735 = vmatprep.mubr.bf16.mxu0 0
        %3736 = vmatmul.mubr.bf16.gmra.mrb[0].mxu0 %v3692
        %v3737 = vpop.f32.mrb[0].mxu0
        %v3738 = vadd.f32 0.0, %v3737
        %v3739 = vpop.f32.mrb[0].mxu0
        %v3740 = vpop.f32.mrb[0].mxu0
        %v3741 = vadd.f32 0.0, %v3740
        %v3742 = vpop.f32.mrb[0].mxu0
        %3743 = vmatprep.mubr.bf16.mxu0 0
        %3744 = vmatmul.mubr.bf16.gmra.mrb[0].mxu0 %v3695
        %v3745 = vpop.f32.mrb[0].mxu0
        %v3746 = vadd.f32 0.0, %v3745
        %v3747 = vpop.f32.mrb[0].mxu0
        %v3748 = vpop.f32.mrb[0].mxu0
        %v3749 = vadd.f32 0.0, %v3748
        %v3750 = vpop.f32.mrb[0].mxu0
        %3751 = vmatprep.mubr.bf16.mxu0 0
        %3752 = vmatmul.mubr.bf16.gmra.mrb[0].mxu0 %v3698
        %v3753 = vpop.f32.mrb[0].mxu0
        %v3754 = vadd.f32 0.0, %v3753
        %v3755 = vpop.f32.mrb[0].mxu0
        %v3756 = vpop.f32.mrb[0].mxu0
        %v3757 = vadd.f32 0.0, %v3756
        %v3758 = vpop.f32.mrb[0].mxu0
        %3759 = vmatprep.mubr.bf16.mxu0 0
        %3760 = vmatmul.mubr.bf16.gmra.mrb[0].mxu0 %v3701
        %v3761 = vpop.f32.mrb[0].mxu0
        %v3762 = vadd.f32 0.0, %v3761
        %v3763 = vpop.f32.mrb[0].mxu0
        %v3764 = vpop.f32.mrb[0].mxu0
        %v3765 = vadd.f32 0.0, %v3764
        %v3766 = vpop.f32.mrb[0].mxu0
        %3767 = vdwg.mxu0
        %v3768 = vadd.f32 %v3618, %v3738
        %v3769 = vadd.f32 %v3619, %v3741
        %v3770 = vadd.f32 %v3620, %v3746
        %v3771 = vadd.f32 %v3621, %v3749
        %v3772 = vadd.f32 %v3622, %v3754
        %v3773 = vadd.f32 %v3623, %v3757
        %v3774 = vadd.f32 %v3624, %v3762
        %v3775 = vadd.f32 %v3625, %v3765
        %s3776 = sadd.s32 %s22, 55
        %s3777 = smul.u32 %s3776, 8
        %s3778 = smul.addr %s3777, 4
        %s3779 = scalar_lea.vmem %s188, %s3778
        %v3780 = vld [vmem:[%s3779] sm:$0xf]
        %v3781 = vld [vmem:[%s3779 + $0x4] sm:$0xf]
        %v3782 = vld [vmem:[%s3779 + $0x8] sm:$0xf]
        %v3783 = vld [vmem:[%s3779 + $0xc] sm:$0xf]
        %v3784 = vld [vmem:[%s3779 + $0x10] sm:$0xf]
        %v3785 = vld [vmem:[%s3779 + $0x14] sm:$0xf]
        %v3786 = vld [vmem:[%s3779 + $0x18] sm:$0xf]
        %v3787 = vld [vmem:[%s3779 + $0x1c] sm:$0xf]
        %s3788 = scalar_lea.vmem %s1, 768
        %v3789 = vld [vmem:[%s3788] sm:$0xf]
        %v3790 = vld [vmem:[%s3788 + $0x4] sm:$0xf]
        %v3791 = vld [vmem:[%s3788 + $0x8] sm:$0xf]
        %v3792 = vld [vmem:[%s3788 + $0xc] sm:$0xf]
        %v3793 = vld [vmem:[%s3788 + $0x10] sm:$0xf]
        %v3794 = vld [vmem:[%s3788 + $0x14] sm:$0xf]
        %v3795 = vld [vmem:[%s3788 + $0x18] sm:$0xf]
        %v3796 = vld [vmem:[%s3788 + $0x1c] sm:$0xf]
        %v3805 = vunpack.c.l.b16 %v3780
        %v3806 = vunpack.c.l.b16 %v3781
        %v3807 = vunpack.c.l.b16 %v3782
        %v3808 = vunpack.c.l.b16 %v3783
        %v3809 = vunpack.c.l.b16 %v3784
        %v3810 = vunpack.c.l.b16 %v3785
        %v3811 = vunpack.c.l.b16 %v3786
        %v3812 = vunpack.c.l.b16 %v3787
        %v3813 = vpack.c.b16 %v3806, %v3805
        %v3814 = vpack.c.b16 %v3808, %v3807
        %v3815 = vpack.c.b16 %v3810, %v3809
        %v3816 = vpack.c.b16 %v3812, %v3811
        %v3825 = vunpack.c.l.b16 %v3789
        %v3826 = vunpack.c.l.b16 %v3790
        %v3827 = vunpack.c.l.b16 %v3791
        %v3828 = vunpack.c.l.b16 %v3792
        %v3829 = vunpack.c.l.b16 %v3793
        %v3830 = vunpack.c.l.b16 %v3794
        %v3831 = vunpack.c.l.b16 %v3795
        %v3832 = vunpack.c.l.b16 %v3796
        %v3833 = vpack.c.b16 %v3826, %v3825
        %v3834 = vpack.c.b16 %v3828, %v3827
        %v3835 = vpack.c.b16 %v3830, %v3829
        %v3836 = vpack.c.b16 %v3832, %v3831
        %v3842 = vsel %vm277, %v3813, 0
        %v3845 = vsel %vm277, %v3814, 0
        %v3848 = vsel %vm277, %v3815, 0
        %v3851 = vsel %vm277, %v3816, 0
        %3853 = vmatprep.subr.bf16.mxu0 0
        %3854 = vmatpush1.bf16.msra.mxu0 %v3833
        %3855 = vmatprep.subr.bf16.mxu0 0
        %3856 = vmatpush1.bf16.msra.mxu0 %v3834
        %3857 = vmatprep.subr.bf16.mxu0 0
        %3858 = vmatpush1.bf16.msra.mxu0 %v3835
        %3859 = vmatprep.subr.bf16.mxu0 0
        %3860 = vmatpush1.bf16.msra.mxu0 %v3836
        %3861 = vmatprep.subr.bf16.mxu0 0
        %3862 = vmatpush1.bf16.msra.mxu0 0
        %3863 = vmatprep.subr.bf16.mxu0 0
        %3864 = vmatpush1.bf16.msra.mxu0 0
        %3865 = vmatprep.subr.bf16.mxu0 0
        %3866 = vmatpush1.bf16.msra.mxu0 0
        %3867 = vmatprep.subr.bf16.mxu0 0
        %3868 = vmatpush1.bf16.msra.mxu0 0
        %3869 = vmatprep.subr.bf16.mxu0 0
        %3870 = vmatpush1.bf16.msra.mxu0 0
        %3871 = vmatprep.subr.bf16.mxu0 0
        %3872 = vmatpush1.bf16.msra.mxu0 0
        %3873 = vmatprep.subr.bf16.mxu0 0
        %3874 = vmatpush1.bf16.msra.mxu0 0
        %3875 = vmatprep.subr.bf16.mxu0 0
        %3876 = vmatpush1.bf16.msra.mxu0 0
        %3877 = vmatprep.subr.bf16.mxu0 0
        %3878 = vmatpush1.bf16.msra.mxu0 0
        %3879 = vmatprep.subr.bf16.mxu0 0
        %3880 = vmatpush1.bf16.msra.mxu0 0
        %3881 = vmatprep.subr.bf16.mxu0 0
        %3882 = vmatpush1.bf16.msra.mxu0 0
        %3883 = vmatprep.subr.bf16.mxu0 0
        %3884 = vmatpush1.bf16.msra.mxu0 0
        %3885 = vmatprep.mubr.bf16.mxu0 0
        %3886 = vmatmul.mubr.bf16.gmra.mrb[0].mxu0 %v3842
        %v3887 = vpop.f32.mrb[0].mxu0
        %v3888 = vadd.f32 0.0, %v3887
        %v3889 = vpop.f32.mrb[0].mxu0
        %v3890 = vpop.f32.mrb[0].mxu0
        %v3891 = vadd.f32 0.0, %v3890
        %v3892 = vpop.f32.mrb[0].mxu0
        %3893 = vmatprep.mubr.bf16.mxu0 0
        %3894 = vmatmul.mubr.bf16.gmra.mrb[0].mxu0 %v3845
        %v3895 = vpop.f32.mrb[0].mxu0
        %v3896 = vadd.f32 0.0, %v3895
        %v3897 = vpop.f32.mrb[0].mxu0
        %v3898 = vpop.f32.mrb[0].mxu0
        %v3899 = vadd.f32 0.0, %v3898
        %v3900 = vpop.f32.mrb[0].mxu0
        %3901 = vmatprep.mubr.bf16.mxu0 0
        %3902 = vmatmul.mubr.bf16.gmra.mrb[0].mxu0 %v3848
        %v3903 = vpop.f32.mrb[0].mxu0
        %v3904 = vadd.f32 0.0, %v3903
        %v3905 = vpop.f32.mrb[0].mxu0
        %v3906 = vpop.f32.mrb[0].mxu0
        %v3907 = vadd.f32 0.0, %v3906
        %v3908 = vpop.f32.mrb[0].mxu0
        %3909 = vmatprep.mubr.bf16.mxu0 0
        %3910 = vmatmul.mubr.bf16.gmra.mrb[0].mxu0 %v3851
        %v3911 = vpop.f32.mrb[0].mxu0
        %v3912 = vadd.f32 0.0, %v3911
        %v3913 = vpop.f32.mrb[0].mxu0
        %v3914 = vpop.f32.mrb[0].mxu0
        %v3915 = vadd.f32 0.0, %v3914
        %v3916 = vpop.f32.mrb[0].mxu0
        %3917 = vdwg.mxu0
        %v3918 = vadd.f32 %v3768, %v3888
        %v3919 = vadd.f32 %v3769, %v3891
        %v3920 = vadd.f32 %v3770, %v3896
        %v3921 = vadd.f32 %v3771, %v3899
        %v3922 = vadd.f32 %v3772, %v3904
        %v3923 = vadd.f32 %v3773, %v3907
        %v3924 = vadd.f32 %v3774, %v3912
        %v3925 = vadd.f32 %v3775, %v3915
        %s3926 = sadd.s32 %s22, 64
        %s3927 = smul.u32 %s3926, 8
        %s3928 = smul.addr %s3927, 4
        %s3929 = scalar_lea.vmem %s188, %s3928
        %v3930 = vld [vmem:[%s3929] sm:$0xf]
        %v3931 = vld [vmem:[%s3929 + $0x4] sm:$0xf]
        %v3932 = vld [vmem:[%s3929 + $0x8] sm:$0xf]
        %v3933 = vld [vmem:[%s3929 + $0xc] sm:$0xf]
        %v3934 = vld [vmem:[%s3929 + $0x10] sm:$0xf]
        %v3935 = vld [vmem:[%s3929 + $0x14] sm:$0xf]
        %v3936 = vld [vmem:[%s3929 + $0x18] sm:$0xf]
        %v3937 = vld [vmem:[%s3929 + $0x1c] sm:$0xf]
        %s3938 = scalar_lea.vmem %s1, 800
        %v3939 = vld [vmem:[%s3938] sm:$0xf]
        %v3940 = vld [vmem:[%s3938 + $0x4] sm:$0xf]
        %v3941 = vld [vmem:[%s3938 + $0x8] sm:$0xf]
        %v3942 = vld [vmem:[%s3938 + $0xc] sm:$0xf]
        %v3943 = vld [vmem:[%s3938 + $0x10] sm:$0xf]
        %v3944 = vld [vmem:[%s3938 + $0x14] sm:$0xf]
        %v3945 = vld [vmem:[%s3938 + $0x18] sm:$0xf]
        %v3946 = vld [vmem:[%s3938 + $0x1c] sm:$0xf]
        %v3955 = vunpack.c.l.b16 %v3930
        %v3956 = vunpack.c.l.b16 %v3931
        %v3957 = vunpack.c.l.b16 %v3932
        %v3958 = vunpack.c.l.b16 %v3933
        %v3959 = vunpack.c.l.b16 %v3934
        %v3960 = vunpack.c.l.b16 %v3935
        %v3961 = vunpack.c.l.b16 %v3936
        %v3962 = vunpack.c.l.b16 %v3937
        %v3963 = vpack.c.b16 %v3956, %v3955
        %v3964 = vpack.c.b16 %v3958, %v3957
        %v3965 = vpack.c.b16 %v3960, %v3959
        %v3966 = vpack.c.b16 %v3962, %v3961
        %v3975 = vunpack.c.l.b16 %v3939
        %v3976 = vunpack.c.l.b16 %v3940
        %v3977 = vunpack.c.l.b16 %v3941
        %v3978 = vunpack.c.l.b16 %v3942
        %v3979 = vunpack.c.l.b16 %v3943
        %v3980 = vunpack.c.l.b16 %v3944
        %v3981 = vunpack.c.l.b16 %v3945
        %v3982 = vunpack.c.l.b16 %v3946
        %v3983 = vpack.c.b16 %v3976, %v3975
        %v3984 = vpack.c.b16 %v3978, %v3977
        %v3985 = vpack.c.b16 %v3980, %v3979
        %v3986 = vpack.c.b16 %v3982, %v3981
        %v3992 = vsel %vm277, %v3963, 0
        %v3995 = vsel %vm277, %v3964, 0
        %v3998 = vsel %vm277, %v3965, 0
        %v4001 = vsel %vm277, %v3966, 0
        %4003 = vmatprep.subr.bf16.mxu0 0
        %4004 = vmatpush1.bf16.msra.mxu0 %v3983
        %4005 = vmatprep.subr.bf16.mxu0 0
        %4006 = vmatpush1.bf16.msra.mxu0 %v3984
        %4007 = vmatprep.subr.bf16.mxu0 0
        %4008 = vmatpush1.bf16.msra.mxu0 %v3985
        %4009 = vmatprep.subr.bf16.mxu0 0
        %4010 = vmatpush1.bf16.msra.mxu0 %v3986
        %4011 = vmatprep.subr.bf16.mxu0 0
        %4012 = vmatpush1.bf16.msra.mxu0 0
        %4013 = vmatprep.subr.bf16.mxu0 0
        %4014 = vmatpush1.bf16.msra.mxu0 0
        %4015 = vmatprep.subr.bf16.mxu0 0
        %4016 = vmatpush1.bf16.msra.mxu0 0
        %4017 = vmatprep.subr.bf16.mxu0 0
        %4018 = vmatpush1.bf16.msra.mxu0 0
        %4019 = vmatprep.subr.bf16.mxu0 0
        %4020 = vmatpush1.bf16.msra.mxu0 0
        %4021 = vmatprep.subr.bf16.mxu0 0
        %4022 = vmatpush1.bf16.msra.mxu0 0
        %4023 = vmatprep.subr.bf16.mxu0 0
        %4024 = vmatpush1.bf16.msra.mxu0 0
        %4025 = vmatprep.subr.bf16.mxu0 0
        %4026 = vmatpush1.bf16.msra.mxu0 0
        %4027 = vmatprep.subr.bf16.mxu0 0
        %4028 = vmatpush1.bf16.msra.mxu0 0
        %4029 = vmatprep.subr.bf16.mxu0 0
        %4030 = vmatpush1.bf16.msra.mxu0 0
        %4031 = vmatprep.subr.bf16.mxu0 0
        %4032 = vmatpush1.bf16.msra.mxu0 0
        %4033 = vmatprep.subr.bf16.mxu0 0
        %4034 = vmatpush1.bf16.msra.mxu0 0
        %4035 = vmatprep.mubr.bf16.mxu0 0
        %4036 = vmatmul.mubr.bf16.gmra.mrb[0].mxu0 %v3992
        %v4037 = vpop.f32.mrb[0].mxu0
        %v4038 = vadd.f32 0.0, %v4037
        %v4039 = vpop.f32.mrb[0].mxu0
        %v4040 = vpop.f32.mrb[0].mxu0
        %v4041 = vadd.f32 0.0, %v4040
        %v4042 = vpop.f32.mrb[0].mxu0
        %4043 = vmatprep.mubr.bf16.mxu0 0
        %4044 = vmatmul.mubr.bf16.gmra.mrb[0].mxu0 %v3995
        %v4045 = vpop.f32.mrb[0].mxu0
        %v4046 = vadd.f32 0.0, %v4045
        %v4047 = vpop.f32.mrb[0].mxu0
        %v4048 = vpop.f32.mrb[0].mxu0
        %v4049 = vadd.f32 0.0, %v4048
        %v4050 = vpop.f32.mrb[0].mxu0
        %4051 = vmatprep.mubr.bf16.mxu0 0
        %4052 = vmatmul.mubr.bf16.gmra.mrb[0].mxu0 %v3998
        %v4053 = vpop.f32.mrb[0].mxu0
        %v4054 = vadd.f32 0.0, %v4053
        %v4055 = vpop.f32.mrb[0].mxu0
        %v4056 = vpop.f32.mrb[0].mxu0
        %v4057 = vadd.f32 0.0, %v4056
        %v4058 = vpop.f32.mrb[0].mxu0
        %4059 = vmatprep.mubr.bf16.mxu0 0
        %4060 = vmatmul.mubr.bf16.gmra.mrb[0].mxu0 %v4001
        %v4061 = vpop.f32.mrb[0].mxu0
        %v4062 = vadd.f32 0.0, %v4061
        %v4063 = vpop.f32.mrb[0].mxu0
        %v4064 = vpop.f32.mrb[0].mxu0
        %v4065 = vadd.f32 0.0, %v4064
        %v4066 = vpop.f32.mrb[0].mxu0
        %4067 = vdwg.mxu0
        %v4068 = vadd.f32 %v3918, %v4038
        %v4069 = vadd.f32 %v3919, %v4041
        %v4070 = vadd.f32 %v3920, %v4046
        %v4071 = vadd.f32 %v3921, %v4049
        %v4072 = vadd.f32 %v3922, %v4054
        %v4073 = vadd.f32 %v3923, %v4057
        %v4074 = vadd.f32 %v3924, %v4062
        %v4075 = vadd.f32 %v3925, %v4065
        %s4076 = sadd.s32 %s22, 73
        %s4077 = smul.u32 %s4076, 8
        %s4078 = smul.addr %s4077, 4
        %s4079 = scalar_lea.vmem %s188, %s4078
        %v4080 = vld [vmem:[%s4079] sm:$0xf]
        %v4081 = vld [vmem:[%s4079 + $0x4] sm:$0xf]
        %v4082 = vld [vmem:[%s4079 + $0x8] sm:$0xf]
        %v4083 = vld [vmem:[%s4079 + $0xc] sm:$0xf]
        %v4084 = vld [vmem:[%s4079 + $0x10] sm:$0xf]
        %v4085 = vld [vmem:[%s4079 + $0x14] sm:$0xf]
        %v4086 = vld [vmem:[%s4079 + $0x18] sm:$0xf]
        %v4087 = vld [vmem:[%s4079 + $0x1c] sm:$0xf]
        %s4088 = scalar_lea.vmem %s1, 832
        %v4089 = vld [vmem:[%s4088] sm:$0xf]
        %v4090 = vld [vmem:[%s4088 + $0x4] sm:$0xf]
        %v4091 = vld [vmem:[%s4088 + $0x8] sm:$0xf]
        %v4092 = vld [vmem:[%s4088 + $0xc] sm:$0xf]
        %v4093 = vld [vmem:[%s4088 + $0x10] sm:$0xf]
        %v4094 = vld [vmem:[%s4088 + $0x14] sm:$0xf]
        %v4095 = vld [vmem:[%s4088 + $0x18] sm:$0xf]
        %v4096 = vld [vmem:[%s4088 + $0x1c] sm:$0xf]
        %v4105 = vunpack.c.l.b16 %v4080
        %v4106 = vunpack.c.l.b16 %v4081
        %v4107 = vunpack.c.l.b16 %v4082
        %v4108 = vunpack.c.l.b16 %v4083
        %v4109 = vunpack.c.l.b16 %v4084
        %v4110 = vunpack.c.l.b16 %v4085
        %v4111 = vunpack.c.l.b16 %v4086
        %v4112 = vunpack.c.l.b16 %v4087
        %v4113 = vpack.c.b16 %v4106, %v4105
        %v4114 = vpack.c.b16 %v4108, %v4107
        %v4115 = vpack.c.b16 %v4110, %v4109
        %v4116 = vpack.c.b16 %v4112, %v4111
        %v4125 = vunpack.c.l.b16 %v4089
        %v4126 = vunpack.c.l.b16 %v4090
        %v4127 = vunpack.c.l.b16 %v4091
        %v4128 = vunpack.c.l.b16 %v4092
        %v4129 = vunpack.c.l.b16 %v4093
        %v4130 = vunpack.c.l.b16 %v4094
        %v4131 = vunpack.c.l.b16 %v4095
        %v4132 = vunpack.c.l.b16 %v4096
        %v4133 = vpack.c.b16 %v4126, %v4125
        %v4134 = vpack.c.b16 %v4128, %v4127
        %v4135 = vpack.c.b16 %v4130, %v4129
        %v4136 = vpack.c.b16 %v4132, %v4131
        %v4142 = vsel %vm277, %v4113, 0
        %v4145 = vsel %vm277, %v4114, 0
        %v4148 = vsel %vm277, %v4115, 0
        %v4151 = vsel %vm277, %v4116, 0
        %4153 = vmatprep.subr.bf16.mxu0 0
        %4154 = vmatpush1.bf16.msra.mxu0 %v4133
        %4155 = vmatprep.subr.bf16.mxu0 0
        %4156 = vmatpush1.bf16.msra.mxu0 %v4134
        %4157 = vmatprep.subr.bf16.mxu0 0
        %4158 = vmatpush1.bf16.msra.mxu0 %v4135
        %4159 = vmatprep.subr.bf16.mxu0 0
        %4160 = vmatpush1.bf16.msra.mxu0 %v4136
        %4161 = vmatprep.subr.bf16.mxu0 0
        %4162 = vmatpush1.bf16.msra.mxu0 0
        %4163 = vmatprep.subr.bf16.mxu0 0
        %4164 = vmatpush1.bf16.msra.mxu0 0
        %4165 = vmatprep.subr.bf16.mxu0 0
        %4166 = vmatpush1.bf16.msra.mxu0 0
        %4167 = vmatprep.subr.bf16.mxu0 0
        %4168 = vmatpush1.bf16.msra.mxu0 0
        %4169 = vmatprep.subr.bf16.mxu0 0
        %4170 = vmatpush1.bf16.msra.mxu0 0
        %4171 = vmatprep.subr.bf16.mxu0 0
        %4172 = vmatpush1.bf16.msra.mxu0 0
        %4173 = vmatprep.subr.bf16.mxu0 0
        %4174 = vmatpush1.bf16.msra.mxu0 0
        %4175 = vmatprep.subr.bf16.mxu0 0
        %4176 = vmatpush1.bf16.msra.mxu0 0
        %4177 = vmatprep.subr.bf16.mxu0 0
        %4178 = vmatpush1.bf16.msra.mxu0 0
        %4179 = vmatprep.subr.bf16.mxu0 0
        %4180 = vmatpush1.bf16.msra.mxu0 0
        %4181 = vmatprep.subr.bf16.mxu0 0
        %4182 = vmatpush1.bf16.msra.mxu0 0
        %4183 = vmatprep.subr.bf16.mxu0 0
        %4184 = vmatpush1.bf16.msra.mxu0 0
        %4185 = vmatprep.mubr.bf16.mxu0 0
        %4186 = vmatmul.mubr.bf16.gmra.mrb[0].mxu0 %v4142
        %v4187 = vpop.f32.mrb[0].mxu0
        %v4188 = vadd.f32 0.0, %v4187
        %v4189 = vpop.f32.mrb[0].mxu0
        %v4190 = vpop.f32.mrb[0].mxu0
        %v4191 = vadd.f32 0.0, %v4190
        %v4192 = vpop.f32.mrb[0].mxu0
        %4193 = vmatprep.mubr.bf16.mxu0 0
        %4194 = vmatmul.mubr.bf16.gmra.mrb[0].mxu0 %v4145
        %v4195 = vpop.f32.mrb[0].mxu0
        %v4196 = vadd.f32 0.0, %v4195
        %v4197 = vpop.f32.mrb[0].mxu0
        %v4198 = vpop.f32.mrb[0].mxu0
        %v4199 = vadd.f32 0.0, %v4198
        %v4200 = vpop.f32.mrb[0].mxu0
        %4201 = vmatprep.mubr.bf16.mxu0 0
        %4202 = vmatmul.mubr.bf16.gmra.mrb[0].mxu0 %v4148
        %v4203 = vpop.f32.mrb[0].mxu0
        %v4204 = vadd.f32 0.0, %v4203
        %v4205 = vpop.f32.mrb[0].mxu0
        %v4206 = vpop.f32.mrb[0].mxu0
        %v4207 = vadd.f32 0.0, %v4206
        %v4208 = vpop.f32.mrb[0].mxu0
        %4209 = vmatprep.mubr.bf16.mxu0 0
        %4210 = vmatmul.mubr.bf16.gmra.mrb[0].mxu0 %v4151
        %v4211 = vpop.f32.mrb[0].mxu0
        %v4212 = vadd.f32 0.0, %v4211
        %v4213 = vpop.f32.mrb[0].mxu0
        %v4214 = vpop.f32.mrb[0].mxu0
        %v4215 = vadd.f32 0.0, %v4214
        %v4216 = vpop.f32.mrb[0].mxu0
        %4217 = vdwg.mxu0
        %v4218 = vadd.f32 %v4068, %v4188
        %v4219 = vadd.f32 %v4069, %v4191
        %v4220 = vadd.f32 %v4070, %v4196
        %v4221 = vadd.f32 %v4071, %v4199
        %v4222 = vadd.f32 %v4072, %v4204
        %v4223 = vadd.f32 %v4073, %v4207
        %v4224 = vadd.f32 %v4074, %v4212
        %v4225 = vadd.f32 %v4075, %v4215
        %v4226 = vld [vmem:[%s2] sm:$0x1]
        %v4228 = vlaneseq
        %v4229 = vshrl.u32 %v4228, 7
        %v4230 = vsub.s32 0, %v4229
        %v4231 = vrot.slane %v4226, %v4230
        %v4233 = vadd.f32 %v4218, %v4231
        %v4234 = vadd.f32 %v4219, %v4231
        %v4235 = vadd.f32 %v4220, %v4231
        %v4236 = vadd.f32 %v4221, %v4231
        %v4237 = vadd.f32 %v4222, %v4231
        %v4238 = vadd.f32 %v4223, %v4231
        %v4239 = vadd.f32 %v4224, %v4231
        %v4240 = vadd.f32 %v4225, %v4231
        %4241 = vst [vmem:[%s182] sm:$0xff] %v4233
        %4242 = vst [vmem:[%s182 + $0x8] sm:$0xff] %v4234
        %4243 = vst [vmem:[%s182 + $0x10] sm:$0xff] %v4235
        %4244 = vst [vmem:[%s182 + $0x18] sm:$0xff] %v4236
        %4245 = vst [vmem:[%s182 + $0x20] sm:$0xff] %v4237
        %4246 = vst [vmem:[%s182 + $0x28] sm:$0xff] %v4238
        %4247 = vst [vmem:[%s182 + $0x30] sm:$0xff] %v4239
        %4248 = vst [vmem:[%s182 + $0x38] sm:$0xff] %v4240
        %s4249 = sand.u32 %s109, 1
        %s4250 = scalar_lea.sflag [#allocation3], %s4249
        %s4251 = sand.u32 %s109, 1
        %s4252 = smul.addr %s4251, 64
        %s4253 = scalar_lea.vmem [#allocation2], %s4252
        // Predicated region
        $region33: #{downsample_forward.1} parent=31 // pred_check
          %p4254 = pneg %p119
        $region34: #{downsample_forward.1} parent=31 // pred_check_branch
          %4256 = sbr.rel (%p4254) target = $region36
        $region35: #{downsample_forward.1} parent=31 // pred_region
          %s4257 = smul.u32 %s21, 8
          %s4258 = sadd.s32 %s4257, %s22
          %s4260 = ssub.s32 1024, 1024
          %4261 = vsyncadd %s4250, %s4260
          %s4262 = smul.addr %s4258, 8
          %s4263 = smul.addr %s4262, 128
          %s4264 = scalar_lea.hbm %s3, %s4263
          %s4265 = sshll.u32 %s4253, 4
          %s4266 = int_to_ptr.vmem [resolvable:$true] %s4265
          %4271 = dma.vmem_to_hbm [thread:$0]  %s4266, 1024, %s4264, %s4250, 128, 128, 8
        $region36: #{downsample_forward.1} parent=31 // pred_fallthru
          _
      $region32: #{downsample_forward.1} parent=5 // pred_fallthru
        _
      %p4272 = scmp.le.s32.totalorder 2, %s12
      // Predicated region
      $region37: #{downsample_forward.1} parent=5 // pred_check
        %p4273 = pneg %p4272
      $region38: #{downsample_forward.1} parent=5 // pred_check_branch
        %4275 = sbr.rel (%p4273) target = $region40
      $region39: #{downsample_forward.1} parent=5 // pred_region
        %s4276 = ssub.s32 %s12, 2
        // Predicated region
        $region41: #{downsample_forward.1} parent=39 // pred_check
          %p4277 = pneg %p125
        $region42: #{downsample_forward.1} parent=39 // pred_check_branch
          %4279 = sbr.rel (%p4277) target = $region44
        $region43: #{downsample_forward.1} parent=39 // pred_region
          %s4280 = sand.u32 %s110, 1
          %s4281 = scalar_lea.sflag [#allocation3], %s4280
          %s4282 = sand.u32 %s110, 1
          %s4283 = smul.addr %s4282, 64
          %s4284 = scalar_lea.vmem [#allocation2], %s4283
          %4285 = dma.done %s4281, 1024
        $region44: #{downsample_forward.1} parent=39 // pred_fallthru
          _
      $region40: #{downsample_forward.1} parent=5 // pred_fallthru
        _
    $region6: #{downsample_forward.1} parent=1 // loop_footer
      %s16 = sadd.s32 1, %s12
    $region7: #{downsample_forward.1} parent=1 // loop_footer_branch
      %11 = sbr.rel target = $region3
    $region8: #{downsample_forward.1} parent=1 // loop_exit
      _
    %4286 = vsyncpa [#allocation3], 1
    %s4287 = scalar_lea.sflag [#allocation3], 1
    %4288 = vsyncpa %s4287, 1

</llo_original>
